<compile_context>
chip_gen: v5e
topology: v5e:2x2
jax: 0.10.0
libtpu: 0.0.40
codegen_flags: <defaults>
</compile_context>

<pallas_src>
import functools

import jax
import jax.numpy as jnp
from jax import lax
from jax.experimental import pallas as pl
from jax.experimental.pallas import tpu as pltpu

_EPS = 1e-5
_MXU_DTYPE = jnp.bfloat16     # MXU operand dtype; accumulation stays float32.


# ---------------------------------------------------------------------------
# Fused Pallas kernel:  per-image  W @ patches + bias  -> epilogue
# ---------------------------------------------------------------------------
def _fused_conv_kernel(w_ref, b_ref, p_ref, *rest, groups, mode):
    """One batch element:  out = epilogue( W @ patches + bias ).

    w_ref : (R, K)   bf16   (R = groups * Cout)
    b_ref : (R, 1)   f32
    p_ref : (K, HW)  bf16   im2col patches, spatial on lanes (lane-dense)
    rest  : (res_ref, o_ref) for mode == "norm_res", else (o_ref,)
    mode  : "norm_relu" | "norm_res" | "tanh"
    """
    o_ref = rest[-1]
    acc = jnp.dot(w_ref[...], p_ref[...], preferred_element_type=jnp.float32)
    acc = acc + b_ref[...]                              # bias (lane broadcast)
    R, HW = acc.shape

    if mode in ("norm_relu", "norm_res"):
        # InstanceNorm2d(affine=False, eps=1e-5), biased variance over full H*W.
        if groups == 1:
            cnt = float(HW)
            mean = jnp.sum(acc, axis=1, keepdims=True) / cnt
            d = acc - mean
            var = jnp.sum(d * d, axis=1, keepdims=True) / cnt
        else:
            # Sub-pixel conv-transpose: rows are `groups` planes of the same
            # output channel; combine per-row sums across planes so the stats
            # cover the full upsampled 2H x 2W map.
            cout = R // groups
            cnt = float(groups * HW)

            def group_total(v):                         # (R,1) -> (R,1)
                parts = [v[g * cout:(g + 1) * cout, :] for g in range(groups)]
                tot = parts[0]
                for part in parts[1:]:
                    tot = tot + part
                return jnp.concatenate([tot] * groups, axis=0)

            mean = group_total(jnp.sum(acc, axis=1, keepdims=True)) / cnt
            d = acc - mean
            var = group_total(jnp.sum(d * d, axis=1, keepdims=True)) / cnt
        acc = d * lax.rsqrt(var + _EPS)
        if mode == "norm_relu":
            acc = jnp.maximum(acc, 0.0)
        else:                                           # residual + IN(conv)
            acc = acc + rest[0][...]
    else:                                               # "tanh" head
        acc = jnp.tanh(acc)

    o_ref[...] = acc.astype(o_ref.dtype)


def _fused_conv(patches, w_mat, bias, *, groups, mode, residual=None):
    """patches: (N, K, HW) bf16, w_mat: (R, K) bf16, bias: (R, 1) f32."""
    N, K, HW = patches.shape
    R = w_mat.shape[0]
    kernel = functools.partial(_fused_conv_kernel, groups=groups, mode=mode)

    in_specs = [
        pl.BlockSpec((R, K), lambda n: (0, 0)),             # weights resident
        pl.BlockSpec((R, 1), lambda n: (0, 0)),             # bias resident
        pl.BlockSpec((None, K, HW), lambda n: (n, 0, 0)),   # one image's patches
    ]
    args = [w_mat, bias, patches]
    if mode == "norm_res":
        in_specs.append(pl.BlockSpec((None, R, HW), lambda n: (n, 0, 0)))
        args.append(residual)

    # TODO(synk): at full CycleGAN resolution (256^2, ngf=64) the stem/head
    # per-image blocks exceed VMEM; that regime needs an extra spatial grid
    # axis with sum/sumsq accumulation for the InstanceNorm statistics.
    return pl.pallas_call(
        kernel,
        out_shape=jax.ShapeDtypeStruct((N, R, HW), jnp.float32),
        grid=(N,),
        in_specs=in_specs,
        out_specs=pl.BlockSpec((None, R, HW), lambda n: (n, 0, 0)),
        compiler_params=pltpu.CompilerParams(
            dimension_semantics=("parallel",),   # batch across TCs on v7x
            vmem_limit_bytes=32 * 1024 * 1024,
        ),
    )(*args)


# ---------------------------------------------------------------------------
# XLA glue: padding + patch extraction (lane-dense, no activation transposes)
# ---------------------------------------------------------------------------
def _im2col(xp, kh, kw, stride):
    """(N, C, Hp, Wp) -> (N, C*kh*kw, Ho*Wo); spatial stays last (lane-dense)."""
    N, C, Hp, Wp = xp.shape
    Ho = (Hp - kh) // stride + 1
    Wo = (Wp - kw) // stride + 1
    taps = []
    for i in range(kh):
        for j in range(kw):
            taps.append(lax.slice(
                xp, (0, 0, i, j),
                (N, C, i + stride * (Ho - 1) + 1, j + stride * (Wo - 1) + 1),
                (1, 1, stride, stride)))
    p = jnp.stack(taps, axis=2)                     # (N, C, kh*kw, Ho, Wo)
    return p.reshape(N, C * kh * kw, Ho * Wo), Ho, Wo


def conv2d_fused(x, w, b, *, stride=1, padding=0, pad_mode="zero",
                 mode="norm_relu", residual=None):
    """PyTorch Conv2d (cross-correlation) + fused epilogue.  NCHW in/out."""
    Cout, Cin, kh, kw = w.shape
    N = x.shape[0]
    if padding > 0:
        m = "reflect" if pad_mode == "reflect" else "constant"
        x = jnp.pad(x, ((0, 0), (0, 0), (padding, padding), (padding, padding)), mode=m)
    patches, Ho, Wo = _im2col(x, kh, kw, stride)
    w_mat = w.reshape(Cout, Cin * kh * kw).astype(_MXU_DTYPE)
    bias = b.reshape(Cout, 1).astype(jnp.float32)
    res = None
    if residual is not None:
        res = residual.reshape(N, Cout, Ho * Wo).astype(jnp.float32)
    out = _fused_conv(patches.astype(_MXU_DTYPE), w_mat, bias,
                      groups=1, mode=mode, residual=res)
    return out.reshape(N, Cout, Ho, Wo)


def conv_transpose2d_fused(x, w, b):
    """ConvTranspose2d(k=3, s=2, p=1, output_padding=1) + InstanceNorm + ReLU
    via the sub-pixel decomposition (no zero-dilated intermediate)."""
    N, Cin, H, W = x.shape
    Cout = w.shape[1]
    wf = jnp.flip(w, axis=(2, 3)).transpose(1, 0, 2, 3)      # (Cout, Cin, 3, 3)
    zero = jnp.zeros((Cout, Cin), w.dtype)

    def tap(di, dj):
        return wf[:, :, di, dj]

    # Sub-pixel (r, c) kernels over the 2x2 window of the bottom/right zero-
    # padded input; tap order t = 2*dh + dw matches _im2col's ordering.
    sub = {
        (0, 0): (tap(1, 1), zero,       zero,       zero),
        (0, 1): (tap(1, 0), tap(1, 2),  zero,       zero),
        (1, 0): (tap(0, 1), zero,       tap(2, 1),  zero),
        (1, 1): (tap(0, 0), tap(0, 2),  tap(2, 0),  tap(2, 2)),
    }
    w_groups = []
    for r in range(2):
        for c in range(2):
            kg = jnp.stack(sub[(r, c)], axis=2)              # (Cout, Cin, 4)
            w_groups.append(kg.reshape(Cout, Cin * 4))
    w_up = jnp.concatenate(w_groups, axis=0).astype(_MXU_DTYPE)   # (4*Cout, 4*Cin)
    b_up = jnp.tile(b, 4).reshape(4 * Cout, 1).astype(jnp.float32)

    xe = jnp.pad(x, ((0, 0), (0, 0), (0, 1), (0, 1)))        # one zero row/col
    patches, _, _ = _im2col(xe, 2, 2, 1)                     # Ho=H, Wo=W
    out4 = _fused_conv(patches.astype(_MXU_DTYPE), w_up, b_up,
                       groups=4, mode="norm_relu")           # (N, 4*Cout, H*W)
    # Interleave the 4 sub-pixel planes back into (N, Cout, 2H, 2W).
    out = out4.reshape(N, 2, 2, Cout, H, W)
    return out.transpose(0, 3, 4, 1, 5, 2).reshape(N, Cout, 2 * H, 2 * W)


# ---------------------------------------------------------------------------
# Model
# ---------------------------------------------------------------------------
def resnet_block(x, p):
    h = conv2d_fused(x, p["w1"], p["b1"], stride=1, padding=1,
                     pad_mode="reflect", mode="norm_relu")
    # nn.Dropout(dropout_rate=0) is an exact identity.
    return conv2d_fused(h, p["w2"], p["b2"], stride=1, padding=1,
                        pad_mode="reflect", mode="norm_res", residual=x)


def cyclegan_generator(x, params):
    n_downsampling = 2
    # stem: ReflectionPad2d(3) + Conv2d(k=7) + InstanceNorm + ReLU
    h = conv2d_fused(x, params["w_in"], params["b_in"], padding=3,
                     pad_mode="reflect", mode="norm_relu")
    # downsampling: Conv2d(k=3, s=2, p=1) + InstanceNorm + ReLU
    for i in range(n_downsampling):
        h = conv2d_fused(h, params["w_down"][i], params["b_down"][i],
                         stride=2, padding=1, mode="norm_relu")
    # residual blocks
    for bp in params["blocks"]:
        h = resnet_block(h, bp)
    # upsampling: ConvTranspose2d(k=3, s=2, p=1, op=1) + InstanceNorm + ReLU
    for i in range(n_downsampling):
        h = conv_transpose2d_fused(h, params["w_up"][i], params["b_up"][i])
    # head: ReflectionPad2d(3) + Conv2d(k=7) + Tanh
    return conv2d_fused(h, params["w_out"], params["b_out"], padding=3,
                        pad_mode="reflect", mode="tanh")


# ---------------------------------------------------------------------------
# Deterministic parameter init (shapes follow the PyTorch __init__)
# ---------------------------------------------------------------------------
def _conv_w(key, cout, cin, k):
    fan_in = cin * k * k
    return jax.random.normal(key, (cout, cin, k, k), jnp.float32) / jnp.sqrt(fan_in)


def _convT_w(key, cin, cout, k):
    fan_in = cin * k * k
    return jax.random.normal(key, (cin, cout, k, k), jnp.float32) / jnp.sqrt(fan_in)


def init_params(key, input_nc=3, output_nc=3, ngf=8, n_blocks=3):
    n_downsampling = 2
    keys = iter(jax.random.split(key, 8 + 4 * n_downsampling + 4 * n_blocks))
    p = {}
    p["w_in"] = _conv_w(next(keys), ngf, input_nc, 7)
    p["b_in"] = 0.01 * jax.random.normal(next(keys), (ngf,), jnp.float32)
    p["w_down"], p["b_down"] = [], []
    for i in range(n_downsampling):
        mult = 2 ** i
        p["w_down"].append(_conv_w(next(keys), ngf * mult * 2, ngf * mult, 3))
        p["b_down"].append(0.01 * jax.random.normal(next(keys), (ngf * mult * 2,), jnp.float32))
    mult = 2 ** n_downsampling
    dim = ngf * mult
    p["blocks"] = []
    for _ in range(n_blocks):
        bp = {
            "w1": _conv_w(next(keys), dim, dim, 3),
            "b1": 0.01 * jax.random.normal(next(keys), (dim,), jnp.float32),
            "w2": _conv_w(next(keys), dim, dim, 3),
            "b2": 0.01 * jax.random.normal(next(keys), (dim,), jnp.float32),
        }
        p["blocks"].append(bp)
    p["w_up"], p["b_up"] = [], []
    for i in range(n_downsampling):
        mult = 2 ** (n_downsampling - i)
        cin, cout = ngf * mult, ngf * mult // 2
        p["w_up"].append(_convT_w(next(keys), cin, cout, 3))
        p["b_up"].append(0.01 * jax.random.normal(next(keys), (cout,), jnp.float32))
    p["w_out"] = _conv_w(next(keys), output_nc, ngf, 7)
    p["b_out"] = 0.01 * jax.random.normal(next(keys), (output_nc,), jnp.float32)
    return p


# ---------------------------------------------------------------------------
if __name__ == "__main__":
    key = jax.random.PRNGKey(0)
    kx, kp = jax.random.split(key)

    # Small, module-consistent shapes: NCHW input, 3 RGB channels, 16x16 spatial.
    N, input_nc, H, W = 2, 3, 16, 16
    ngf, n_blocks = 8, 3

    x = jax.random.normal(kx, (N, input_nc, H, W), jnp.float32)
    params = init_params(kp, input_nc=input_nc, output_nc=3, ngf=ngf, n_blocks=n_blocks)

    fwd = jax.jit(cyclegan_generator)
    y = fwd(x, params)
    jax.block_until_ready(y)

    assert y.shape == (N, 3, H, W), y.shape
    assert bool(jnp.all(jnp.isfinite(y)))
    assert bool(jnp.all(jnp.abs(y) <= 1.0))  # tanh output range
    print("KERNEL_OK")
</pallas_src>

<mosaic_0001>
module attributes {stable_mosaic.version = 11 : i64} {
  func.func @_fused_conv_kernel(%arg0: i32, %arg1: memref<8x147xbf16, #tpu.memory_space<vmem>>, %arg2: memref<8x1xf32, #tpu.memory_space<vmem>>, %arg3: memref<1x147x256xbf16, #tpu.memory_space<vmem>>, %arg4: memref<1x8x256xf32, #tpu.memory_space<vmem>>) attributes {dimension_semantics = [#tpu.dimension_semantics<parallel>], iteration_bounds = array<i64: 2>, scalar_prefetch = 0 : i64, scratch_operands = 0 : i64, tpu.core_type = #tpu.core_type<tc>, window_params = [{pipeline_mode = #tpu.pipeline_mode<synchronous>, transform_indices = @transform_0, window_bounds = array<i64: 8, 147>}, {pipeline_mode = #tpu.pipeline_mode<synchronous>, transform_indices = @transform_1, window_bounds = array<i64: 8, 1>}, {transform_indices = @transform_2, window_bounds = array<i64: 1, 147, 256>}, {transform_indices = @transform_3, window_bounds = array<i64: 1, 8, 256>}]} {
    %c0 = arith.constant 0 : index
    %c0_0 = arith.constant 0 : index
    %0 = vector.load %arg1[%c0, %c0_0] : memref<8x147xbf16, #tpu.memory_space<vmem>>, vector<8x147xbf16>
    %c0_1 = arith.constant 0 : index
    %c0_2 = arith.constant 0 : index
    %c0_3 = arith.constant 0 : index
    %1 = vector.load %arg3[%c0_1, %c0_2, %c0_3] : memref<1x147x256xbf16, #tpu.memory_space<vmem>>, vector<1x147x256xbf16>
    %2 = vector.shape_cast %1 : vector<1x147x256xbf16> to vector<147x256xbf16>
    %cst = arith.constant dense<0.000000e+00> : vector<8x256xf32>
    %3 = tpu.matmul %0, %2, %cst {dimension_numbers = #tpu.dot_dimension_numbers<[1], [0], [0], [1], [0, 0, 1, 1], [], []>} : vector<8x147xbf16>, vector<147x256xbf16>, vector<8x256xf32> -> vector<8x256xf32>
    %c0_4 = arith.constant 0 : index
    %c0_5 = arith.constant 0 : index
    %4 = vector.load %arg2[%c0_4, %c0_5] : memref<8x1xf32, #tpu.memory_space<vmem>>, vector<8x1xf32>
    %5 = vector.broadcast %4 : vector<8x1xf32> to vector<8x256xf32>
    %6 = arith.addf %3, %5 : vector<8x256xf32>
    %cst_6 = arith.constant dense<0.000000e+00> : vector<8xf32>
    %7 = vector.multi_reduction <add>, %6, %cst_6 [1] : vector<8x256xf32> to vector<8xf32>
    %8 = vector.shape_cast %7 : vector<8xf32> to vector<8x1xf32>
    %cst_7 = arith.constant 2.560000e+02 : f32
    %9 = vector.broadcast %cst_7 : f32 to vector<8x1xf32>
    %10 = arith.divf %8, %9 : vector<8x1xf32>
    %11 = vector.broadcast %10 : vector<8x1xf32> to vector<8x256xf32>
    %12 = arith.subf %6, %11 : vector<8x256xf32>
    %13 = arith.mulf %12, %12 : vector<8x256xf32>
    %cst_8 = arith.constant dense<0.000000e+00> : vector<8xf32>
    %14 = vector.multi_reduction <add>, %13, %cst_8 [1] : vector<8x256xf32> to vector<8xf32>
    %15 = vector.shape_cast %14 : vector<8xf32> to vector<8x1xf32>
    %cst_9 = arith.constant 2.560000e+02 : f32
    %16 = vector.broadcast %cst_9 : f32 to vector<8x1xf32>
    %17 = arith.divf %15, %16 : vector<8x1xf32>
    %cst_10 = arith.constant 9.99999974E-6 : f32
    %18 = vector.broadcast %cst_10 : f32 to vector<8x1xf32>
    %19 = arith.addf %17, %18 : vector<8x1xf32>
    %20 = math.rsqrt %19 : vector<8x1xf32>
    %21 = vector.broadcast %20 : vector<8x1xf32> to vector<8x256xf32>
    %22 = arith.mulf %12, %21 : vector<8x256xf32>
    %cst_11 = arith.constant 0.000000e+00 : f32
    %23 = vector.broadcast %cst_11 : f32 to vector<8x256xf32>
    %24 = arith.maximumf %22, %23 : vector<8x256xf32>
    %c0_12 = arith.constant 0 : index
    %c0_13 = arith.constant 0 : index
    %c0_14 = arith.constant 0 : index
    %25 = vector.load %arg4[%c0_12, %c0_13, %c0_14] : memref<1x8x256xf32, #tpu.memory_space<vmem>>, vector<1x8x256xf32>
    %26 = vector.shape_cast %25 : vector<1x8x256xf32> to vector<8x256xf32>
    %27 = vector.shape_cast %24 : vector<8x256xf32> to vector<1x8x256xf32>
    tpu.vector_store %arg4[%c0_12, %c0_13, %c0_14], %27 {strides = array<i32>} : memref<1x8x256xf32, #tpu.memory_space<vmem>>, vector<1x8x256xf32>,
    return
  }
  func.func @transform_0(%arg0: i32) -> (i32, i32) {
    %c0_i32 = arith.constant 0 : i32
    %c0_i32_0 = arith.constant 0 : i32
    %c0_i32_1 = arith.constant 0 : i32
    return %c0_i32, %c0_i32_0 : i32, i32
  }
  func.func @transform_1(%arg0: i32) -> (i32, i32) {
    %c0_i32 = arith.constant 0 : i32
    %c0_i32_0 = arith.constant 0 : i32
    %c0_i32_1 = arith.constant 0 : i32
    return %c0_i32, %c0_i32_0 : i32, i32
  }
  func.func @transform_2(%arg0: i32) -> (i32, i32, i32) {
    %c0_i32 = arith.constant 0 : i32
    %c0_i32_0 = arith.constant 0 : i32
    %c0_i32_1 = arith.constant 0 : i32
    return %arg0, %c0_i32, %c0_i32_0 : i32, i32, i32
  }
  func.func @transform_3(%arg0: i32) -> (i32, i32, i32) {
    %c0_i32 = arith.constant 0 : i32
    %c0_i32_0 = arith.constant 0 : i32
    %c0_i32_1 = arith.constant 0 : i32
    return %arg0, %c0_i32, %c0_i32_0 : i32, i32, i32
  }
}

module attributes {stable_mosaic.version = 11 : i64} {
  func.func @_fused_conv_kernel(%arg0: i32, %arg1: memref<16x72xbf16, #tpu.memory_space<vmem>>, %arg2: memref<16x1xf32, #tpu.memory_space<vmem>>, %arg3: memref<1x72x64xbf16, #tpu.memory_space<vmem>>, %arg4: memref<1x16x64xf32, #tpu.memory_space<vmem>>) attributes {dimension_semantics = [#tpu.dimension_semantics<parallel>], iteration_bounds = array<i64: 2>, scalar_prefetch = 0 : i64, scratch_operands = 0 : i64, tpu.core_type = #tpu.core_type<tc>, window_params = [{pipeline_mode = #tpu.pipeline_mode<synchronous>, transform_indices = @transform_0, window_bounds = array<i64: 16, 72>}, {pipeline_mode = #tpu.pipeline_mode<synchronous>, transform_indices = @transform_1, window_bounds = array<i64: 16, 1>}, {transform_indices = @transform_2, window_bounds = array<i64: 1, 72, 64>}, {transform_indices = @transform_3, window_bounds = array<i64: 1, 16, 64>}]} {
    %c0 = arith.constant 0 : index
    %c0_0 = arith.constant 0 : index
    %0 = vector.load %arg1[%c0, %c0_0] : memref<16x72xbf16, #tpu.memory_space<vmem>>, vector<16x72xbf16>
    %c0_1 = arith.constant 0 : index
    %c0_2 = arith.constant 0 : index
    %c0_3 = arith.constant 0 : index
    %1 = vector.load %arg3[%c0_1, %c0_2, %c0_3] : memref<1x72x64xbf16, #tpu.memory_space<vmem>>, vector<1x72x64xbf16>
    %2 = vector.shape_cast %1 : vector<1x72x64xbf16> to vector<72x64xbf16>
    %cst = arith.constant dense<0.000000e+00> : vector<16x64xf32>
    %3 = tpu.matmul %0, %2, %cst {dimension_numbers = #tpu.dot_dimension_numbers<[1], [0], [0], [1], [0, 0, 1, 1], [], []>} : vector<16x72xbf16>, vector<72x64xbf16>, vector<16x64xf32> -> vector<16x64xf32>
    %c0_4 = arith.constant 0 : index
    %c0_5 = arith.constant 0 : index
    %4 = vector.load %arg2[%c0_4, %c0_5] : memref<16x1xf32, #tpu.memory_space<vmem>>, vector<16x1xf32>
    %5 = vector.broadcast %4 : vector<16x1xf32> to vector<16x64xf32>
    %6 = arith.addf %3, %5 : vector<16x64xf32>
    %cst_6 = arith.constant dense<0.000000e+00> : vector<16xf32>
    %7 = vector.multi_reduction <add>, %6, %cst_6 [1] : vector<16x64xf32> to vector<16xf32>
    %8 = vector.shape_cast %7 : vector<16xf32> to vector<16x1xf32>
    %cst_7 = arith.constant 6.400000e+01 : f32
    %9 = vector.broadcast %cst_7 : f32 to vector<16x1xf32>
    %10 = arith.divf %8, %9 : vector<16x1xf32>
    %11 = vector.broadcast %10 : vector<16x1xf32> to vector<16x64xf32>
    %12 = arith.subf %6, %11 : vector<16x64xf32>
    %13 = arith.mulf %12, %12 : vector<16x64xf32>
    %cst_8 = arith.constant dense<0.000000e+00> : vector<16xf32>
    %14 = vector.multi_reduction <add>, %13, %cst_8 [1] : vector<16x64xf32> to vector<16xf32>
    %15 = vector.shape_cast %14 : vector<16xf32> to vector<16x1xf32>
    %cst_9 = arith.constant 6.400000e+01 : f32
    %16 = vector.broadcast %cst_9 : f32 to vector<16x1xf32>
    %17 = arith.divf %15, %16 : vector<16x1xf32>
    %cst_10 = arith.constant 9.99999974E-6 : f32
    %18 = vector.broadcast %cst_10 : f32 to vector<16x1xf32>
    %19 = arith.addf %17, %18 : vector<16x1xf32>
    %20 = math.rsqrt %19 : vector<16x1xf32>
    %21 = vector.broadcast %20 : vector<16x1xf32> to vector<16x64xf32>
    %22 = arith.mulf %12, %21 : vector<16x64xf32>
    %cst_11 = arith.constant 0.000000e+00 : f32
    %23 = vector.broadcast %cst_11 : f32 to vector<16x64xf32>
    %24 = arith.maximumf %22, %23 : vector<16x64xf32>
    %c0_12 = arith.constant 0 : index
    %c0_13 = arith.constant 0 : index
    %c0_14 = arith.constant 0 : index
    %25 = vector.load %arg4[%c0_12, %c0_13, %c0_14] : memref<1x16x64xf32, #tpu.memory_space<vmem>>, vector<1x16x64xf32>
    %26 = vector.shape_cast %25 : vector<1x16x64xf32> to vector<16x64xf32>
    %27 = vector.shape_cast %24 : vector<16x64xf32> to vector<1x16x64xf32>
    tpu.vector_store %arg4[%c0_12, %c0_13, %c0_14], %27 {strides = array<i32>} : memref<1x16x64xf32, #tpu.memory_space<vmem>>, vector<1x16x64xf32>,
    return
  }
  func.func @transform_0(%arg0: i32) -> (i32, i32) {
    %c0_i32 = arith.constant 0 : i32
    %c0_i32_0 = arith.constant 0 : i32
    %c0_i32_1 = arith.constant 0 : i32
    return %c0_i32, %c0_i32_0 : i32, i32
  }
  func.func @transform_1(%arg0: i32) -> (i32, i32) {
    %c0_i32 = arith.constant 0 : i32
    %c0_i32_0 = arith.constant 0 : i32
    %c0_i32_1 = arith.constant 0 : i32
    return %c0_i32, %c0_i32_0 : i32, i32
  }
  func.func @transform_2(%arg0: i32) -> (i32, i32, i32) {
    %c0_i32 = arith.constant 0 : i32
    %c0_i32_0 = arith.constant 0 : i32
    %c0_i32_1 = arith.constant 0 : i32
    return %arg0, %c0_i32, %c0_i32_0 : i32, i32, i32
  }
  func.func @transform_3(%arg0: i32) -> (i32, i32, i32) {
    %c0_i32 = arith.constant 0 : i32
    %c0_i32_0 = arith.constant 0 : i32
    %c0_i32_1 = arith.constant 0 : i32
    return %arg0, %c0_i32, %c0_i32_0 : i32, i32, i32
  }
}

module attributes {stable_mosaic.version = 11 : i64} {
  func.func @_fused_conv_kernel(%arg0: i32, %arg1: memref<32x144xbf16, #tpu.memory_space<vmem>>, %arg2: memref<32x1xf32, #tpu.memory_space<vmem>>, %arg3: memref<1x144x16xbf16, #tpu.memory_space<vmem>>, %arg4: memref<1x32x16xf32, #tpu.memory_space<vmem>>) attributes {dimension_semantics = [#tpu.dimension_semantics<parallel>], iteration_bounds = array<i64: 2>, scalar_prefetch = 0 : i64, scratch_operands = 0 : i64, tpu.core_type = #tpu.core_type<tc>, window_params = [{pipeline_mode = #tpu.pipeline_mode<synchronous>, transform_indices = @transform_0, window_bounds = array<i64: 32, 144>}, {pipeline_mode = #tpu.pipeline_mode<synchronous>, transform_indices = @transform_1, window_bounds = array<i64: 32, 1>}, {transform_indices = @transform_2, window_bounds = array<i64: 1, 144, 16>}, {transform_indices = @transform_3, window_bounds = array<i64: 1, 32, 16>}]} {
    %c0 = arith.constant 0 : index
    %c0_0 = arith.constant 0 : index
    %0 = vector.load %arg1[%c0, %c0_0] : memref<32x144xbf16, #tpu.memory_space<vmem>>, vector<32x144xbf16>
    %c0_1 = arith.constant 0 : index
    %c0_2 = arith.constant 0 : index
    %c0_3 = arith.constant 0 : index
    %1 = vector.load %arg3[%c0_1, %c0_2, %c0_3] : memref<1x144x16xbf16, #tpu.memory_space<vmem>>, vector<1x144x16xbf16>
    %2 = vector.shape_cast %1 : vector<1x144x16xbf16> to vector<144x16xbf16>
    %cst = arith.constant dense<0.000000e+00> : vector<32x16xf32>
    %3 = tpu.matmul %0, %2, %cst {dimension_numbers = #tpu.dot_dimension_numbers<[1], [0], [0], [1], [0, 0, 1, 1], [], []>} : vector<32x144xbf16>, vector<144x16xbf16>, vector<32x16xf32> -> vector<32x16xf32>
    %c0_4 = arith.constant 0 : index
    %c0_5 = arith.constant 0 : index
    %4 = vector.load %arg2[%c0_4, %c0_5] : memref<32x1xf32, #tpu.memory_space<vmem>>, vector<32x1xf32>
    %5 = vector.broadcast %4 : vector<32x1xf32> to vector<32x16xf32>
    %6 = arith.addf %3, %5 : vector<32x16xf32>
    %cst_6 = arith.constant dense<0.000000e+00> : vector<32xf32>
    %7 = vector.multi_reduction <add>, %6, %cst_6 [1] : vector<32x16xf32> to vector<32xf32>
    %8 = vector.shape_cast %7 : vector<32xf32> to vector<32x1xf32>
    %cst_7 = arith.constant 1.600000e+01 : f32
    %9 = vector.broadcast %cst_7 : f32 to vector<32x1xf32>
    %10 = arith.divf %8, %9 : vector<32x1xf32>
    %11 = vector.broadcast %10 : vector<32x1xf32> to vector<32x16xf32>
    %12 = arith.subf %6, %11 : vector<32x16xf32>
    %13 = arith.mulf %12, %12 : vector<32x16xf32>
    %cst_8 = arith.constant dense<0.000000e+00> : vector<32xf32>
    %14 = vector.multi_reduction <add>, %13, %cst_8 [1] : vector<32x16xf32> to vector<32xf32>
    %15 = vector.shape_cast %14 : vector<32xf32> to vector<32x1xf32>
    %cst_9 = arith.constant 1.600000e+01 : f32
    %16 = vector.broadcast %cst_9 : f32 to vector<32x1xf32>
    %17 = arith.divf %15, %16 : vector<32x1xf32>
    %cst_10 = arith.constant 9.99999974E-6 : f32
    %18 = vector.broadcast %cst_10 : f32 to vector<32x1xf32>
    %19 = arith.addf %17, %18 : vector<32x1xf32>
    %20 = math.rsqrt %19 : vector<32x1xf32>
    %21 = vector.broadcast %20 : vector<32x1xf32> to vector<32x16xf32>
    %22 = arith.mulf %12, %21 : vector<32x16xf32>
    %cst_11 = arith.constant 0.000000e+00 : f32
    %23 = vector.broadcast %cst_11 : f32 to vector<32x16xf32>
    %24 = arith.maximumf %22, %23 : vector<32x16xf32>
    %c0_12 = arith.constant 0 : index
    %c0_13 = arith.constant 0 : index
    %c0_14 = arith.constant 0 : index
    %25 = vector.load %arg4[%c0_12, %c0_13, %c0_14] : memref<1x32x16xf32, #tpu.memory_space<vmem>>, vector<1x32x16xf32>
    %26 = vector.shape_cast %25 : vector<1x32x16xf32> to vector<32x16xf32>
    %27 = vector.shape_cast %24 : vector<32x16xf32> to vector<1x32x16xf32>
    tpu.vector_store %arg4[%c0_12, %c0_13, %c0_14], %27 {strides = array<i32>} : memref<1x32x16xf32, #tpu.memory_space<vmem>>, vector<1x32x16xf32>,
    return
  }
  func.func @transform_0(%arg0: i32) -> (i32, i32) {
    %c0_i32 = arith.constant 0 : i32
    %c0_i32_0 = arith.constant 0 : i32
    %c0_i32_1 = arith.constant 0 : i32
    return %c0_i32, %c0_i32_0 : i32, i32
  }
  func.func @transform_1(%arg0: i32) -> (i32, i32) {
    %c0_i32 = arith.constant 0 : i32
    %c0_i32_0 = arith.constant 0 : i32
    %c0_i32_1 = arith.constant 0 : i32
    return %c0_i32, %c0_i32_0 : i32, i32
  }
  func.func @transform_2(%arg0: i32) -> (i32, i32, i32) {
    %c0_i32 = arith.constant 0 : i32
    %c0_i32_0 = arith.constant 0 : i32
    %c0_i32_1 = arith.constant 0 : i32
    return %arg0, %c0_i32, %c0_i32_0 : i32, i32, i32
  }
  func.func @transform_3(%arg0: i32) -> (i32, i32, i32) {
    %c0_i32 = arith.constant 0 : i32
    %c0_i32_0 = arith.constant 0 : i32
    %c0_i32_1 = arith.constant 0 : i32
    return %arg0, %c0_i32, %c0_i32_0 : i32, i32, i32
  }
}

module attributes {stable_mosaic.version = 11 : i64} {
  func.func @_fused_conv_kernel(%arg0: i32, %arg1: memref<32x288xbf16, #tpu.memory_space<vmem>>, %arg2: memref<32x1xf32, #tpu.memory_space<vmem>>, %arg3: memref<1x288x16xbf16, #tpu.memory_space<vmem>>, %arg4: memref<1x32x16xf32, #tpu.memory_space<vmem>>) attributes {dimension_semantics = [#tpu.dimension_semantics<parallel>], iteration_bounds = array<i64: 2>, scalar_prefetch = 0 : i64, scratch_operands = 0 : i64, tpu.core_type = #tpu.core_type<tc>, window_params = [{pipeline_mode = #tpu.pipeline_mode<synchronous>, transform_indices = @transform_0, window_bounds = array<i64: 32, 288>}, {pipeline_mode = #tpu.pipeline_mode<synchronous>, transform_indices = @transform_1, window_bounds = array<i64: 32, 1>}, {transform_indices = @transform_2, window_bounds = array<i64: 1, 288, 16>}, {transform_indices = @transform_3, window_bounds = array<i64: 1, 32, 16>}]} {
    %c0 = arith.constant 0 : index
    %c0_0 = arith.constant 0 : index
    %0 = vector.load %arg1[%c0, %c0_0] : memref<32x288xbf16, #tpu.memory_space<vmem>>, vector<32x288xbf16>
    %c0_1 = arith.constant 0 : index
    %c0_2 = arith.constant 0 : index
    %c0_3 = arith.constant 0 : index
    %1 = vector.load %arg3[%c0_1, %c0_2, %c0_3] : memref<1x288x16xbf16, #tpu.memory_space<vmem>>, vector<1x288x16xbf16>
    %2 = vector.shape_cast %1 : vector<1x288x16xbf16> to vector<288x16xbf16>
    %cst = arith.constant dense<0.000000e+00> : vector<32x16xf32>
    %3 = tpu.matmul %0, %2, %cst {dimension_numbers = #tpu.dot_dimension_numbers<[1], [0], [0], [1], [0, 0, 1, 1], [], []>} : vector<32x288xbf16>, vector<288x16xbf16>, vector<32x16xf32> -> vector<32x16xf32>
    %c0_4 = arith.constant 0 : index
    %c0_5 = arith.constant 0 : index
    %4 = vector.load %arg2[%c0_4, %c0_5] : memref<32x1xf32, #tpu.memory_space<vmem>>, vector<32x1xf32>
    %5 = vector.broadcast %4 : vector<32x1xf32> to vector<32x16xf32>
    %6 = arith.addf %3, %5 : vector<32x16xf32>
    %cst_6 = arith.constant dense<0.000000e+00> : vector<32xf32>
    %7 = vector.multi_reduction <add>, %6, %cst_6 [1] : vector<32x16xf32> to vector<32xf32>
    %8 = vector.shape_cast %7 : vector<32xf32> to vector<32x1xf32>
    %cst_7 = arith.constant 1.600000e+01 : f32
    %9 = vector.broadcast %cst_7 : f32 to vector<32x1xf32>
    %10 = arith.divf %8, %9 : vector<32x1xf32>
    %11 = vector.broadcast %10 : vector<32x1xf32> to vector<32x16xf32>
    %12 = arith.subf %6, %11 : vector<32x16xf32>
    %13 = arith.mulf %12, %12 : vector<32x16xf32>
    %cst_8 = arith.constant dense<0.000000e+00> : vector<32xf32>
    %14 = vector.multi_reduction <add>, %13, %cst_8 [1] : vector<32x16xf32> to vector<32xf32>
    %15 = vector.shape_cast %14 : vector<32xf32> to vector<32x1xf32>
    %cst_9 = arith.constant 1.600000e+01 : f32
    %16 = vector.broadcast %cst_9 : f32 to vector<32x1xf32>
    %17 = arith.divf %15, %16 : vector<32x1xf32>
    %cst_10 = arith.constant 9.99999974E-6 : f32
    %18 = vector.broadcast %cst_10 : f32 to vector<32x1xf32>
    %19 = arith.addf %17, %18 : vector<32x1xf32>
    %20 = math.rsqrt %19 : vector<32x1xf32>
    %21 = vector.broadcast %20 : vector<32x1xf32> to vector<32x16xf32>
    %22 = arith.mulf %12, %21 : vector<32x16xf32>
    %cst_11 = arith.constant 0.000000e+00 : f32
    %23 = vector.broadcast %cst_11 : f32 to vector<32x16xf32>
    %24 = arith.maximumf %22, %23 : vector<32x16xf32>
    %c0_12 = arith.constant 0 : index
    %c0_13 = arith.constant 0 : index
    %c0_14 = arith.constant 0 : index
    %25 = vector.load %arg4[%c0_12, %c0_13, %c0_14] : memref<1x32x16xf32, #tpu.memory_space<vmem>>, vector<1x32x16xf32>
    %26 = vector.shape_cast %25 : vector<1x32x16xf32> to vector<32x16xf32>
    %27 = vector.shape_cast %24 : vector<32x16xf32> to vector<1x32x16xf32>
    tpu.vector_store %arg4[%c0_12, %c0_13, %c0_14], %27 {strides = array<i32>} : memref<1x32x16xf32, #tpu.memory_space<vmem>>, vector<1x32x16xf32>,
    return
  }
  func.func @transform_0(%arg0: i32) -> (i32, i32) {
    %c0_i32 = arith.constant 0 : i32
    %c0_i32_0 = arith.constant 0 : i32
    %c0_i32_1 = arith.constant 0 : i32
    return %c0_i32, %c0_i32_0 : i32, i32
  }
  func.func @transform_1(%arg0: i32) -> (i32, i32) {
    %c0_i32 = arith.constant 0 : i32
    %c0_i32_0 = arith.constant 0 : i32
    %c0_i32_1 = arith.constant 0 : i32
    return %c0_i32, %c0_i32_0 : i32, i32
  }
  func.func @transform_2(%arg0: i32) -> (i32, i32, i32) {
    %c0_i32 = arith.constant 0 : i32
    %c0_i32_0 = arith.constant 0 : i32
    %c0_i32_1 = arith.constant 0 : i32
    return %arg0, %c0_i32, %c0_i32_0 : i32, i32, i32
  }
  func.func @transform_3(%arg0: i32) -> (i32, i32, i32) {
    %c0_i32 = arith.constant 0 : i32
    %c0_i32_0 = arith.constant 0 : i32
    %c0_i32_1 = arith.constant 0 : i32
    return %arg0, %c0_i32, %c0_i32_0 : i32, i32, i32
  }
}

module attributes {stable_mosaic.version = 11 : i64} {
  func.func @_fused_conv_kernel(%arg0: i32, %arg1: memref<32x288xbf16, #tpu.memory_space<vmem>>, %arg2: memref<32x1xf32, #tpu.memory_space<vmem>>, %arg3: memref<1x288x16xbf16, #tpu.memory_space<vmem>>, %arg4: memref<1x32x16xf32, #tpu.memory_space<vmem>>, %arg5: memref<1x32x16xf32, #tpu.memory_space<vmem>>) attributes {dimension_semantics = [#tpu.dimension_semantics<parallel>], iteration_bounds = array<i64: 2>, scalar_prefetch = 0 : i64, scratch_operands = 0 : i64, tpu.core_type = #tpu.core_type<tc>, window_params = [{pipeline_mode = #tpu.pipeline_mode<synchronous>, transform_indices = @transform_0, window_bounds = array<i64: 32, 288>}, {pipeline_mode = #tpu.pipeline_mode<synchronous>, transform_indices = @transform_1, window_bounds = array<i64: 32, 1>}, {transform_indices = @transform_2, window_bounds = array<i64: 1, 288, 16>}, {transform_indices = @transform_3, window_bounds = array<i64: 1, 32, 16>}, {transform_indices = @transform_4, window_bounds = array<i64: 1, 32, 16>}]} {
    %c0 = arith.constant 0 : index
    %c0_0 = arith.constant 0 : index
    %0 = vector.load %arg1[%c0, %c0_0] : memref<32x288xbf16, #tpu.memory_space<vmem>>, vector<32x288xbf16>
    %c0_1 = arith.constant 0 : index
    %c0_2 = arith.constant 0 : index
    %c0_3 = arith.constant 0 : index
    %1 = vector.load %arg3[%c0_1, %c0_2, %c0_3] : memref<1x288x16xbf16, #tpu.memory_space<vmem>>, vector<1x288x16xbf16>
    %2 = vector.shape_cast %1 : vector<1x288x16xbf16> to vector<288x16xbf16>
    %cst = arith.constant dense<0.000000e+00> : vector<32x16xf32>
    %3 = tpu.matmul %0, %2, %cst {dimension_numbers = #tpu.dot_dimension_numbers<[1], [0], [0], [1], [0, 0, 1, 1], [], []>} : vector<32x288xbf16>, vector<288x16xbf16>, vector<32x16xf32> -> vector<32x16xf32>
    %c0_4 = arith.constant 0 : index
    %c0_5 = arith.constant 0 : index
    %4 = vector.load %arg2[%c0_4, %c0_5] : memref<32x1xf32, #tpu.memory_space<vmem>>, vector<32x1xf32>
    %5 = vector.broadcast %4 : vector<32x1xf32> to vector<32x16xf32>
    %6 = arith.addf %3, %5 : vector<32x16xf32>
    %cst_6 = arith.constant dense<0.000000e+00> : vector<32xf32>
    %7 = vector.multi_reduction <add>, %6, %cst_6 [1] : vector<32x16xf32> to vector<32xf32>
    %8 = vector.shape_cast %7 : vector<32xf32> to vector<32x1xf32>
    %cst_7 = arith.constant 1.600000e+01 : f32
    %9 = vector.broadcast %cst_7 : f32 to vector<32x1xf32>
    %10 = arith.divf %8, %9 : vector<32x1xf32>
    %11 = vector.broadcast %10 : vector<32x1xf32> to vector<32x16xf32>
    %12 = arith.subf %6, %11 : vector<32x16xf32>
    %13 = arith.mulf %12, %12 : vector<32x16xf32>
    %cst_8 = arith.constant dense<0.000000e+00> : vector<32xf32>
    %14 = vector.multi_reduction <add>, %13, %cst_8 [1] : vector<32x16xf32> to vector<32xf32>
    %15 = vector.shape_cast %14 : vector<32xf32> to vector<32x1xf32>
    %cst_9 = arith.constant 1.600000e+01 : f32
    %16 = vector.broadcast %cst_9 : f32 to vector<32x1xf32>
    %17 = arith.divf %15, %16 : vector<32x1xf32>
    %cst_10 = arith.constant 9.99999974E-6 : f32
    %18 = vector.broadcast %cst_10 : f32 to vector<32x1xf32>
    %19 = arith.addf %17, %18 : vector<32x1xf32>
    %20 = math.rsqrt %19 : vector<32x1xf32>
    %21 = vector.broadcast %20 : vector<32x1xf32> to vector<32x16xf32>
    %22 = arith.mulf %12, %21 : vector<32x16xf32>
    %c0_11 = arith.constant 0 : index
    %c0_12 = arith.constant 0 : index
    %c0_13 = arith.constant 0 : index
    %23 = vector.load %arg4[%c0_11, %c0_12, %c0_13] : memref<1x32x16xf32, #tpu.memory_space<vmem>>, vector<1x32x16xf32>
    %24 = vector.shape_cast %23 : vector<1x32x16xf32> to vector<32x16xf32>
    %25 = arith.addf %22, %24 : vector<32x16xf32>
    %c0_14 = arith.constant 0 : index
    %c0_15 = arith.constant 0 : index
    %c0_16 = arith.constant 0 : index
    %26 = vector.load %arg5[%c0_14, %c0_15, %c0_16] : memref<1x32x16xf32, #tpu.memory_space<vmem>>, vector<1x32x16xf32>
    %27 = vector.shape_cast %26 : vector<1x32x16xf32> to vector<32x16xf32>
    %28 = vector.shape_cast %25 : vector<32x16xf32> to vector<1x32x16xf32>
    tpu.vector_store %arg5[%c0_14, %c0_15, %c0_16], %28 {strides = array<i32>} : memref<1x32x16xf32, #tpu.memory_space<vmem>>, vector<1x32x16xf32>,
    return
  }
  func.func @transform_0(%arg0: i32) -> (i32, i32) {
    %c0_i32 = arith.constant 0 : i32
    %c0_i32_0 = arith.constant 0 : i32
    %c0_i32_1 = arith.constant 0 : i32
    return %c0_i32, %c0_i32_0 : i32, i32
  }
  func.func @transform_1(%arg0: i32) -> (i32, i32) {
    %c0_i32 = arith.constant 0 : i32
    %c0_i32_0 = arith.constant 0 : i32
    %c0_i32_1 = arith.constant 0 : i32
    return %c0_i32, %c0_i32_0 : i32, i32
  }
  func.func @transform_2(%arg0: i32) -> (i32, i32, i32) {
    %c0_i32 = arith.constant 0 : i32
    %c0_i32_0 = arith.constant 0 : i32
    %c0_i32_1 = arith.constant 0 : i32
    return %arg0, %c0_i32, %c0_i32_0 : i32, i32, i32
  }
  func.func @transform_3(%arg0: i32) -> (i32, i32, i32) {
    %c0_i32 = arith.constant 0 : i32
    %c0_i32_0 = arith.constant 0 : i32
    %c0_i32_1 = arith.constant 0 : i32
    return %arg0, %c0_i32, %c0_i32_0 : i32, i32, i32
  }
  func.func @transform_4(%arg0: i32) -> (i32, i32, i32) {
    %c0_i32 = arith.constant 0 : i32
    %c0_i32_0 = arith.constant 0 : i32
    %c0_i32_1 = arith.constant 0 : i32
    return %arg0, %c0_i32, %c0_i32_0 : i32, i32, i32
  }
}

module attributes {stable_mosaic.version = 11 : i64} {
  func.func @_fused_conv_kernel(%arg0: i32, %arg1: memref<64x128xbf16, #tpu.memory_space<vmem>>, %arg2: memref<64x1xf32, #tpu.memory_space<vmem>>, %arg3: memref<1x128x16xbf16, #tpu.memory_space<vmem>>, %arg4: memref<1x64x16xf32, #tpu.memory_space<vmem>>) attributes {dimension_semantics = [#tpu.dimension_semantics<parallel>], iteration_bounds = array<i64: 2>, scalar_prefetch = 0 : i64, scratch_operands = 0 : i64, tpu.core_type = #tpu.core_type<tc>, window_params = [{pipeline_mode = #tpu.pipeline_mode<synchronous>, transform_indices = @transform_0, window_bounds = array<i64: 64, 128>}, {pipeline_mode = #tpu.pipeline_mode<synchronous>, transform_indices = @transform_1, window_bounds = array<i64: 64, 1>}, {transform_indices = @transform_2, window_bounds = array<i64: 1, 128, 16>}, {transform_indices = @transform_3, window_bounds = array<i64: 1, 64, 16>}]} {
    %c0 = arith.constant 0 : index
    %c0_0 = arith.constant 0 : index
    %0 = vector.load %arg1[%c0, %c0_0] : memref<64x128xbf16, #tpu.memory_space<vmem>>, vector<64x128xbf16>
    %c0_1 = arith.constant 0 : index
    %c0_2 = arith.constant 0 : index
    %c0_3 = arith.constant 0 : index
    %1 = vector.load %arg3[%c0_1, %c0_2, %c0_3] : memref<1x128x16xbf16, #tpu.memory_space<vmem>>, vector<1x128x16xbf16>
    %2 = vector.shape_cast %1 : vector<1x128x16xbf16> to vector<128x16xbf16>
    %cst = arith.constant dense<0.000000e+00> : vector<64x16xf32>
    %3 = tpu.matmul %0, %2, %cst {dimension_numbers = #tpu.dot_dimension_numbers<[1], [0], [0], [1], [0, 0, 1, 1], [], []>} : vector<64x128xbf16>, vector<128x16xbf16>, vector<64x16xf32> -> vector<64x16xf32>
    %c0_4 = arith.constant 0 : index
    %c0_5 = arith.constant 0 : index
    %4 = vector.load %arg2[%c0_4, %c0_5] : memref<64x1xf32, #tpu.memory_space<vmem>>, vector<64x1xf32>
    %5 = vector.broadcast %4 : vector<64x1xf32> to vector<64x16xf32>
    %6 = arith.addf %3, %5 : vector<64x16xf32>
    %cst_6 = arith.constant dense<0.000000e+00> : vector<64xf32>
    %7 = vector.multi_reduction <add>, %6, %cst_6 [1] : vector<64x16xf32> to vector<64xf32>
    %8 = vector.shape_cast %7 : vector<64xf32> to vector<64x1xf32>
    %9 = vector.extract_strided_slice %8 {offsets = [0, 0], sizes = [16, 1], strides = [1, 1]} : vector<64x1xf32> to vector<16x1xf32>
    %10 = vector.extract_strided_slice %8 {offsets = [16, 0], sizes = [16, 1], strides = [1, 1]} : vector<64x1xf32> to vector<16x1xf32>
    %11 = vector.extract_strided_slice %8 {offsets = [32, 0], sizes = [16, 1], strides = [1, 1]} : vector<64x1xf32> to vector<16x1xf32>
    %12 = vector.extract_strided_slice %8 {offsets = [48, 0], sizes = [16, 1], strides = [1, 1]} : vector<64x1xf32> to vector<16x1xf32>
    %13 = arith.addf %9, %10 : vector<16x1xf32>
    %14 = arith.addf %13, %11 : vector<16x1xf32>
    %15 = arith.addf %14, %12 : vector<16x1xf32>
    %16 = tpu.concatenate %15, %15, %15, %15 in 0 : vector<16x1xf32>, vector<16x1xf32>, vector<16x1xf32>, vector<16x1xf32> -> vector<64x1xf32>
    %cst_7 = arith.constant 6.400000e+01 : f32
    %17 = vector.broadcast %cst_7 : f32 to vector<64x1xf32>
    %18 = arith.divf %16, %17 : vector<64x1xf32>
    %19 = vector.broadcast %18 : vector<64x1xf32> to vector<64x16xf32>
    %20 = arith.subf %6, %19 : vector<64x16xf32>
    %21 = arith.mulf %20, %20 : vector<64x16xf32>
    %cst_8 = arith.constant dense<0.000000e+00> : vector<64xf32>
    %22 = vector.multi_reduction <add>, %21, %cst_8 [1] : vector<64x16xf32> to vector<64xf32>
    %23 = vector.shape_cast %22 : vector<64xf32> to vector<64x1xf32>
    %24 = vector.extract_strided_slice %23 {offsets = [0, 0], sizes = [16, 1], strides = [1, 1]} : vector<64x1xf32> to vector<16x1xf32>
    %25 = vector.extract_strided_slice %23 {offsets = [16, 0], sizes = [16, 1], strides = [1, 1]} : vector<64x1xf32> to vector<16x1xf32>
    %26 = vector.extract_strided_slice %23 {offsets = [32, 0], sizes = [16, 1], strides = [1, 1]} : vector<64x1xf32> to vector<16x1xf32>
    %27 = vector.extract_strided_slice %23 {offsets = [48, 0], sizes = [16, 1], strides = [1, 1]} : vector<64x1xf32> to vector<16x1xf32>
    %28 = arith.addf %24, %25 : vector<16x1xf32>
    %29 = arith.addf %28, %26 : vector<16x1xf32>
    %30 = arith.addf %29, %27 : vector<16x1xf32>
    %31 = tpu.concatenate %30, %30, %30, %30 in 0 : vector<16x1xf32>, vector<16x1xf32>, vector<16x1xf32>, vector<16x1xf32> -> vector<64x1xf32>
    %cst_9 = arith.constant 6.400000e+01 : f32
    %32 = vector.broadcast %cst_9 : f32 to vector<64x1xf32>
    %33 = arith.divf %31, %32 : vector<64x1xf32>
    %cst_10 = arith.constant 9.99999974E-6 : f32
    %34 = vector.broadcast %cst_10 : f32 to vector<64x1xf32>
    %35 = arith.addf %33, %34 : vector<64x1xf32>
    %36 = math.rsqrt %35 : vector<64x1xf32>
    %37 = vector.broadcast %36 : vector<64x1xf32> to vector<64x16xf32>
    %38 = arith.mulf %20, %37 : vector<64x16xf32>
    %cst_11 = arith.constant 0.000000e+00 : f32
    %39 = vector.broadcast %cst_11 : f32 to vector<64x16xf32>
    %40 = arith.maximumf %38, %39 : vector<64x16xf32>
    %c0_12 = arith.constant 0 : index
    %c0_13 = arith.constant 0 : index
    %c0_14 = arith.constant 0 : index
    %41 = vector.load %arg4[%c0_12, %c0_13, %c0_14] : memref<1x64x16xf32, #tpu.memory_space<vmem>>, vector<1x64x16xf32>
    %42 = vector.shape_cast %41 : vector<1x64x16xf32> to vector<64x16xf32>
    %43 = vector.shape_cast %40 : vector<64x16xf32> to vector<1x64x16xf32>
    tpu.vector_store %arg4[%c0_12, %c0_13, %c0_14], %43 {strides = array<i32>} : memref<1x64x16xf32, #tpu.memory_space<vmem>>, vector<1x64x16xf32>,
    return
  }
  func.func @transform_0(%arg0: i32) -> (i32, i32) {
    %c0_i32 = arith.constant 0 : i32
    %c0_i32_0 = arith.constant 0 : i32
    %c0_i32_1 = arith.constant 0 : i32
    return %c0_i32, %c0_i32_0 : i32, i32
  }
  func.func @transform_1(%arg0: i32) -> (i32, i32) {
    %c0_i32 = arith.constant 0 : i32
    %c0_i32_0 = arith.constant 0 : i32
    %c0_i32_1 = arith.constant 0 : i32
    return %c0_i32, %c0_i32_0 : i32, i32
  }
  func.func @transform_2(%arg0: i32) -> (i32, i32, i32) {
    %c0_i32 = arith.constant 0 : i32
    %c0_i32_0 = arith.constant 0 : i32
    %c0_i32_1 = arith.constant 0 : i32
    return %arg0, %c0_i32, %c0_i32_0 : i32, i32, i32
  }
  func.func @transform_3(%arg0: i32) -> (i32, i32, i32) {
    %c0_i32 = arith.constant 0 : i32
    %c0_i32_0 = arith.constant 0 : i32
    %c0_i32_1 = arith.constant 0 : i32
    return %arg0, %c0_i32, %c0_i32_0 : i32, i32, i32
  }
}

module attributes {stable_mosaic.version = 11 : i64} {
  func.func @_fused_conv_kernel(%arg0: i32, %arg1: memref<32x64xbf16, #tpu.memory_space<vmem>>, %arg2: memref<32x1xf32, #tpu.memory_space<vmem>>, %arg3: memref<1x64x64xbf16, #tpu.memory_space<vmem>>, %arg4: memref<1x32x64xf32, #tpu.memory_space<vmem>>) attributes {dimension_semantics = [#tpu.dimension_semantics<parallel>], iteration_bounds = array<i64: 2>, scalar_prefetch = 0 : i64, scratch_operands = 0 : i64, tpu.core_type = #tpu.core_type<tc>, window_params = [{pipeline_mode = #tpu.pipeline_mode<synchronous>, transform_indices = @transform_0, window_bounds = array<i64: 32, 64>}, {pipeline_mode = #tpu.pipeline_mode<synchronous>, transform_indices = @transform_1, window_bounds = array<i64: 32, 1>}, {transform_indices = @transform_2, window_bounds = array<i64: 1, 64, 64>}, {transform_indices = @transform_3, window_bounds = array<i64: 1, 32, 64>}]} {
    %c0 = arith.constant 0 : index
    %c0_0 = arith.constant 0 : index
    %0 = vector.load %arg1[%c0, %c0_0] : memref<32x64xbf16, #tpu.memory_space<vmem>>, vector<32x64xbf16>
    %c0_1 = arith.constant 0 : index
    %c0_2 = arith.constant 0 : index
    %c0_3 = arith.constant 0 : index
    %1 = vector.load %arg3[%c0_1, %c0_2, %c0_3] : memref<1x64x64xbf16, #tpu.memory_space<vmem>>, vector<1x64x64xbf16>
    %2 = vector.shape_cast %1 : vector<1x64x64xbf16> to vector<64x64xbf16>
    %cst = arith.constant dense<0.000000e+00> : vector<32x64xf32>
    %3 = tpu.matmul %0, %2, %cst {dimension_numbers = #tpu.dot_dimension_numbers<[1], [0], [0], [1], [0, 0, 1, 1], [], []>} : vector<32x64xbf16>, vector<64x64xbf16>, vector<32x64xf32> -> vector<32x64xf32>
    %c0_4 = arith.constant 0 : index
    %c0_5 = arith.constant 0 : index
    %4 = vector.load %arg2[%c0_4, %c0_5] : memref<32x1xf32, #tpu.memory_space<vmem>>, vector<32x1xf32>
    %5 = vector.broadcast %4 : vector<32x1xf32> to vector<32x64xf32>
    %6 = arith.addf %3, %5 : vector<32x64xf32>
    %cst_6 = arith.constant dense<0.000000e+00> : vector<32xf32>
    %7 = vector.multi_reduction <add>, %6, %cst_6 [1] : vector<32x64xf32> to vector<32xf32>
    %8 = vector.shape_cast %7 : vector<32xf32> to vector<32x1xf32>
    %9 = vector.extract_strided_slice %8 {offsets = [0, 0], sizes = [8, 1], strides = [1, 1]} : vector<32x1xf32> to vector<8x1xf32>
    %10 = vector.extract_strided_slice %8 {offsets = [8, 0], sizes = [8, 1], strides = [1, 1]} : vector<32x1xf32> to vector<8x1xf32>
    %11 = vector.extract_strided_slice %8 {offsets = [16, 0], sizes = [8, 1], strides = [1, 1]} : vector<32x1xf32> to vector<8x1xf32>
    %12 = vector.extract_strided_slice %8 {offsets = [24, 0], sizes = [8, 1], strides = [1, 1]} : vector<32x1xf32> to vector<8x1xf32>
    %13 = arith.addf %9, %10 : vector<8x1xf32>
    %14 = arith.addf %13, %11 : vector<8x1xf32>
    %15 = arith.addf %14, %12 : vector<8x1xf32>
    %16 = tpu.concatenate %15, %15, %15, %15 in 0 : vector<8x1xf32>, vector<8x1xf32>, vector<8x1xf32>, vector<8x1xf32> -> vector<32x1xf32>
    %cst_7 = arith.constant 2.560000e+02 : f32
    %17 = vector.broadcast %cst_7 : f32 to vector<32x1xf32>
    %18 = arith.divf %16, %17 : vector<32x1xf32>
    %19 = vector.broadcast %18 : vector<32x1xf32> to vector<32x64xf32>
    %20 = arith.subf %6, %19 : vector<32x64xf32>
    %21 = arith.mulf %20, %20 : vector<32x64xf32>
    %cst_8 = arith.constant dense<0.000000e+00> : vector<32xf32>
    %22 = vector.multi_reduction <add>, %21, %cst_8 [1] : vector<32x64xf32> to vector<32xf32>
    %23 = vector.shape_cast %22 : vector<32xf32> to vector<32x1xf32>
    %24 = vector.extract_strided_slice %23 {offsets = [0, 0], sizes = [8, 1], strides = [1, 1]} : vector<32x1xf32> to vector<8x1xf32>
    %25 = vector.extract_strided_slice %23 {offsets = [8, 0], sizes = [8, 1], strides = [1, 1]} : vector<32x1xf32> to vector<8x1xf32>
    %26 = vector.extract_strided_slice %23 {offsets = [16, 0], sizes = [8, 1], strides = [1, 1]} : vector<32x1xf32> to vector<8x1xf32>
    %27 = vector.extract_strided_slice %23 {offsets = [24, 0], sizes = [8, 1], strides = [1, 1]} : vector<32x1xf32> to vector<8x1xf32>
    %28 = arith.addf %24, %25 : vector<8x1xf32>
    %29 = arith.addf %28, %26 : vector<8x1xf32>
    %30 = arith.addf %29, %27 : vector<8x1xf32>
    %31 = tpu.concatenate %30, %30, %30, %30 in 0 : vector<8x1xf32>, vector<8x1xf32>, vector<8x1xf32>, vector<8x1xf32> -> vector<32x1xf32>
    %cst_9 = arith.constant 2.560000e+02 : f32
    %32 = vector.broadcast %cst_9 : f32 to vector<32x1xf32>
    %33 = arith.divf %31, %32 : vector<32x1xf32>
    %cst_10 = arith.constant 9.99999974E-6 : f32
    %34 = vector.broadcast %cst_10 : f32 to vector<32x1xf32>
    %35 = arith.addf %33, %34 : vector<32x1xf32>
    %36 = math.rsqrt %35 : vector<32x1xf32>
    %37 = vector.broadcast %36 : vector<32x1xf32> to vector<32x64xf32>
    %38 = arith.mulf %20, %37 : vector<32x64xf32>
    %cst_11 = arith.constant 0.000000e+00 : f32
    %39 = vector.broadcast %cst_11 : f32 to vector<32x64xf32>
    %40 = arith.maximumf %38, %39 : vector<32x64xf32>
    %c0_12 = arith.constant 0 : index
    %c0_13 = arith.constant 0 : index
    %c0_14 = arith.constant 0 : index
    %41 = vector.load %arg4[%c0_12, %c0_13, %c0_14] : memref<1x32x64xf32, #tpu.memory_space<vmem>>, vector<1x32x64xf32>
    %42 = vector.shape_cast %41 : vector<1x32x64xf32> to vector<32x64xf32>
    %43 = vector.shape_cast %40 : vector<32x64xf32> to vector<1x32x64xf32>
    tpu.vector_store %arg4[%c0_12, %c0_13, %c0_14], %43 {strides = array<i32>} : memref<1x32x64xf32, #tpu.memory_space<vmem>>, vector<1x32x64xf32>,
    return
  }
  func.func @transform_0(%arg0: i32) -> (i32, i32) {
    %c0_i32 = arith.constant 0 : i32
    %c0_i32_0 = arith.constant 0 : i32
    %c0_i32_1 = arith.constant 0 : i32
    return %c0_i32, %c0_i32_0 : i32, i32
  }
  func.func @transform_1(%arg0: i32) -> (i32, i32) {
    %c0_i32 = arith.constant 0 : i32
    %c0_i32_0 = arith.constant 0 : i32
    %c0_i32_1 = arith.constant 0 : i32
    return %c0_i32, %c0_i32_0 : i32, i32
  }
  func.func @transform_2(%arg0: i32) -> (i32, i32, i32) {
    %c0_i32 = arith.constant 0 : i32
    %c0_i32_0 = arith.constant 0 : i32
    %c0_i32_1 = arith.constant 0 : i32
    return %arg0, %c0_i32, %c0_i32_0 : i32, i32, i32
  }
  func.func @transform_3(%arg0: i32) -> (i32, i32, i32) {
    %c0_i32 = arith.constant 0 : i32
    %c0_i32_0 = arith.constant 0 : i32
    %c0_i32_1 = arith.constant 0 : i32
    return %arg0, %c0_i32, %c0_i32_0 : i32, i32, i32
  }
}

module attributes {stable_mosaic.version = 11 : i64} {
  func.func @_fused_conv_kernel(%arg0: i32, %arg1: memref<3x392xbf16, #tpu.memory_space<vmem>>, %arg2: memref<3x1xf32, #tpu.memory_space<vmem>>, %arg3: memref<1x392x256xbf16, #tpu.memory_space<vmem>>, %arg4: memref<1x3x256xf32, #tpu.memory_space<vmem>>) attributes {dimension_semantics = [#tpu.dimension_semantics<parallel>], iteration_bounds = array<i64: 2>, scalar_prefetch = 0 : i64, scratch_operands = 0 : i64, tpu.core_type = #tpu.core_type<tc>, window_params = [{pipeline_mode = #tpu.pipeline_mode<synchronous>, transform_indices = @transform_0, window_bounds = array<i64: 3, 392>}, {pipeline_mode = #tpu.pipeline_mode<synchronous>, transform_indices = @transform_1, window_bounds = array<i64: 3, 1>}, {transform_indices = @transform_2, window_bounds = array<i64: 1, 392, 256>}, {transform_indices = @transform_3, window_bounds = array<i64: 1, 3, 256>}]} {
    %c0 = arith.constant 0 : index
    %c0_0 = arith.constant 0 : index
    %0 = vector.load %arg1[%c0, %c0_0] : memref<3x392xbf16, #tpu.memory_space<vmem>>, vector<3x392xbf16>
    %c0_1 = arith.constant 0 : index
    %c0_2 = arith.constant 0 : index
    %c0_3 = arith.constant 0 : index
    %1 = vector.load %arg3[%c0_1, %c0_2, %c0_3] : memref<1x392x256xbf16, #tpu.memory_space<vmem>>, vector<1x392x256xbf16>
    %2 = vector.shape_cast %1 : vector<1x392x256xbf16> to vector<392x256xbf16>
    %cst = arith.constant dense<0.000000e+00> : vector<3x256xf32>
    %3 = tpu.matmul %0, %2, %cst {dimension_numbers = #tpu.dot_dimension_numbers<[1], [0], [0], [1], [0, 0, 1, 1], [], []>} : vector<3x392xbf16>, vector<392x256xbf16>, vector<3x256xf32> -> vector<3x256xf32>
    %c0_4 = arith.constant 0 : index
    %c0_5 = arith.constant 0 : index
    %4 = vector.load %arg2[%c0_4, %c0_5] : memref<3x1xf32, #tpu.memory_space<vmem>>, vector<3x1xf32>
    %5 = vector.broadcast %4 : vector<3x1xf32> to vector<3x256xf32>
    %6 = arith.addf %3, %5 : vector<3x256xf32>
    %7 = math.tanh %6 : vector<3x256xf32>
    %c0_6 = arith.constant 0 : index
    %c0_7 = arith.constant 0 : index
    %c0_8 = arith.constant 0 : index
    %8 = vector.load %arg4[%c0_6, %c0_7, %c0_8] : memref<1x3x256xf32, #tpu.memory_space<vmem>>, vector<1x3x256xf32>
    %9 = vector.shape_cast %8 : vector<1x3x256xf32> to vector<3x256xf32>
    %10 = vector.shape_cast %7 : vector<3x256xf32> to vector<1x3x256xf32>
    tpu.vector_store %arg4[%c0_6, %c0_7, %c0_8], %10 {strides = array<i32>} : memref<1x3x256xf32, #tpu.memory_space<vmem>>, vector<1x3x256xf32>,
    return
  }
  func.func @transform_0(%arg0: i32) -> (i32, i32) {
    %c0_i32 = arith.constant 0 : i32
    %c0_i32_0 = arith.constant 0 : i32
    %c0_i32_1 = arith.constant 0 : i32
    return %c0_i32, %c0_i32_0 : i32, i32
  }
  func.func @transform_1(%arg0: i32) -> (i32, i32) {
    %c0_i32 = arith.constant 0 : i32
    %c0_i32_0 = arith.constant 0 : i32
    %c0_i32_1 = arith.constant 0 : i32
    return %c0_i32, %c0_i32_0 : i32, i32
  }
  func.func @transform_2(%arg0: i32) -> (i32, i32, i32) {
    %c0_i32 = arith.constant 0 : i32
    %c0_i32_0 = arith.constant 0 : i32
    %c0_i32_1 = arith.constant 0 : i32
    return %arg0, %c0_i32, %c0_i32_0 : i32, i32, i32
  }
  func.func @transform_3(%arg0: i32) -> (i32, i32, i32) {
    %c0_i32 = arith.constant 0 : i32
    %c0_i32_0 = arith.constant 0 : i32
    %c0_i32_1 = arith.constant 0 : i32
    return %arg0, %c0_i32, %c0_i32_0 : i32, i32, i32
  }
}

</mosaic_0001>

<llo_original>
// kernel: cyclegan_generator.12
$region0: #{cyclegan_generator.12}
  #allocation0 [shape = 'u32[]', space=smem, size = 0x4, offset = 0x4, fixed_abs, tag = 'smem constant byte address 0x4 - core index']
  #allocation1 [shape = 'u32[72,128]{1,0:T(1,128)}', space=vmem, size = 0x9000, scoped, tag = 'internal scratch']
  %s0 = inlined_call_operand.vmem [shape: bf16[8,147], index: 0, kind: input, shape index: {}]
  %s1 = inlined_call_operand.vmem [shape: f32[8,1], index: 1, kind: input, shape index: {}]
  %s2 = inlined_call_operand.vmem [shape: bf16[2,147,256], index: 2, kind: input, shape index: {}]
  %s3 = inlined_call_operand.vmem [shape: f32[2,8,256], index: 3, kind: output, shape index: {}]
  %s4 = sld [smem:[#allocation0]]
  $region45: #{cyclegan_generator.12} parent=0
    _
  %s6 = ssub.s32 1, %s4
  %s7 = scalar_select 0, %s6, %s4
  loop: start=0, step=1, limit=4
  $region2: #{cyclegan_generator.12} parent=0 // loop_pre_header
    _
  $region3: #{cyclegan_generator.12} parent=0 // loop_header
    %s9 = sphi 0, %s13
    %p10 = scmp.ge.s32.totalorder %s9, 4
    %s17 = sphi 0, %s17
    %s19 = sphi 0, %s17
    %s20 = sphi 0, %s19
    %s34 = sphi 0, %s20
    %s38 = sphi 0, %s38
    %s40 = sphi 0, %s38
    %s41 = sphi 0, %s40
    %s55 = sphi 0, %s41
    %s61 = sphi 0, %s63
    %s64 = sphi 0, %s61
    %s65 = sphi 0, %s64
    %s81 = sphi 0, %s65
    %s87 = sphi 0, %s89
    %s90 = sphi 0, %s87
    %s91 = sphi 0, %s90
    %s107 = sphi 0, %s91
  $region4: #{cyclegan_generator.12} parent=0 // loop_header_branch
    %12 = sbr.rel (%p10) target = $region8
  $region5: #{cyclegan_generator.12} parent=0 // loop_body
    %s14 = ssub.s32 %s9, 1
    %s15 = ssub.s32 %s9, 2
    %s16 = sadd.s32 %s9, 1
    %s18 = sadd.s32 %s17, 1
    %p21 = scmp.eq.s32.totalorder %s9, 1
    %p22 = scmp.ne.s32.totalorder %s17, %s19
    %p23 = scmp.eq.s32.totalorder %s9, 0
    %p24 = por %p22, %p23
    %p25 = scmp.ne.s32.totalorder %s17, %s19
    %p26 = scmp.eq.s32.totalorder %s14, 1
    %p27 = por %p25, %p26
    %p28 = scmp.ne.s32.totalorder %s19, %s20
    %p29 = scmp.eq.s32.totalorder %s14, 0
    %p30 = por %p28, %p29
    %p31 = scmp.ne.s32.totalorder %s19, %s20
    %p32 = scmp.eq.s32.totalorder %s15, 1
    %p33 = por %p31, %p32
    %p35 = scmp.ne.s32.totalorder %s20, %s34
    %p36 = scmp.eq.s32.totalorder %s15, 0
    %p37 = por %p35, %p36
    %s39 = sadd.s32 %s38, 1
    %p42 = scmp.eq.s32.totalorder %s9, 1
    %p43 = scmp.ne.s32.totalorder %s38, %s40
    %p44 = scmp.eq.s32.totalorder %s9, 0
    %p45 = por %p43, %p44
    %p46 = scmp.ne.s32.totalorder %s38, %s40
    %p47 = scmp.eq.s32.totalorder %s14, 1
    %p48 = por %p46, %p47
    %p49 = scmp.ne.s32.totalorder %s40, %s41
    %p50 = scmp.eq.s32.totalorder %s14, 0
    %p51 = por %p49, %p50
    %p52 = scmp.ne.s32.totalorder %s40, %s41
    %p53 = scmp.eq.s32.totalorder %s15, 1
    %p54 = por %p52, %p53
    %p56 = scmp.ne.s32.totalorder %s41, %s55
    %p57 = scmp.eq.s32.totalorder %s15, 0
    %p58 = por %p56, %p57
    %s59 = ssub.s32 %s9, %s16
    %p60 = scmp.eq.s32.totalorder %s59, 0
    %s62 = sadd.s32 %s61, 1
    %s63 = scalar_select %p60, %s61, %s62
    %p66 = pneg %p60
    %p67 = scmp.eq.s32.totalorder %s9, 1
    %p68 = por %p66, %p67
    %p69 = scmp.ne.s32.totalorder %s61, %s64
    %p70 = scmp.eq.s32.totalorder %s9, 0
    %p71 = por %p69, %p70
    %p72 = scmp.ne.s32.totalorder %s61, %s64
    %p73 = scmp.eq.s32.totalorder %s14, 1
    %p74 = por %p72, %p73
    %p75 = scmp.ne.s32.totalorder %s64, %s65
    %p76 = scmp.eq.s32.totalorder %s14, 0
    %p77 = por %p75, %p76
    %p78 = scmp.ne.s32.totalorder %s64, %s65
    %p79 = scmp.eq.s32.totalorder %s15, 1
    %p80 = por %p78, %p79
    %p82 = scmp.ne.s32.totalorder %s65, %s81
    %p83 = scmp.eq.s32.totalorder %s15, 0
    %p84 = por %p82, %p83
    %s85 = ssub.s32 %s9, %s16
    %p86 = scmp.eq.s32.totalorder %s85, 0
    %s88 = sadd.s32 %s87, 1
    %s89 = scalar_select %p86, %s87, %s88
    %p92 = pneg %p86
    %p93 = scmp.eq.s32.totalorder %s9, 1
    %p94 = por %p92, %p93
    %p95 = scmp.ne.s32.totalorder %s87, %s90
    %p96 = scmp.eq.s32.totalorder %s9, 0
    %p97 = por %p95, %p96
    %p98 = scmp.ne.s32.totalorder %s87, %s90
    %p99 = scmp.eq.s32.totalorder %s14, 1
    %p100 = por %p98, %p99
    %p101 = scmp.ne.s32.totalorder %s90, %s91
    %p102 = scmp.eq.s32.totalorder %s14, 0
    %p103 = por %p101, %p102
    %p104 = scmp.ne.s32.totalorder %s90, %s91
    %p105 = scmp.eq.s32.totalorder %s15, 1
    %p106 = por %p104, %p105
    %p108 = scmp.ne.s32.totalorder %s91, %s107
    %p109 = scmp.eq.s32.totalorder %s15, 0
    %p110 = por %p108, %p109
    %p111 = scmp.le.s32.totalorder 1, %s9
    %p112 = scmp.lt.s32.totalorder %s9, 3
    %p113 = pnand %p111, %p112
    %p114 = pneg %p113
    // Predicated region
    $region9: #{cyclegan_generator.12} parent=5 // pred_check
      _
    $region10: #{cyclegan_generator.12} parent=5 // pred_check_branch
      %116 = sbr.rel (%p113) target = $region12
    $region11: #{cyclegan_generator.12} parent=5 // pred_region
      %s117 = ssub.s32 %s9, 1
      // Predicated region
      $region13: #{cyclegan_generator.12} parent=11 // pred_check
        %p118 = pneg %p30
      $region14: #{cyclegan_generator.12} parent=11 // pred_check_branch
        %120 = sbr.rel (%p118) target = $region16
      $region15: #{cyclegan_generator.12} parent=11 // pred_region
        _
      $region16: #{cyclegan_generator.12} parent=11 // pred_fallthru
        _
      // Predicated region
      $region17: #{cyclegan_generator.12} parent=11 // pred_check
        %p121 = pneg %p51
      $region18: #{cyclegan_generator.12} parent=11 // pred_check_branch
        %123 = sbr.rel (%p121) target = $region20
      $region19: #{cyclegan_generator.12} parent=11 // pred_region
        _
      $region20: #{cyclegan_generator.12} parent=11 // pred_fallthru
        _
    $region12: #{cyclegan_generator.12} parent=5 // pred_fallthru
      _
    %p124 = scmp.lt.s32.totalorder %s9, 2
    // Predicated region
    $region21: #{cyclegan_generator.12} parent=5 // pred_check
      %p125 = pneg %p124
    $region22: #{cyclegan_generator.12} parent=5 // pred_check_branch
      %127 = sbr.rel (%p125) target = $region24
    $region23: #{cyclegan_generator.12} parent=5 // pred_region
      // Predicated region
      $region25: #{cyclegan_generator.12} parent=23 // pred_check
        %p128 = pneg %p71
      $region26: #{cyclegan_generator.12} parent=23 // pred_check_branch
        %130 = sbr.rel (%p128) target = $region28
      $region27: #{cyclegan_generator.12} parent=23 // pred_region
        %p131 = scmp.lt.s32.totalorder %s9, 1
        %s132 = scalar_select %p131, %s9, 1
        %s133 = smul.addr %s132, 38
        %s134 = smul.addr %s133, 4
        %s135 = scalar_lea.vmem %s2, %s134
      $region28: #{cyclegan_generator.12} parent=23 // pred_fallthru
        _
    $region24: #{cyclegan_generator.12} parent=5 // pred_fallthru
      _
    %p136 = scmp.le.s32.totalorder 1, %s9
    %p137 = scmp.lt.s32.totalorder %s9, 3
    %p138 = pnand %p136, %p137
    %p139 = pneg %p138
    // Predicated region
    $region29: #{cyclegan_generator.12} parent=5 // pred_check
      _
    $region30: #{cyclegan_generator.12} parent=5 // pred_check_branch
      %141 = sbr.rel (%p138) target = $region32
    $region31: #{cyclegan_generator.12} parent=5 // pred_region
      %s142 = ssub.s32 %s9, 1
      %p143 = pneg %p30
      %p144 = pneg %p27
      %p145 = pneg %p51
      %p146 = pneg %p48
      %p147 = scmp.lt.s32.totalorder %s14, 1
      %s148 = scalar_select %p147, %s14, 1
      %s149 = smul.addr %s148, 38
      %s150 = smul.addr %s149, 4
      %s151 = scalar_lea.vmem %s2, %s150
      %p152 = pneg %p77
      %p153 = pneg %p74
      %p154 = pneg %p103
      %p155 = pneg %p100
      %p156 = scmp.lt.s32.totalorder %s14, 1
      %s157 = scalar_select %p156, %s14, 1
      %s158 = smul.addr %s157, 2
      %s159 = smul.addr %s158, 8
      %s160 = scalar_lea.vmem %s3, %s159
      %p161 = scmp.lt.s32.totalorder %s14, 1
      %s162 = scalar_select %p161, %s14, 1
      %s163 = smul.addr %s162, 38
      %s164 = smul.addr %s163, 4
      %s165 = scalar_lea.vmem %s2, %s164
      %p166 = scmp.lt.s32.totalorder %s14, 1
      %s167 = scalar_select %p166, %s14, 1
      %s168 = smul.addr %s167, 2
      %s169 = smul.addr %s168, 8
      %s170 = scalar_lea.vmem %s3, %s169
      %v172 = vld [vmem:[%s0] sm:$0xff]
      %v173 = vld [vmem:[%s165] sm:$0xff]
      %v174 = vld [vmem:[%s165 + $0x8] sm:$0xff]
      %v175 = vld [vmem:[%s165 + $0x10] sm:$0xff]
      %v176 = vld [vmem:[%s165 + $0x18] sm:$0xff]
      %v177 = vld [vmem:[%s165 + $0x20] sm:$0xff]
      %v178 = vld [vmem:[%s165 + $0x28] sm:$0xff]
      %v179 = vld [vmem:[%s165 + $0x30] sm:$0xff]
      %v180 = vld [vmem:[%s165 + $0x38] sm:$0xff]
      %v181 = vld [vmem:[%s165 + $0x40] sm:$0xff]
      %v182 = vld [vmem:[%s165 + $0x48] sm:$0xff]
      %v183 = vld [vmem:[%s165 + $0x50] sm:$0xff]
      %v184 = vld [vmem:[%s165 + $0x58] sm:$0xff]
      %v185 = vld [vmem:[%s165 + $0x60] sm:$0xff]
      %v186 = vld [vmem:[%s165 + $0x68] sm:$0xff]
      %v187 = vld [vmem:[%s165 + $0x70] sm:$0xff]
      %v188 = vld [vmem:[%s165 + $0x78] sm:$0xff]
      %v189 = vld [vmem:[%s165 + $0x80] sm:$0xff]
      %v190 = vld [vmem:[%s165 + $0x88] sm:$0xff]
      %v191 = vld [vmem:[%s165 + $0x90] sm:$0x33]
      %v192 = vld [vmem:[%s1] sm:$0xff]
      %194 = vset.pattern.permute.xlu0 0
      %195 = vperm.xlu0 %194, %v192
      %v196 = vpop.permute.xlu0 %195
      %v199 = vunpack.c.l.b16 %v172
      %v200 = vunpack.c.h.b16 %v172
      %v201 = vpack.c.b16 %v199, %v199
      %v202 = vpack.c.b16 %v200, %v200
      %v223 = vunpack.c.l.b16 %v173
      %v224 = vunpack.c.h.b16 %v173
      %v225 = vunpack.c.l.b16 %v174
      %v226 = vunpack.c.h.b16 %v174
      %v227 = vunpack.c.l.b16 %v175
      %v228 = vunpack.c.h.b16 %v175
      %v229 = vunpack.c.l.b16 %v176
      %v230 = vunpack.c.h.b16 %v176
      %v231 = vunpack.c.l.b16 %v177
      %v232 = vunpack.c.h.b16 %v177
      %v233 = vunpack.c.l.b16 %v178
      %v234 = vunpack.c.h.b16 %v178
      %v235 = vunpack.c.l.b16 %v179
      %v236 = vunpack.c.h.b16 %v179
      %v237 = vunpack.c.l.b16 %v180
      %v238 = vunpack.c.h.b16 %v180
      %v239 = vunpack.c.l.b16 %v181
      %v240 = vunpack.c.h.b16 %v181
      %v241 = vunpack.c.l.b16 %v182
      %v242 = vunpack.c.h.b16 %v182
      %v243 = vunpack.c.l.b16 %v183
      %v244 = vunpack.c.h.b16 %v183
      %v245 = vunpack.c.l.b16 %v184
      %v246 = vunpack.c.h.b16 %v184
      %v247 = vunpack.c.l.b16 %v185
      %v248 = vunpack.c.h.b16 %v185
      %v249 = vunpack.c.l.b16 %v186
      %v250 = vunpack.c.h.b16 %v186
      %v251 = vunpack.c.l.b16 %v187
      %v252 = vunpack.c.h.b16 %v187
      %v253 = vunpack.c.l.b16 %v188
      %v254 = vunpack.c.h.b16 %v188
      %v255 = vunpack.c.l.b16 %v189
      %v256 = vunpack.c.h.b16 %v189
      %v257 = vunpack.c.l.b16 %v190
      %v258 = vunpack.c.h.b16 %v190
      %v259 = vunpack.c.l.b16 %v191
      %v260 = vunpack.c.h.b16 %v191
      %v261 = vpack.c.b16 %v225, %v223
      %v262 = vpack.c.b16 %v226, %v224
      %v263 = vpack.c.b16 %v229, %v227
      %v264 = vpack.c.b16 %v230, %v228
      %v265 = vpack.c.b16 %v233, %v231
      %v266 = vpack.c.b16 %v234, %v232
      %v267 = vpack.c.b16 %v237, %v235
      %v268 = vpack.c.b16 %v238, %v236
      %v269 = vpack.c.b16 %v241, %v239
      %v270 = vpack.c.b16 %v242, %v240
      %v271 = vpack.c.b16 %v245, %v243
      %v272 = vpack.c.b16 %v246, %v244
      %v273 = vpack.c.b16 %v249, %v247
      %v274 = vpack.c.b16 %v250, %v248
      %v275 = vpack.c.b16 %v253, %v251
      %v276 = vpack.c.b16 %v254, %v252
      %v277 = vpack.c.b16 %v257, %v255
      %v278 = vpack.c.b16 %v258, %v256
      %v279 = vpack.c.b16 %v259, %v259
      %v280 = vpack.c.b16 %v260, %v260
      %vm299 = vcmask 154624
      %v301 = vsel %vm299, %v202, 0
      %vm303 = vcmask 1040384
      %vm304 = vcmask 1041408
      %v305 = vsel %vm303, 4294967295, 65535
      %v306 = vsel %vm304, %v305, 0
      %v308 = vand.u32 %v279, %v306
      %v311 = vand.u32 %v280, %v306
      %313 = vmatpush.bf16.msra.mxu0 %v275
      %314 = vmatpush.bf16.msra.mxu0 %v273
      %315 = vmatpush.bf16.msra.mxu0 %v271
      %316 = vmatpush.bf16.msra.mxu0 %v269
      %317 = vmatpush.bf16.msra.mxu0 %v267
      %318 = vmatpush.bf16.msra.mxu0 %v265
      %319 = vmatpush.bf16.msra.mxu0 %v263
      %320 = vmatpush.bf16.msra.mxu0 %v261
      %321 = vmatmul.bf16.gmra.mxu0 %v201
      %v322 = vpop.f32.mrf.mxu0
      %v323 = vadd.f32 %v196, %v322
      %v324 = vpop.f32.mrf.mxu0
      %325 = vdwg.mxu0
      %326 = vmatpush.bf16.msra.mxu0 0
      %327 = vmatpush.bf16.msra.mxu0 0
      %328 = vmatpush.bf16.msra.mxu0 0
      %329 = vmatpush.bf16.msra.mxu0 0
      %330 = vmatpush.bf16.msra.mxu0 0
      %331 = vmatpush.bf16.msra.mxu0 0
      %332 = vmatpush.bf16.msra.mxu0 %v308
      %333 = vmatpush.bf16.msra.mxu0 %v277
      %334 = vmatmul.bf16.gmra.mxu0 %v301
      %v335 = vpop.f32.mrf.mxu0
      %v336 = vadd.f32 %v323, %v335
      %v337 = vpop.f32.mrf.mxu0
      %338 = vdwg.mxu0
      %339 = vmatpush.bf16.msra.mxu0 %v276
      %340 = vmatpush.bf16.msra.mxu0 %v274
      %341 = vmatpush.bf16.msra.mxu0 %v272
      %342 = vmatpush.bf16.msra.mxu0 %v270
      %343 = vmatpush.bf16.msra.mxu0 %v268
      %344 = vmatpush.bf16.msra.mxu0 %v266
      %345 = vmatpush.bf16.msra.mxu0 %v264
      %346 = vmatpush.bf16.msra.mxu0 %v262
      %347 = vmatmul.bf16.gmra.mxu0 %v201
      %v348 = vpop.f32.mrf.mxu0
      %v349 = vadd.f32 %v196, %v348
      %v350 = vpop.f32.mrf.mxu0
      %351 = vdwg.mxu0
      %352 = vmatpush.bf16.msra.mxu0 0
      %353 = vmatpush.bf16.msra.mxu0 0
      %354 = vmatpush.bf16.msra.mxu0 0
      %355 = vmatpush.bf16.msra.mxu0 0
      %356 = vmatpush.bf16.msra.mxu0 0
      %357 = vmatpush.bf16.msra.mxu0 0
      %358 = vmatpush.bf16.msra.mxu0 %v311
      %359 = vmatpush.bf16.msra.mxu0 %v278
      %360 = vmatmul.bf16.gmra.mxu0 %v301
      %v361 = vpop.f32.mrf.mxu0
      %v362 = vadd.f32 %v349, %v361
      %v363 = vpop.f32.mrf.mxu0
      %364 = vdwg.mxu0
      %v365 = vadd.f32 %v336, %v362
      %366 = vadd.xlane.f32.xlu0 %v365
      %v367 = vpop.xlane.xlu0 %366
      %v368 = vrcp.pop 256.0
      %v369 = vmul.f32 256.0, %v368
      %v370 = vsub.f32 1.0, %v369
      %v371 = vmul.f32 %v368, %v370
      %v372 = vadd.f32 %v368, %v371
      %vm373 = vweird.f32 %v368
      %v374 = vsel %vm373, %v368, %v372
      %v375 = vmul.f32 %v367, %v374
      %v376 = vsub.f32 %v336, %v375
      %v377 = vsub.f32 %v362, %v375
      %v378 = vmul.f32 %v376, %v376
      %v379 = vmul.f32 %v377, %v377
      %v380 = vadd.f32 %v378, %v379
      %381 = vadd.xlane.f32.xlu0 %v380
      %v382 = vpop.xlane.xlu0 %381
      %v383 = vmul.f32 %v382, %v374
      %v384 = vadd.f32 %v383, 1e-05
      %v385 = vrsqrt.pop %v384
      %v386 = vmul.f32 %v385, %v384
      %v387 = vmul.f32 %v386, %v385
      %v388 = vmul.f32 0.5, %v387
      %v389 = vsub.f32 1.5, %v388
      %v390 = vmul.f32 %v385, %v389
      %vm391 = vweird.f32 %v384
      %vm392 = vweird.f32 %v385
      %vm393 = vmor %vm391, %vm392
      %v394 = vsel %vm393, %v385, %v390
      %v395 = vmul.f32 %v376, %v394
      %v396 = vmul.f32 %v377, %v394
      %v397 = vmax.f32 %v395, 0.0
      %v398 = vmax.f32 %v396, 0.0
      %399 = vst [vmem:[%s170] sm:$0xff] %v397
      %400 = vst [vmem:[%s170 + $0x8] sm:$0xff] %v398
      %p401 = scmp.lt.s32.totalorder %s14, 1
      %s402 = scalar_select %p401, %s14, 1
      %s403 = smul.addr %s402, 2
      %s404 = smul.addr %s403, 8
      %s405 = scalar_lea.vmem %s3, %s404
      // Predicated region
      $region33: #{cyclegan_generator.12} parent=31 // pred_check
        %p406 = pneg %p100
      $region34: #{cyclegan_generator.12} parent=31 // pred_check_branch
        %408 = sbr.rel (%p406) target = $region36
      $region35: #{cyclegan_generator.12} parent=31 // pred_region
        _
      $region36: #{cyclegan_generator.12} parent=31 // pred_fallthru
        _
    $region32: #{cyclegan_generator.12} parent=5 // pred_fallthru
      _
    %p409 = scmp.le.s32.totalorder 2, %s9
    // Predicated region
    $region37: #{cyclegan_generator.12} parent=5 // pred_check
      %p410 = pneg %p409
    $region38: #{cyclegan_generator.12} parent=5 // pred_check_branch
      %412 = sbr.rel (%p410) target = $region40
    $region39: #{cyclegan_generator.12} parent=5 // pred_region
      %s413 = ssub.s32 %s9, 2
      // Predicated region
      $region41: #{cyclegan_generator.12} parent=39 // pred_check
        %p414 = pneg %p106
      $region42: #{cyclegan_generator.12} parent=39 // pred_check_branch
        %416 = sbr.rel (%p414) target = $region44
      $region43: #{cyclegan_generator.12} parent=39 // pred_region
        %p417 = scmp.lt.s32.totalorder %s15, 1
        %s418 = scalar_select %p417, %s15, 1
        %s419 = smul.addr %s418, 2
        %s420 = smul.addr %s419, 8
        %s421 = scalar_lea.vmem %s3, %s420
      $region44: #{cyclegan_generator.12} parent=39 // pred_fallthru
        _
    $region40: #{cyclegan_generator.12} parent=5 // pred_fallthru
      _
  $region6: #{cyclegan_generator.12} parent=0 // loop_footer
    %s13 = sadd.s32 1, %s9
  $region7: #{cyclegan_generator.12} parent=0 // loop_footer_branch
    %8 = sbr.rel target = $region3
  $region8: #{cyclegan_generator.12} parent=0 // loop_exit
    _

// kernel: cyclegan_generator.13
$region0: #{cyclegan_generator.13}
  #allocation0 [shape = 'u32[]', space=smem, size = 0x4, offset = 0x4, fixed_abs, tag = 'smem constant byte address 0x4 - core index']
  #allocation1 [shape = 'u32[72,128]{1,0:T(1,128)}', space=vmem, size = 0x9000, scoped, tag = 'internal scratch']
  %s0 = inlined_call_operand.vmem [shape: bf16[16,72], index: 0, kind: input, shape index: {}]
  %s1 = inlined_call_operand.vmem [shape: f32[16,1], index: 1, kind: input, shape index: {}]
  %s2 = inlined_call_operand.vmem [shape: bf16[2,72,64], index: 2, kind: input, shape index: {}]
  %s3 = inlined_call_operand.vmem [shape: f32[2,16,64], index: 3, kind: output, shape index: {}]
  %s4 = sld [smem:[#allocation0]]
  $region45: #{cyclegan_generator.13} parent=0
    _
  %s6 = ssub.s32 1, %s4
  %s7 = scalar_select 0, %s6, %s4
  loop: start=0, step=1, limit=4
  $region2: #{cyclegan_generator.13} parent=0 // loop_pre_header
    _
  $region3: #{cyclegan_generator.13} parent=0 // loop_header
    %s9 = sphi 0, %s13
    %p10 = scmp.ge.s32.totalorder %s9, 4
    %s17 = sphi 0, %s17
    %s19 = sphi 0, %s17
    %s20 = sphi 0, %s19
    %s34 = sphi 0, %s20
    %s38 = sphi 0, %s38
    %s40 = sphi 0, %s38
    %s41 = sphi 0, %s40
    %s55 = sphi 0, %s41
    %s61 = sphi 0, %s63
    %s64 = sphi 0, %s61
    %s65 = sphi 0, %s64
    %s81 = sphi 0, %s65
    %s87 = sphi 0, %s89
    %s90 = sphi 0, %s87
    %s91 = sphi 0, %s90
    %s107 = sphi 0, %s91
  $region4: #{cyclegan_generator.13} parent=0 // loop_header_branch
    %12 = sbr.rel (%p10) target = $region8
  $region5: #{cyclegan_generator.13} parent=0 // loop_body
    %s14 = ssub.s32 %s9, 1
    %s15 = ssub.s32 %s9, 2
    %s16 = sadd.s32 %s9, 1
    %s18 = sadd.s32 %s17, 1
    %p21 = scmp.eq.s32.totalorder %s9, 1
    %p22 = scmp.ne.s32.totalorder %s17, %s19
    %p23 = scmp.eq.s32.totalorder %s9, 0
    %p24 = por %p22, %p23
    %p25 = scmp.ne.s32.totalorder %s17, %s19
    %p26 = scmp.eq.s32.totalorder %s14, 1
    %p27 = por %p25, %p26
    %p28 = scmp.ne.s32.totalorder %s19, %s20
    %p29 = scmp.eq.s32.totalorder %s14, 0
    %p30 = por %p28, %p29
    %p31 = scmp.ne.s32.totalorder %s19, %s20
    %p32 = scmp.eq.s32.totalorder %s15, 1
    %p33 = por %p31, %p32
    %p35 = scmp.ne.s32.totalorder %s20, %s34
    %p36 = scmp.eq.s32.totalorder %s15, 0
    %p37 = por %p35, %p36
    %s39 = sadd.s32 %s38, 1
    %p42 = scmp.eq.s32.totalorder %s9, 1
    %p43 = scmp.ne.s32.totalorder %s38, %s40
    %p44 = scmp.eq.s32.totalorder %s9, 0
    %p45 = por %p43, %p44
    %p46 = scmp.ne.s32.totalorder %s38, %s40
    %p47 = scmp.eq.s32.totalorder %s14, 1
    %p48 = por %p46, %p47
    %p49 = scmp.ne.s32.totalorder %s40, %s41
    %p50 = scmp.eq.s32.totalorder %s14, 0
    %p51 = por %p49, %p50
    %p52 = scmp.ne.s32.totalorder %s40, %s41
    %p53 = scmp.eq.s32.totalorder %s15, 1
    %p54 = por %p52, %p53
    %p56 = scmp.ne.s32.totalorder %s41, %s55
    %p57 = scmp.eq.s32.totalorder %s15, 0
    %p58 = por %p56, %p57
    %s59 = ssub.s32 %s9, %s16
    %p60 = scmp.eq.s32.totalorder %s59, 0
    %s62 = sadd.s32 %s61, 1
    %s63 = scalar_select %p60, %s61, %s62
    %p66 = pneg %p60
    %p67 = scmp.eq.s32.totalorder %s9, 1
    %p68 = por %p66, %p67
    %p69 = scmp.ne.s32.totalorder %s61, %s64
    %p70 = scmp.eq.s32.totalorder %s9, 0
    %p71 = por %p69, %p70
    %p72 = scmp.ne.s32.totalorder %s61, %s64
    %p73 = scmp.eq.s32.totalorder %s14, 1
    %p74 = por %p72, %p73
    %p75 = scmp.ne.s32.totalorder %s64, %s65
    %p76 = scmp.eq.s32.totalorder %s14, 0
    %p77 = por %p75, %p76
    %p78 = scmp.ne.s32.totalorder %s64, %s65
    %p79 = scmp.eq.s32.totalorder %s15, 1
    %p80 = por %p78, %p79
    %p82 = scmp.ne.s32.totalorder %s65, %s81
    %p83 = scmp.eq.s32.totalorder %s15, 0
    %p84 = por %p82, %p83
    %s85 = ssub.s32 %s9, %s16
    %p86 = scmp.eq.s32.totalorder %s85, 0
    %s88 = sadd.s32 %s87, 1
    %s89 = scalar_select %p86, %s87, %s88
    %p92 = pneg %p86
    %p93 = scmp.eq.s32.totalorder %s9, 1
    %p94 = por %p92, %p93
    %p95 = scmp.ne.s32.totalorder %s87, %s90
    %p96 = scmp.eq.s32.totalorder %s9, 0
    %p97 = por %p95, %p96
    %p98 = scmp.ne.s32.totalorder %s87, %s90
    %p99 = scmp.eq.s32.totalorder %s14, 1
    %p100 = por %p98, %p99
    %p101 = scmp.ne.s32.totalorder %s90, %s91
    %p102 = scmp.eq.s32.totalorder %s14, 0
    %p103 = por %p101, %p102
    %p104 = scmp.ne.s32.totalorder %s90, %s91
    %p105 = scmp.eq.s32.totalorder %s15, 1
    %p106 = por %p104, %p105
    %p108 = scmp.ne.s32.totalorder %s91, %s107
    %p109 = scmp.eq.s32.totalorder %s15, 0
    %p110 = por %p108, %p109
    %p111 = scmp.le.s32.totalorder 1, %s9
    %p112 = scmp.lt.s32.totalorder %s9, 3
    %p113 = pnand %p111, %p112
    %p114 = pneg %p113
    // Predicated region
    $region9: #{cyclegan_generator.13} parent=5 // pred_check
      _
    $region10: #{cyclegan_generator.13} parent=5 // pred_check_branch
      %116 = sbr.rel (%p113) target = $region12
    $region11: #{cyclegan_generator.13} parent=5 // pred_region
      %s117 = ssub.s32 %s9, 1
      // Predicated region
      $region13: #{cyclegan_generator.13} parent=11 // pred_check
        %p118 = pneg %p30
      $region14: #{cyclegan_generator.13} parent=11 // pred_check_branch
        %120 = sbr.rel (%p118) target = $region16
      $region15: #{cyclegan_generator.13} parent=11 // pred_region
        _
      $region16: #{cyclegan_generator.13} parent=11 // pred_fallthru
        _
      // Predicated region
      $region17: #{cyclegan_generator.13} parent=11 // pred_check
        %p121 = pneg %p51
      $region18: #{cyclegan_generator.13} parent=11 // pred_check_branch
        %123 = sbr.rel (%p121) target = $region20
      $region19: #{cyclegan_generator.13} parent=11 // pred_region
        _
      $region20: #{cyclegan_generator.13} parent=11 // pred_fallthru
        _
    $region12: #{cyclegan_generator.13} parent=5 // pred_fallthru
      _
    %p124 = scmp.lt.s32.totalorder %s9, 2
    // Predicated region
    $region21: #{cyclegan_generator.13} parent=5 // pred_check
      %p125 = pneg %p124
    $region22: #{cyclegan_generator.13} parent=5 // pred_check_branch
      %127 = sbr.rel (%p125) target = $region24
    $region23: #{cyclegan_generator.13} parent=5 // pred_region
      // Predicated region
      $region25: #{cyclegan_generator.13} parent=23 // pred_check
        %p128 = pneg %p71
      $region26: #{cyclegan_generator.13} parent=23 // pred_check_branch
        %130 = sbr.rel (%p128) target = $region28
      $region27: #{cyclegan_generator.13} parent=23 // pred_region
        %p131 = scmp.lt.s32.totalorder %s9, 1
        %s132 = scalar_select %p131, %s9, 1
        %s133 = smul.addr %s132, 9
        %s134 = smul.addr %s133, 4
        %s135 = scalar_lea.vmem %s2, %s134
      $region28: #{cyclegan_generator.13} parent=23 // pred_fallthru
        _
    $region24: #{cyclegan_generator.13} parent=5 // pred_fallthru
      _
    %p136 = scmp.le.s32.totalorder 1, %s9
    %p137 = scmp.lt.s32.totalorder %s9, 3
    %p138 = pnand %p136, %p137
    %p139 = pneg %p138
    // Predicated region
    $region29: #{cyclegan_generator.13} parent=5 // pred_check
      _
    $region30: #{cyclegan_generator.13} parent=5 // pred_check_branch
      %141 = sbr.rel (%p138) target = $region32
    $region31: #{cyclegan_generator.13} parent=5 // pred_region
      %s142 = ssub.s32 %s9, 1
      %p143 = pneg %p30
      %p144 = pneg %p27
      %p145 = pneg %p51
      %p146 = pneg %p48
      %p147 = scmp.lt.s32.totalorder %s14, 1
      %s148 = scalar_select %p147, %s14, 1
      %s149 = smul.addr %s148, 9
      %s150 = smul.addr %s149, 4
      %s151 = scalar_lea.vmem %s2, %s150
      %p152 = pneg %p77
      %p153 = pneg %p74
      %p154 = pneg %p103
      %p155 = pneg %p100
      %p156 = scmp.lt.s32.totalorder %s14, 1
      %s157 = scalar_select %p156, %s14, 1
      %s158 = smul.addr %s157, 2
      %s159 = smul.addr %s158, 8
      %s160 = scalar_lea.vmem %s3, %s159
      %p161 = scmp.lt.s32.totalorder %s14, 1
      %s162 = scalar_select %p161, %s14, 1
      %s163 = smul.addr %s162, 9
      %s164 = smul.addr %s163, 4
      %s165 = scalar_lea.vmem %s2, %s164
      %p166 = scmp.lt.s32.totalorder %s14, 1
      %s167 = scalar_select %p166, %s14, 1
      %s168 = smul.addr %s167, 2
      %s169 = smul.addr %s168, 8
      %s170 = scalar_lea.vmem %s3, %s169
      %v172 = vld [vmem:[%s0] sm:$0xf]
      %v173 = vld [vmem:[%s0 + $0x4] sm:$0xf]
      %v174 = vld [vmem:[%s165] sm:$0xf]
      %v175 = vld [vmem:[%s165 + $0x4] sm:$0xf]
      %v176 = vld [vmem:[%s165 + $0x8] sm:$0xf]
      %v177 = vld [vmem:[%s165 + $0xc] sm:$0xf]
      %v178 = vld [vmem:[%s165 + $0x10] sm:$0xf]
      %v179 = vld [vmem:[%s165 + $0x14] sm:$0xf]
      %v180 = vld [vmem:[%s165 + $0x18] sm:$0xf]
      %v181 = vld [vmem:[%s165 + $0x1c] sm:$0xf]
      %v182 = vld [vmem:[%s165 + $0x20] sm:$0xf]
      %v183 = vld [vmem:[%s1] sm:$0xff]
      %v184 = vld [vmem:[%s1 + $0x8] sm:$0xff]
      %186 = vset.pattern.permute.xlu0 0
      %187 = vperm.xlu0 %186, %v183
      %v188 = vpop.permute.xlu0 %187
      %191 = vset.pattern.permute.xlu0 0
      %192 = vperm.xlu0 %191, %v184
      %v193 = vpop.permute.xlu0 %192
      %v197 = vunpack.c.l.b16 %v172
      %v198 = vunpack.c.l.b16 %v173
      %v199 = vpack.c.b16 %v198, %v197
      %v209 = vunpack.c.l.b16 %v174
      %v210 = vunpack.c.l.b16 %v175
      %v211 = vunpack.c.l.b16 %v176
      %v212 = vunpack.c.l.b16 %v177
      %v213 = vunpack.c.l.b16 %v178
      %v214 = vunpack.c.l.b16 %v179
      %v215 = vunpack.c.l.b16 %v180
      %v216 = vunpack.c.l.b16 %v181
      %v217 = vunpack.c.l.b16 %v182
      %v218 = vpack.c.b16 %v210, %v209
      %v219 = vpack.c.b16 %v212, %v211
      %v220 = vpack.c.b16 %v214, %v213
      %v221 = vpack.c.b16 %v216, %v215
      %v222 = vpack.c.b16 %v217, %v217
      %vm227 = vcmask 588800
      %v229 = vsel %vm227, %v199, 0
      %vm231 = vcmask 1043456
      %v233 = vsel %vm231, %v222, 0
      %235 = vmatpush.bf16.msra.mxu0 0
      %236 = vmatpush.bf16.msra.mxu0 0
      %237 = vmatpush.bf16.msra.mxu0 0
      %238 = vmatpush.bf16.msra.mxu0 %v233
      %239 = vmatpush.bf16.msra.mxu0 %v221
      %240 = vmatpush.bf16.msra.mxu0 %v220
      %241 = vmatpush.bf16.msra.mxu0 %v219
      %242 = vmatpush.bf16.msra.mxu0 %v218
      %243 = vmatmul.bf16.gmra.mxu0 %v229
      %v244 = vpop.f32.mrf.mxu0
      %v245 = vadd.f32 %v188, %v244
      %v246 = vpop.f32.mrf.mxu0
      %v247 = vadd.f32 %v193, %v246
      %248 = vdwg.mxu0
      %vm249 = vcmask 523264
      %v250 = vsel %vm249, %v245, 0.0
      %251 = vadd.xlane.f32.xlu0 %v250
      %v252 = vpop.xlane.xlu0 %251
      %v253 = vsel %vm249, %v247, 0.0
      %254 = vadd.xlane.f32.xlu0 %v253
      %v255 = vpop.xlane.xlu0 %254
      %v256 = vrcp.pop 64.0
      %v257 = vmul.f32 64.0, %v256
      %v258 = vsub.f32 1.0, %v257
      %v259 = vmul.f32 %v256, %v258
      %v260 = vadd.f32 %v256, %v259
      %vm261 = vweird.f32 %v256
      %v262 = vsel %vm261, %v256, %v260
      %v263 = vmul.f32 %v252, %v262
      %v264 = vmul.f32 %v255, %v262
      %v265 = vsub.f32 %v245, %v263
      %v266 = vsub.f32 %v247, %v264
      %v267 = vmul.f32 %v265, %v265
      %v268 = vmul.f32 %v266, %v266
      %v269 = vsel %vm249, %v267, 0.0
      %270 = vadd.xlane.f32.xlu0 %v269
      %v271 = vpop.xlane.xlu0 %270
      %v272 = vsel %vm249, %v268, 0.0
      %273 = vadd.xlane.f32.xlu0 %v272
      %v274 = vpop.xlane.xlu0 %273
      %v275 = vmul.f32 %v271, %v262
      %v276 = vmul.f32 %v274, %v262
      %v277 = vadd.f32 %v275, 1e-05
      %v278 = vadd.f32 %v276, 1e-05
      %v279 = vrsqrt.pop %v277
      %v280 = vmul.f32 %v279, %v277
      %v281 = vmul.f32 %v280, %v279
      %v282 = vmul.f32 0.5, %v281
      %v283 = vsub.f32 1.5, %v282
      %v284 = vmul.f32 %v279, %v283
      %vm285 = vweird.f32 %v277
      %vm286 = vweird.f32 %v279
      %vm287 = vmor %vm285, %vm286
      %v288 = vsel %vm287, %v279, %v284
      %v289 = vrsqrt.pop %v278
      %v290 = vmul.f32 %v289, %v278
      %v291 = vmul.f32 %v290, %v289
      %v292 = vmul.f32 0.5, %v291
      %v293 = vsub.f32 1.5, %v292
      %v294 = vmul.f32 %v289, %v293
      %vm295 = vweird.f32 %v278
      %vm296 = vweird.f32 %v289
      %vm297 = vmor %vm295, %vm296
      %v298 = vsel %vm297, %v289, %v294
      %v299 = vmul.f32 %v265, %v288
      %v300 = vmul.f32 %v266, %v298
      %v301 = vmax.f32 %v299, 0.0
      %v302 = vmax.f32 %v300, 0.0
      %303 = vst.msk [vmem:[%s170] sm:$0xff] %vm249, %v301
      %304 = vst.msk [vmem:[%s170 + $0x8] sm:$0xff] %vm249, %v302
      %p305 = scmp.lt.s32.totalorder %s14, 1
      %s306 = scalar_select %p305, %s14, 1
      %s307 = smul.addr %s306, 2
      %s308 = smul.addr %s307, 8
      %s309 = scalar_lea.vmem %s3, %s308
      // Predicated region
      $region33: #{cyclegan_generator.13} parent=31 // pred_check
        %p310 = pneg %p100
      $region34: #{cyclegan_generator.13} parent=31 // pred_check_branch
        %312 = sbr.rel (%p310) target = $region36
      $region35: #{cyclegan_generator.13} parent=31 // pred_region
        _
      $region36: #{cyclegan_generator.13} parent=31 // pred_fallthru
        _
    $region32: #{cyclegan_generator.13} parent=5 // pred_fallthru
      _
    %p313 = scmp.le.s32.totalorder 2, %s9
    // Predicated region
    $region37: #{cyclegan_generator.13} parent=5 // pred_check
      %p314 = pneg %p313
    $region38: #{cyclegan_generator.13} parent=5 // pred_check_branch
      %316 = sbr.rel (%p314) target = $region40
    $region39: #{cyclegan_generator.13} parent=5 // pred_region
      %s317 = ssub.s32 %s9, 2
      // Predicated region
      $region41: #{cyclegan_generator.13} parent=39 // pred_check
        %p318 = pneg %p106
      $region42: #{cyclegan_generator.13} parent=39 // pred_check_branch
        %320 = sbr.rel (%p318) target = $region44
      $region43: #{cyclegan_generator.13} parent=39 // pred_region
        %p321 = scmp.lt.s32.totalorder %s15, 1
        %s322 = scalar_select %p321, %s15, 1
        %s323 = smul.addr %s322, 2
        %s324 = smul.addr %s323, 8
        %s325 = scalar_lea.vmem %s3, %s324
      $region44: #{cyclegan_generator.13} parent=39 // pred_fallthru
        _
    $region40: #{cyclegan_generator.13} parent=5 // pred_fallthru
      _
  $region6: #{cyclegan_generator.13} parent=0 // loop_footer
    %s13 = sadd.s32 1, %s9
  $region7: #{cyclegan_generator.13} parent=0 // loop_footer_branch
    %8 = sbr.rel target = $region3
  $region8: #{cyclegan_generator.13} parent=0 // loop_exit
    _

// kernel: cyclegan_generator.14
$region0: #{cyclegan_generator.14}
  #allocation0 [shape = 'u32[]', space=smem, size = 0x4, offset = 0x4, fixed_abs, tag = 'smem constant byte address 0x4 - core index']
  #allocation1 [shape = 'u32[72,128]{1,0:T(1,128)}', space=vmem, size = 0x9000, scoped, tag = 'internal scratch']
  %s0 = inlined_call_operand.vmem [shape: bf16[32,144], index: 0, kind: input, shape index: {}]
  %s1 = inlined_call_operand.vmem [shape: f32[32,1], index: 1, kind: input, shape index: {}]
  %s2 = inlined_call_operand.vmem [shape: bf16[2,144,16], index: 2, kind: input, shape index: {}]
  %s3 = inlined_call_operand.vmem [shape: f32[2,32,16], index: 3, kind: output, shape index: {}]
  %s4 = sld [smem:[#allocation0]]
  $region45: #{cyclegan_generator.14} parent=0
    _
  %s6 = ssub.s32 1, %s4
  %s7 = scalar_select 0, %s6, %s4
  loop: start=0, step=1, limit=4
  $region2: #{cyclegan_generator.14} parent=0 // loop_pre_header
    _
  $region3: #{cyclegan_generator.14} parent=0 // loop_header
    %s9 = sphi 0, %s13
    %p10 = scmp.ge.s32.totalorder %s9, 4
    %s17 = sphi 0, %s17
    %s19 = sphi 0, %s17
    %s20 = sphi 0, %s19
    %s34 = sphi 0, %s20
    %s38 = sphi 0, %s38
    %s40 = sphi 0, %s38
    %s41 = sphi 0, %s40
    %s55 = sphi 0, %s41
    %s61 = sphi 0, %s63
    %s64 = sphi 0, %s61
    %s65 = sphi 0, %s64
    %s81 = sphi 0, %s65
    %s87 = sphi 0, %s89
    %s90 = sphi 0, %s87
    %s91 = sphi 0, %s90
    %s107 = sphi 0, %s91
  $region4: #{cyclegan_generator.14} parent=0 // loop_header_branch
    %12 = sbr.rel (%p10) target = $region8
  $region5: #{cyclegan_generator.14} parent=0 // loop_body
    %s14 = ssub.s32 %s9, 1
    %s15 = ssub.s32 %s9, 2
    %s16 = sadd.s32 %s9, 1
    %s18 = sadd.s32 %s17, 1
    %p21 = scmp.eq.s32.totalorder %s9, 1
    %p22 = scmp.ne.s32.totalorder %s17, %s19
    %p23 = scmp.eq.s32.totalorder %s9, 0
    %p24 = por %p22, %p23
    %p25 = scmp.ne.s32.totalorder %s17, %s19
    %p26 = scmp.eq.s32.totalorder %s14, 1
    %p27 = por %p25, %p26
    %p28 = scmp.ne.s32.totalorder %s19, %s20
    %p29 = scmp.eq.s32.totalorder %s14, 0
    %p30 = por %p28, %p29
    %p31 = scmp.ne.s32.totalorder %s19, %s20
    %p32 = scmp.eq.s32.totalorder %s15, 1
    %p33 = por %p31, %p32
    %p35 = scmp.ne.s32.totalorder %s20, %s34
    %p36 = scmp.eq.s32.totalorder %s15, 0
    %p37 = por %p35, %p36
    %s39 = sadd.s32 %s38, 1
    %p42 = scmp.eq.s32.totalorder %s9, 1
    %p43 = scmp.ne.s32.totalorder %s38, %s40
    %p44 = scmp.eq.s32.totalorder %s9, 0
    %p45 = por %p43, %p44
    %p46 = scmp.ne.s32.totalorder %s38, %s40
    %p47 = scmp.eq.s32.totalorder %s14, 1
    %p48 = por %p46, %p47
    %p49 = scmp.ne.s32.totalorder %s40, %s41
    %p50 = scmp.eq.s32.totalorder %s14, 0
    %p51 = por %p49, %p50
    %p52 = scmp.ne.s32.totalorder %s40, %s41
    %p53 = scmp.eq.s32.totalorder %s15, 1
    %p54 = por %p52, %p53
    %p56 = scmp.ne.s32.totalorder %s41, %s55
    %p57 = scmp.eq.s32.totalorder %s15, 0
    %p58 = por %p56, %p57
    %s59 = ssub.s32 %s9, %s16
    %p60 = scmp.eq.s32.totalorder %s59, 0
    %s62 = sadd.s32 %s61, 1
    %s63 = scalar_select %p60, %s61, %s62
    %p66 = pneg %p60
    %p67 = scmp.eq.s32.totalorder %s9, 1
    %p68 = por %p66, %p67
    %p69 = scmp.ne.s32.totalorder %s61, %s64
    %p70 = scmp.eq.s32.totalorder %s9, 0
    %p71 = por %p69, %p70
    %p72 = scmp.ne.s32.totalorder %s61, %s64
    %p73 = scmp.eq.s32.totalorder %s14, 1
    %p74 = por %p72, %p73
    %p75 = scmp.ne.s32.totalorder %s64, %s65
    %p76 = scmp.eq.s32.totalorder %s14, 0
    %p77 = por %p75, %p76
    %p78 = scmp.ne.s32.totalorder %s64, %s65
    %p79 = scmp.eq.s32.totalorder %s15, 1
    %p80 = por %p78, %p79
    %p82 = scmp.ne.s32.totalorder %s65, %s81
    %p83 = scmp.eq.s32.totalorder %s15, 0
    %p84 = por %p82, %p83
    %s85 = ssub.s32 %s9, %s16
    %p86 = scmp.eq.s32.totalorder %s85, 0
    %s88 = sadd.s32 %s87, 1
    %s89 = scalar_select %p86, %s87, %s88
    %p92 = pneg %p86
    %p93 = scmp.eq.s32.totalorder %s9, 1
    %p94 = por %p92, %p93
    %p95 = scmp.ne.s32.totalorder %s87, %s90
    %p96 = scmp.eq.s32.totalorder %s9, 0
    %p97 = por %p95, %p96
    %p98 = scmp.ne.s32.totalorder %s87, %s90
    %p99 = scmp.eq.s32.totalorder %s14, 1
    %p100 = por %p98, %p99
    %p101 = scmp.ne.s32.totalorder %s90, %s91
    %p102 = scmp.eq.s32.totalorder %s14, 0
    %p103 = por %p101, %p102
    %p104 = scmp.ne.s32.totalorder %s90, %s91
    %p105 = scmp.eq.s32.totalorder %s15, 1
    %p106 = por %p104, %p105
    %p108 = scmp.ne.s32.totalorder %s91, %s107
    %p109 = scmp.eq.s32.totalorder %s15, 0
    %p110 = por %p108, %p109
    %p111 = scmp.le.s32.totalorder 1, %s9
    %p112 = scmp.lt.s32.totalorder %s9, 3
    %p113 = pnand %p111, %p112
    %p114 = pneg %p113
    // Predicated region
    $region9: #{cyclegan_generator.14} parent=5 // pred_check
      _
    $region10: #{cyclegan_generator.14} parent=5 // pred_check_branch
      %116 = sbr.rel (%p113) target = $region12
    $region11: #{cyclegan_generator.14} parent=5 // pred_region
      %s117 = ssub.s32 %s9, 1
      // Predicated region
      $region13: #{cyclegan_generator.14} parent=11 // pred_check
        %p118 = pneg %p30
      $region14: #{cyclegan_generator.14} parent=11 // pred_check_branch
        %120 = sbr.rel (%p118) target = $region16
      $region15: #{cyclegan_generator.14} parent=11 // pred_region
        _
      $region16: #{cyclegan_generator.14} parent=11 // pred_fallthru
        _
      // Predicated region
      $region17: #{cyclegan_generator.14} parent=11 // pred_check
        %p121 = pneg %p51
      $region18: #{cyclegan_generator.14} parent=11 // pred_check_branch
        %123 = sbr.rel (%p121) target = $region20
      $region19: #{cyclegan_generator.14} parent=11 // pred_region
        _
      $region20: #{cyclegan_generator.14} parent=11 // pred_fallthru
        _
    $region12: #{cyclegan_generator.14} parent=5 // pred_fallthru
      _
    %p124 = scmp.lt.s32.totalorder %s9, 2
    // Predicated region
    $region21: #{cyclegan_generator.14} parent=5 // pred_check
      %p125 = pneg %p124
    $region22: #{cyclegan_generator.14} parent=5 // pred_check_branch
      %127 = sbr.rel (%p125) target = $region24
    $region23: #{cyclegan_generator.14} parent=5 // pred_region
      // Predicated region
      $region25: #{cyclegan_generator.14} parent=23 // pred_check
        %p128 = pneg %p71
      $region26: #{cyclegan_generator.14} parent=23 // pred_check_branch
        %130 = sbr.rel (%p128) target = $region28
      $region27: #{cyclegan_generator.14} parent=23 // pred_region
        %p131 = scmp.lt.s32.totalorder %s9, 1
        %s132 = scalar_select %p131, %s9, 1
        %s133 = smul.addr %s132, 18
        %s134 = smul.addr %s133, 4
        %s135 = scalar_lea.vmem %s2, %s134
      $region28: #{cyclegan_generator.14} parent=23 // pred_fallthru
        _
    $region24: #{cyclegan_generator.14} parent=5 // pred_fallthru
      _
    %p136 = scmp.le.s32.totalorder 1, %s9
    %p137 = scmp.lt.s32.totalorder %s9, 3
    %p138 = pnand %p136, %p137
    %p139 = pneg %p138
    // Predicated region
    $region29: #{cyclegan_generator.14} parent=5 // pred_check
      _
    $region30: #{cyclegan_generator.14} parent=5 // pred_check_branch
      %141 = sbr.rel (%p138) target = $region32
    $region31: #{cyclegan_generator.14} parent=5 // pred_region
      %s142 = ssub.s32 %s9, 1
      %p143 = pneg %p30
      %p144 = pneg %p27
      %p145 = pneg %p51
      %p146 = pneg %p48
      %p147 = scmp.lt.s32.totalorder %s14, 1
      %s148 = scalar_select %p147, %s14, 1
      %s149 = smul.addr %s148, 18
      %s150 = smul.addr %s149, 4
      %s151 = scalar_lea.vmem %s2, %s150
      %p152 = pneg %p77
      %p153 = pneg %p74
      %p154 = pneg %p103
      %p155 = pneg %p100
      %p156 = scmp.lt.s32.totalorder %s14, 1
      %s157 = scalar_select %p156, %s14, 1
      %s158 = smul.addr %s157, 4
      %s159 = smul.addr %s158, 8
      %s160 = scalar_lea.vmem %s3, %s159
      %p161 = scmp.lt.s32.totalorder %s14, 1
      %s162 = scalar_select %p161, %s14, 1
      %s163 = smul.addr %s162, 18
      %s164 = smul.addr %s163, 4
      %s165 = scalar_lea.vmem %s2, %s164
      %p166 = scmp.lt.s32.totalorder %s14, 1
      %s167 = scalar_select %p166, %s14, 1
      %s168 = smul.addr %s167, 4
      %s169 = smul.addr %s168, 8
      %s170 = scalar_lea.vmem %s3, %s169
      %v172 = vld [vmem:[%s0] sm:$0xff]
      %v173 = vld [vmem:[%s0 + $0x8] sm:$0xff]
      %v174 = vld [vmem:[%s0 + $0x10] sm:$0xff]
      %v175 = vld [vmem:[%s0 + $0x18] sm:$0xff]
      %v176 = vld [vmem:[%s165] sm:$0xf]
      %v177 = vld [vmem:[%s165 + $0x4] sm:$0xf]
      %v178 = vld [vmem:[%s165 + $0x8] sm:$0xf]
      %v179 = vld [vmem:[%s165 + $0xc] sm:$0xf]
      %v180 = vld [vmem:[%s165 + $0x10] sm:$0xf]
      %v181 = vld [vmem:[%s165 + $0x14] sm:$0xf]
      %v182 = vld [vmem:[%s165 + $0x18] sm:$0xf]
      %v183 = vld [vmem:[%s165 + $0x1c] sm:$0xf]
      %v184 = vld [vmem:[%s165 + $0x20] sm:$0xf]
      %v185 = vld [vmem:[%s165 + $0x24] sm:$0xf]
      %v186 = vld [vmem:[%s165 + $0x28] sm:$0xf]
      %v187 = vld [vmem:[%s165 + $0x2c] sm:$0xf]
      %v188 = vld [vmem:[%s165 + $0x30] sm:$0xf]
      %v189 = vld [vmem:[%s165 + $0x34] sm:$0xf]
      %v190 = vld [vmem:[%s165 + $0x38] sm:$0xf]
      %v191 = vld [vmem:[%s165 + $0x3c] sm:$0xf]
      %v192 = vld [vmem:[%s165 + $0x40] sm:$0xf]
      %v193 = vld [vmem:[%s165 + $0x44] sm:$0xf]
      %v194 = vld [vmem:[%s1] sm:$0xff]
      %v195 = vld [vmem:[%s1 + $0x8] sm:$0xff]
      %v196 = vld [vmem:[%s1 + $0x10] sm:$0xff]
      %v197 = vld [vmem:[%s1 + $0x18] sm:$0xff]
      %199 = vset.pattern.permute.xlu0 0
      %200 = vperm.xlu0 %199, %v194
      %v201 = vpop.permute.xlu0 %200
      %204 = vset.pattern.permute.xlu0 0
      %205 = vperm.xlu0 %204, %v195
      %v206 = vpop.permute.xlu0 %205
      %209 = vset.pattern.permute.xlu0 0
      %210 = vperm.xlu0 %209, %v196
      %v211 = vpop.permute.xlu0 %210
      %214 = vset.pattern.permute.xlu0 0
      %215 = vperm.xlu0 %214, %v197
      %v216 = vpop.permute.xlu0 %215
      %v222 = vunpack.c.l.b16 %v172
      %v223 = vunpack.c.h.b16 %v172
      %v224 = vunpack.c.l.b16 %v173
      %v225 = vunpack.c.h.b16 %v173
      %v226 = vunpack.c.l.b16 %v174
      %v227 = vunpack.c.h.b16 %v174
      %v228 = vunpack.c.l.b16 %v175
      %v229 = vunpack.c.h.b16 %v175
      %v230 = vpack.c.b16 %v224, %v222
      %v231 = vpack.c.b16 %v225, %v223
      %v232 = vpack.c.b16 %v228, %v226
      %v233 = vpack.c.b16 %v229, %v227
      %v254 = vunpack.c.l.b16 %v176
      %v255 = vunpack.c.l.b16 %v177
      %v256 = vunpack.c.l.b16 %v178
      %v257 = vunpack.c.l.b16 %v179
      %v258 = vunpack.c.l.b16 %v180
      %v259 = vunpack.c.l.b16 %v181
      %v260 = vunpack.c.l.b16 %v182
      %v261 = vunpack.c.l.b16 %v183
      %v262 = vunpack.c.l.b16 %v184
      %v263 = vunpack.c.l.b16 %v185
      %v264 = vunpack.c.l.b16 %v186
      %v265 = vunpack.c.l.b16 %v187
      %v266 = vunpack.c.l.b16 %v188
      %v267 = vunpack.c.l.b16 %v189
      %v268 = vunpack.c.l.b16 %v190
      %v269 = vunpack.c.l.b16 %v191
      %v270 = vunpack.c.l.b16 %v192
      %v271 = vunpack.c.l.b16 %v193
      %v272 = vpack.c.b16 %v255, %v254
      %v273 = vpack.c.b16 %v257, %v256
      %v274 = vpack.c.b16 %v259, %v258
      %v275 = vpack.c.b16 %v261, %v260
      %v276 = vpack.c.b16 %v263, %v262
      %v277 = vpack.c.b16 %v265, %v264
      %v278 = vpack.c.b16 %v267, %v266
      %v279 = vpack.c.b16 %v269, %v268
      %v280 = vpack.c.b16 %v271, %v270
      %vm290 = vcmask 130048
      %v292 = vsel %vm290, %v231, 0
      %v295 = vsel %vm290, %v233, 0
      %297 = vmatpush.bf16.msra.mxu0 %v279
      %298 = vmatpush.bf16.msra.mxu0 %v278
      %299 = vmatpush.bf16.msra.mxu0 %v277
      %300 = vmatpush.bf16.msra.mxu0 %v276
      %301 = vmatpush.bf16.msra.mxu0 %v275
      %302 = vmatpush.bf16.msra.mxu0 %v274
      %303 = vmatpush.bf16.msra.mxu0 %v273
      %304 = vmatpush.bf16.msra.mxu0 %v272
      %305 = vmatmul.bf16.gmra.mxu0 %v230
      %v306 = vpop.f32.mrf.mxu0
      %v307 = vadd.f32 %v201, %v306
      %v308 = vpop.f32.mrf.mxu0
      %v309 = vadd.f32 %v206, %v308
      %310 = vmatmul.bf16.gmra.mxu0 %v232
      %v311 = vpop.f32.mrf.mxu0
      %v312 = vadd.f32 %v211, %v311
      %v313 = vpop.f32.mrf.mxu0
      %v314 = vadd.f32 %v216, %v313
      %315 = vdwg.mxu0
      %316 = vmatpush.bf16.msra.mxu0 0
      %317 = vmatpush.bf16.msra.mxu0 0
      %318 = vmatpush.bf16.msra.mxu0 0
      %319 = vmatpush.bf16.msra.mxu0 0
      %320 = vmatpush.bf16.msra.mxu0 0
      %321 = vmatpush.bf16.msra.mxu0 0
      %322 = vmatpush.bf16.msra.mxu0 0
      %323 = vmatpush.bf16.msra.mxu0 %v280
      %324 = vmatmul.bf16.gmra.mxu0 %v292
      %v325 = vpop.f32.mrf.mxu0
      %v326 = vadd.f32 %v307, %v325
      %v327 = vpop.f32.mrf.mxu0
      %v328 = vadd.f32 %v309, %v327
      %329 = vmatmul.bf16.gmra.mxu0 %v295
      %v330 = vpop.f32.mrf.mxu0
      %v331 = vadd.f32 %v312, %v330
      %v332 = vpop.f32.mrf.mxu0
      %v333 = vadd.f32 %v314, %v332
      %334 = vdwg.mxu0
      %v335 = vsel %vm290, %v326, 0.0
      %336 = vadd.xlane.f32.xlu0 %v335
      %v337 = vpop.xlane.xlu0 %336
      %v338 = vsel %vm290, %v328, 0.0
      %339 = vadd.xlane.f32.xlu0 %v338
      %v340 = vpop.xlane.xlu0 %339
      %v341 = vsel %vm290, %v331, 0.0
      %342 = vadd.xlane.f32.xlu0 %v341
      %v343 = vpop.xlane.xlu0 %342
      %v344 = vsel %vm290, %v333, 0.0
      %345 = vadd.xlane.f32.xlu0 %v344
      %v346 = vpop.xlane.xlu0 %345
      %v347 = vrcp.pop 16.0
      %v348 = vmul.f32 16.0, %v347
      %v349 = vsub.f32 1.0, %v348
      %v350 = vmul.f32 %v347, %v349
      %v351 = vadd.f32 %v347, %v350
      %vm352 = vweird.f32 %v347
      %v353 = vsel %vm352, %v347, %v351
      %v354 = vmul.f32 %v337, %v353
      %v355 = vmul.f32 %v340, %v353
      %v356 = vmul.f32 %v343, %v353
      %v357 = vmul.f32 %v346, %v353
      %v358 = vsub.f32 %v326, %v354
      %v359 = vsub.f32 %v328, %v355
      %v360 = vsub.f32 %v331, %v356
      %v361 = vsub.f32 %v333, %v357
      %v362 = vmul.f32 %v358, %v358
      %v363 = vmul.f32 %v359, %v359
      %v364 = vmul.f32 %v360, %v360
      %v365 = vmul.f32 %v361, %v361
      %v366 = vsel %vm290, %v362, 0.0
      %367 = vadd.xlane.f32.xlu0 %v366
      %v368 = vpop.xlane.xlu0 %367
      %v369 = vsel %vm290, %v363, 0.0
      %370 = vadd.xlane.f32.xlu0 %v369
      %v371 = vpop.xlane.xlu0 %370
      %v372 = vsel %vm290, %v364, 0.0
      %373 = vadd.xlane.f32.xlu0 %v372
      %v374 = vpop.xlane.xlu0 %373
      %v375 = vsel %vm290, %v365, 0.0
      %376 = vadd.xlane.f32.xlu0 %v375
      %v377 = vpop.xlane.xlu0 %376
      %v378 = vmul.f32 %v368, %v353
      %v379 = vmul.f32 %v371, %v353
      %v380 = vmul.f32 %v374, %v353
      %v381 = vmul.f32 %v377, %v353
      %v382 = vadd.f32 %v378, 1e-05
      %v383 = vadd.f32 %v379, 1e-05
      %v384 = vadd.f32 %v380, 1e-05
      %v385 = vadd.f32 %v381, 1e-05
      %v386 = vrsqrt.pop %v382
      %v387 = vmul.f32 %v386, %v382
      %v388 = vmul.f32 %v387, %v386
      %v389 = vmul.f32 0.5, %v388
      %v390 = vsub.f32 1.5, %v389
      %v391 = vmul.f32 %v386, %v390
      %vm392 = vweird.f32 %v382
      %vm393 = vweird.f32 %v386
      %vm394 = vmor %vm392, %vm393
      %v395 = vsel %vm394, %v386, %v391
      %v396 = vrsqrt.pop %v383
      %v397 = vmul.f32 %v396, %v383
      %v398 = vmul.f32 %v397, %v396
      %v399 = vmul.f32 0.5, %v398
      %v400 = vsub.f32 1.5, %v399
      %v401 = vmul.f32 %v396, %v400
      %vm402 = vweird.f32 %v383
      %vm403 = vweird.f32 %v396
      %vm404 = vmor %vm402, %vm403
      %v405 = vsel %vm404, %v396, %v401
      %v406 = vrsqrt.pop %v384
      %v407 = vmul.f32 %v406, %v384
      %v408 = vmul.f32 %v407, %v406
      %v409 = vmul.f32 0.5, %v408
      %v410 = vsub.f32 1.5, %v409
      %v411 = vmul.f32 %v406, %v410
      %vm412 = vweird.f32 %v384
      %vm413 = vweird.f32 %v406
      %vm414 = vmor %vm412, %vm413
      %v415 = vsel %vm414, %v406, %v411
      %v416 = vrsqrt.pop %v385
      %v417 = vmul.f32 %v416, %v385
      %v418 = vmul.f32 %v417, %v416
      %v419 = vmul.f32 0.5, %v418
      %v420 = vsub.f32 1.5, %v419
      %v421 = vmul.f32 %v416, %v420
      %vm422 = vweird.f32 %v385
      %vm423 = vweird.f32 %v416
      %vm424 = vmor %vm422, %vm423
      %v425 = vsel %vm424, %v416, %v421
      %v426 = vmul.f32 %v358, %v395
      %v427 = vmul.f32 %v359, %v405
      %v428 = vmul.f32 %v360, %v415
      %v429 = vmul.f32 %v361, %v425
      %v430 = vmax.f32 %v426, 0.0
      %v431 = vmax.f32 %v427, 0.0
      %v432 = vmax.f32 %v428, 0.0
      %v433 = vmax.f32 %v429, 0.0
      %434 = vst.msk [vmem:[%s170] sm:$0xff] %vm290, %v430
      %435 = vst.msk [vmem:[%s170 + $0x8] sm:$0xff] %vm290, %v431
      %436 = vst.msk [vmem:[%s170 + $0x10] sm:$0xff] %vm290, %v432
      %437 = vst.msk [vmem:[%s170 + $0x18] sm:$0xff] %vm290, %v433
      %p438 = scmp.lt.s32.totalorder %s14, 1
      %s439 = scalar_select %p438, %s14, 1
      %s440 = smul.addr %s439, 4
      %s441 = smul.addr %s440, 8
      %s442 = scalar_lea.vmem %s3, %s441
      // Predicated region
      $region33: #{cyclegan_generator.14} parent=31 // pred_check
        %p443 = pneg %p100
      $region34: #{cyclegan_generator.14} parent=31 // pred_check_branch
        %445 = sbr.rel (%p443) target = $region36
      $region35: #{cyclegan_generator.14} parent=31 // pred_region
        _
      $region36: #{cyclegan_generator.14} parent=31 // pred_fallthru
        _
    $region32: #{cyclegan_generator.14} parent=5 // pred_fallthru
      _
    %p446 = scmp.le.s32.totalorder 2, %s9
    // Predicated region
    $region37: #{cyclegan_generator.14} parent=5 // pred_check
      %p447 = pneg %p446
    $region38: #{cyclegan_generator.14} parent=5 // pred_check_branch
      %449 = sbr.rel (%p447) target = $region40
    $region39: #{cyclegan_generator.14} parent=5 // pred_region
      %s450 = ssub.s32 %s9, 2
      // Predicated region
      $region41: #{cyclegan_generator.14} parent=39 // pred_check
        %p451 = pneg %p106
      $region42: #{cyclegan_generator.14} parent=39 // pred_check_branch
        %453 = sbr.rel (%p451) target = $region44
      $region43: #{cyclegan_generator.14} parent=39 // pred_region
        %p454 = scmp.lt.s32.totalorder %s15, 1
        %s455 = scalar_select %p454, %s15, 1
        %s456 = smul.addr %s455, 4
        %s457 = smul.addr %s456, 8
        %s458 = scalar_lea.vmem %s3, %s457
      $region44: #{cyclegan_generator.14} parent=39 // pred_fallthru
        _
    $region40: #{cyclegan_generator.14} parent=5 // pred_fallthru
      _
  $region6: #{cyclegan_generator.14} parent=0 // loop_footer
    %s13 = sadd.s32 1, %s9
  $region7: #{cyclegan_generator.14} parent=0 // loop_footer_branch
    %8 = sbr.rel target = $region3
  $region8: #{cyclegan_generator.14} parent=0 // loop_exit
    _

// kernel: cyclegan_generator.15
$region0: #{cyclegan_generator.15}
  #allocation0 [shape = 'u32[]', space=smem, size = 0x4, offset = 0x4, fixed_abs, tag = 'smem constant byte address 0x4 - core index']
  #allocation1 [shape = 'u32[72,128]{1,0:T(1,128)}', space=vmem, size = 0x9000, scoped, tag = 'internal scratch']
  %s0 = inlined_call_operand.vmem [shape: bf16[32,288], index: 0, kind: input, shape index: {}]
  %s1 = inlined_call_operand.vmem [shape: f32[32,1], index: 1, kind: input, shape index: {}]
  %s2 = inlined_call_operand.vmem [shape: bf16[2,288,16], index: 2, kind: input, shape index: {}]
  %s3 = inlined_call_operand.vmem [shape: f32[2,32,16], index: 3, kind: output, shape index: {}]
  %s4 = sld [smem:[#allocation0]]
  $region45: #{cyclegan_generator.15} parent=0
    _
  %s6 = ssub.s32 1, %s4
  %s7 = scalar_select 0, %s6, %s4
  loop: start=0, step=1, limit=4
  $region2: #{cyclegan_generator.15} parent=0 // loop_pre_header
    _
  $region3: #{cyclegan_generator.15} parent=0 // loop_header
    %s9 = sphi 0, %s13
    %p10 = scmp.ge.s32.totalorder %s9, 4
    %s17 = sphi 0, %s17
    %s19 = sphi 0, %s17
    %s20 = sphi 0, %s19
    %s34 = sphi 0, %s20
    %s38 = sphi 0, %s38
    %s40 = sphi 0, %s38
    %s41 = sphi 0, %s40
    %s55 = sphi 0, %s41
    %s61 = sphi 0, %s63
    %s64 = sphi 0, %s61
    %s65 = sphi 0, %s64
    %s81 = sphi 0, %s65
    %s87 = sphi 0, %s89
    %s90 = sphi 0, %s87
    %s91 = sphi 0, %s90
    %s107 = sphi 0, %s91
  $region4: #{cyclegan_generator.15} parent=0 // loop_header_branch
    %12 = sbr.rel (%p10) target = $region8
  $region5: #{cyclegan_generator.15} parent=0 // loop_body
    %s14 = ssub.s32 %s9, 1
    %s15 = ssub.s32 %s9, 2
    %s16 = sadd.s32 %s9, 1
    %s18 = sadd.s32 %s17, 1
    %p21 = scmp.eq.s32.totalorder %s9, 1
    %p22 = scmp.ne.s32.totalorder %s17, %s19
    %p23 = scmp.eq.s32.totalorder %s9, 0
    %p24 = por %p22, %p23
    %p25 = scmp.ne.s32.totalorder %s17, %s19
    %p26 = scmp.eq.s32.totalorder %s14, 1
    %p27 = por %p25, %p26
    %p28 = scmp.ne.s32.totalorder %s19, %s20
    %p29 = scmp.eq.s32.totalorder %s14, 0
    %p30 = por %p28, %p29
    %p31 = scmp.ne.s32.totalorder %s19, %s20
    %p32 = scmp.eq.s32.totalorder %s15, 1
    %p33 = por %p31, %p32
    %p35 = scmp.ne.s32.totalorder %s20, %s34
    %p36 = scmp.eq.s32.totalorder %s15, 0
    %p37 = por %p35, %p36
    %s39 = sadd.s32 %s38, 1
    %p42 = scmp.eq.s32.totalorder %s9, 1
    %p43 = scmp.ne.s32.totalorder %s38, %s40
    %p44 = scmp.eq.s32.totalorder %s9, 0
    %p45 = por %p43, %p44
    %p46 = scmp.ne.s32.totalorder %s38, %s40
    %p47 = scmp.eq.s32.totalorder %s14, 1
    %p48 = por %p46, %p47
    %p49 = scmp.ne.s32.totalorder %s40, %s41
    %p50 = scmp.eq.s32.totalorder %s14, 0
    %p51 = por %p49, %p50
    %p52 = scmp.ne.s32.totalorder %s40, %s41
    %p53 = scmp.eq.s32.totalorder %s15, 1
    %p54 = por %p52, %p53
    %p56 = scmp.ne.s32.totalorder %s41, %s55
    %p57 = scmp.eq.s32.totalorder %s15, 0
    %p58 = por %p56, %p57
    %s59 = ssub.s32 %s9, %s16
    %p60 = scmp.eq.s32.totalorder %s59, 0
    %s62 = sadd.s32 %s61, 1
    %s63 = scalar_select %p60, %s61, %s62
    %p66 = pneg %p60
    %p67 = scmp.eq.s32.totalorder %s9, 1
    %p68 = por %p66, %p67
    %p69 = scmp.ne.s32.totalorder %s61, %s64
    %p70 = scmp.eq.s32.totalorder %s9, 0
    %p71 = por %p69, %p70
    %p72 = scmp.ne.s32.totalorder %s61, %s64
    %p73 = scmp.eq.s32.totalorder %s14, 1
    %p74 = por %p72, %p73
    %p75 = scmp.ne.s32.totalorder %s64, %s65
    %p76 = scmp.eq.s32.totalorder %s14, 0
    %p77 = por %p75, %p76
    %p78 = scmp.ne.s32.totalorder %s64, %s65
    %p79 = scmp.eq.s32.totalorder %s15, 1
    %p80 = por %p78, %p79
    %p82 = scmp.ne.s32.totalorder %s65, %s81
    %p83 = scmp.eq.s32.totalorder %s15, 0
    %p84 = por %p82, %p83
    %s85 = ssub.s32 %s9, %s16
    %p86 = scmp.eq.s32.totalorder %s85, 0
    %s88 = sadd.s32 %s87, 1
    %s89 = scalar_select %p86, %s87, %s88
    %p92 = pneg %p86
    %p93 = scmp.eq.s32.totalorder %s9, 1
    %p94 = por %p92, %p93
    %p95 = scmp.ne.s32.totalorder %s87, %s90
    %p96 = scmp.eq.s32.totalorder %s9, 0
    %p97 = por %p95, %p96
    %p98 = scmp.ne.s32.totalorder %s87, %s90
    %p99 = scmp.eq.s32.totalorder %s14, 1
    %p100 = por %p98, %p99
    %p101 = scmp.ne.s32.totalorder %s90, %s91
    %p102 = scmp.eq.s32.totalorder %s14, 0
    %p103 = por %p101, %p102
    %p104 = scmp.ne.s32.totalorder %s90, %s91
    %p105 = scmp.eq.s32.totalorder %s15, 1
    %p106 = por %p104, %p105
    %p108 = scmp.ne.s32.totalorder %s91, %s107
    %p109 = scmp.eq.s32.totalorder %s15, 0
    %p110 = por %p108, %p109
    %p111 = scmp.le.s32.totalorder 1, %s9
    %p112 = scmp.lt.s32.totalorder %s9, 3
    %p113 = pnand %p111, %p112
    %p114 = pneg %p113
    // Predicated region
    $region9: #{cyclegan_generator.15} parent=5 // pred_check
      _
    $region10: #{cyclegan_generator.15} parent=5 // pred_check_branch
      %116 = sbr.rel (%p113) target = $region12
    $region11: #{cyclegan_generator.15} parent=5 // pred_region
      %s117 = ssub.s32 %s9, 1
      // Predicated region
      $region13: #{cyclegan_generator.15} parent=11 // pred_check
        %p118 = pneg %p30
      $region14: #{cyclegan_generator.15} parent=11 // pred_check_branch
        %120 = sbr.rel (%p118) target = $region16
      $region15: #{cyclegan_generator.15} parent=11 // pred_region
        _
      $region16: #{cyclegan_generator.15} parent=11 // pred_fallthru
        _
      // Predicated region
      $region17: #{cyclegan_generator.15} parent=11 // pred_check
        %p121 = pneg %p51
      $region18: #{cyclegan_generator.15} parent=11 // pred_check_branch
        %123 = sbr.rel (%p121) target = $region20
      $region19: #{cyclegan_generator.15} parent=11 // pred_region
        _
      $region20: #{cyclegan_generator.15} parent=11 // pred_fallthru
        _
    $region12: #{cyclegan_generator.15} parent=5 // pred_fallthru
      _
    %p124 = scmp.lt.s32.totalorder %s9, 2
    // Predicated region
    $region21: #{cyclegan_generator.15} parent=5 // pred_check
      %p125 = pneg %p124
    $region22: #{cyclegan_generator.15} parent=5 // pred_check_branch
      %127 = sbr.rel (%p125) target = $region24
    $region23: #{cyclegan_generator.15} parent=5 // pred_region
      // Predicated region
      $region25: #{cyclegan_generator.15} parent=23 // pred_check
        %p128 = pneg %p71
      $region26: #{cyclegan_generator.15} parent=23 // pred_check_branch
        %130 = sbr.rel (%p128) target = $region28
      $region27: #{cyclegan_generator.15} parent=23 // pred_region
        %p131 = scmp.lt.s32.totalorder %s9, 1
        %s132 = scalar_select %p131, %s9, 1
        %s133 = smul.addr %s132, 36
        %s134 = smul.addr %s133, 4
        %s135 = scalar_lea.vmem %s2, %s134
      $region28: #{cyclegan_generator.15} parent=23 // pred_fallthru
        _
    $region24: #{cyclegan_generator.15} parent=5 // pred_fallthru
      _
    %p136 = scmp.le.s32.totalorder 1, %s9
    %p137 = scmp.lt.s32.totalorder %s9, 3
    %p138 = pnand %p136, %p137
    %p139 = pneg %p138
    // Predicated region
    $region29: #{cyclegan_generator.15} parent=5 // pred_check
      _
    $region30: #{cyclegan_generator.15} parent=5 // pred_check_branch
      %141 = sbr.rel (%p138) target = $region32
    $region31: #{cyclegan_generator.15} parent=5 // pred_region
      %s142 = ssub.s32 %s9, 1
      %p143 = pneg %p30
      %p144 = pneg %p27
      %p145 = pneg %p51
      %p146 = pneg %p48
      %p147 = scmp.lt.s32.totalorder %s14, 1
      %s148 = scalar_select %p147, %s14, 1
      %s149 = smul.addr %s148, 36
      %s150 = smul.addr %s149, 4
      %s151 = scalar_lea.vmem %s2, %s150
      %p152 = pneg %p77
      %p153 = pneg %p74
      %p154 = pneg %p103
      %p155 = pneg %p100
      %p156 = scmp.lt.s32.totalorder %s14, 1
      %s157 = scalar_select %p156, %s14, 1
      %s158 = smul.addr %s157, 4
      %s159 = smul.addr %s158, 8
      %s160 = scalar_lea.vmem %s3, %s159
      %p161 = scmp.lt.s32.totalorder %s14, 1
      %s162 = scalar_select %p161, %s14, 1
      %s163 = smul.addr %s162, 36
      %s164 = smul.addr %s163, 4
      %s165 = scalar_lea.vmem %s2, %s164
      %p166 = scmp.lt.s32.totalorder %s14, 1
      %s167 = scalar_select %p166, %s14, 1
      %s168 = smul.addr %s167, 4
      %s169 = smul.addr %s168, 8
      %s170 = scalar_lea.vmem %s3, %s169
      %v172 = vld [vmem:[%s0] sm:$0xff]
      %v173 = vld [vmem:[%s0 + $0x8] sm:$0xf]
      %v174 = vld [vmem:[%s0 + $0xc] sm:$0xff]
      %v175 = vld [vmem:[%s0 + $0x14] sm:$0xf]
      %v176 = vld [vmem:[%s0 + $0x18] sm:$0xff]
      %v177 = vld [vmem:[%s0 + $0x20] sm:$0xf]
      %v178 = vld [vmem:[%s0 + $0x24] sm:$0xff]
      %v179 = vld [vmem:[%s0 + $0x2c] sm:$0xf]
      %v180 = vld [vmem:[%s165] sm:$0xf]
      %v181 = vld [vmem:[%s165 + $0x4] sm:$0xf]
      %v182 = vld [vmem:[%s165 + $0x8] sm:$0xf]
      %v183 = vld [vmem:[%s165 + $0xc] sm:$0xf]
      %v184 = vld [vmem:[%s165 + $0x10] sm:$0xf]
      %v185 = vld [vmem:[%s165 + $0x14] sm:$0xf]
      %v186 = vld [vmem:[%s165 + $0x18] sm:$0xf]
      %v187 = vld [vmem:[%s165 + $0x1c] sm:$0xf]
      %v188 = vld [vmem:[%s165 + $0x20] sm:$0xf]
      %v189 = vld [vmem:[%s165 + $0x24] sm:$0xf]
      %v190 = vld [vmem:[%s165 + $0x28] sm:$0xf]
      %v191 = vld [vmem:[%s165 + $0x2c] sm:$0xf]
      %v192 = vld [vmem:[%s165 + $0x30] sm:$0xf]
      %v193 = vld [vmem:[%s165 + $0x34] sm:$0xf]
      %v194 = vld [vmem:[%s165 + $0x38] sm:$0xf]
      %v195 = vld [vmem:[%s165 + $0x3c] sm:$0xf]
      %v196 = vld [vmem:[%s165 + $0x40] sm:$0xf]
      %v197 = vld [vmem:[%s165 + $0x44] sm:$0xf]
      %v198 = vld [vmem:[%s165 + $0x48] sm:$0xf]
      %v199 = vld [vmem:[%s165 + $0x4c] sm:$0xf]
      %v200 = vld [vmem:[%s165 + $0x50] sm:$0xf]
      %v201 = vld [vmem:[%s165 + $0x54] sm:$0xf]
      %v202 = vld [vmem:[%s165 + $0x58] sm:$0xf]
      %v203 = vld [vmem:[%s165 + $0x5c] sm:$0xf]
      %v204 = vld [vmem:[%s165 + $0x60] sm:$0xf]
      %v205 = vld [vmem:[%s165 + $0x64] sm:$0xf]
      %v206 = vld [vmem:[%s165 + $0x68] sm:$0xf]
      %v207 = vld [vmem:[%s165 + $0x6c] sm:$0xf]
      %v208 = vld [vmem:[%s165 + $0x70] sm:$0xf]
      %v209 = vld [vmem:[%s165 + $0x74] sm:$0xf]
      %v210 = vld [vmem:[%s165 + $0x78] sm:$0xf]
      %v211 = vld [vmem:[%s165 + $0x7c] sm:$0xf]
      %v212 = vld [vmem:[%s165 + $0x80] sm:$0xf]
      %v213 = vld [vmem:[%s165 + $0x84] sm:$0xf]
      %v214 = vld [vmem:[%s165 + $0x88] sm:$0xf]
      %v215 = vld [vmem:[%s165 + $0x8c] sm:$0xf]
      %v216 = vld [vmem:[%s1] sm:$0xff]
      %v217 = vld [vmem:[%s1 + $0x8] sm:$0xff]
      %v218 = vld [vmem:[%s1 + $0x10] sm:$0xff]
      %v219 = vld [vmem:[%s1 + $0x18] sm:$0xff]
      %221 = vset.pattern.permute.xlu0 0
      %222 = vperm.xlu0 %221, %v216
      %v223 = vpop.permute.xlu0 %222
      %226 = vset.pattern.permute.xlu0 0
      %227 = vperm.xlu0 %226, %v217
      %v228 = vpop.permute.xlu0 %227
      %231 = vset.pattern.permute.xlu0 0
      %232 = vperm.xlu0 %231, %v218
      %v233 = vpop.permute.xlu0 %232
      %236 = vset.pattern.permute.xlu0 0
      %237 = vperm.xlu0 %236, %v219
      %v238 = vpop.permute.xlu0 %237
      %v248 = vunpack.c.l.b16 %v172
      %v249 = vunpack.c.h.b16 %v172
      %v250 = vunpack.c.l.b16 %v173
      %v251 = vunpack.c.l.b16 %v174
      %v252 = vunpack.c.h.b16 %v174
      %v253 = vunpack.c.l.b16 %v175
      %v254 = vunpack.c.l.b16 %v176
      %v255 = vunpack.c.h.b16 %v176
      %v256 = vunpack.c.l.b16 %v177
      %v257 = vunpack.c.l.b16 %v178
      %v258 = vunpack.c.h.b16 %v178
      %v259 = vunpack.c.l.b16 %v179
      %v260 = vpack.c.b16 %v251, %v248
      %v261 = vpack.c.b16 %v252, %v249
      %v262 = vpack.c.b16 %v253, %v250
      %v263 = vpack.c.b16 %v257, %v254
      %v264 = vpack.c.b16 %v258, %v255
      %v265 = vpack.c.b16 %v259, %v256
      %v306 = vunpack.c.l.b16 %v180
      %v307 = vunpack.c.l.b16 %v181
      %v308 = vunpack.c.l.b16 %v182
      %v309 = vunpack.c.l.b16 %v183
      %v310 = vunpack.c.l.b16 %v184
      %v311 = vunpack.c.l.b16 %v185
      %v312 = vunpack.c.l.b16 %v186
      %v313 = vunpack.c.l.b16 %v187
      %v314 = vunpack.c.l.b16 %v188
      %v315 = vunpack.c.l.b16 %v189
      %v316 = vunpack.c.l.b16 %v190
      %v317 = vunpack.c.l.b16 %v191
      %v318 = vunpack.c.l.b16 %v192
      %v319 = vunpack.c.l.b16 %v193
      %v320 = vunpack.c.l.b16 %v194
      %v321 = vunpack.c.l.b16 %v195
      %v322 = vunpack.c.l.b16 %v196
      %v323 = vunpack.c.l.b16 %v197
      %v324 = vunpack.c.l.b16 %v198
      %v325 = vunpack.c.l.b16 %v199
      %v326 = vunpack.c.l.b16 %v200
      %v327 = vunpack.c.l.b16 %v201
      %v328 = vunpack.c.l.b16 %v202
      %v329 = vunpack.c.l.b16 %v203
      %v330 = vunpack.c.l.b16 %v204
      %v331 = vunpack.c.l.b16 %v205
      %v332 = vunpack.c.l.b16 %v206
      %v333 = vunpack.c.l.b16 %v207
      %v334 = vunpack.c.l.b16 %v208
      %v335 = vunpack.c.l.b16 %v209
      %v336 = vunpack.c.l.b16 %v210
      %v337 = vunpack.c.l.b16 %v211
      %v338 = vunpack.c.l.b16 %v212
      %v339 = vunpack.c.l.b16 %v213
      %v340 = vunpack.c.l.b16 %v214
      %v341 = vunpack.c.l.b16 %v215
      %v342 = vpack.c.b16 %v307, %v306
      %v343 = vpack.c.b16 %v309, %v308
      %v344 = vpack.c.b16 %v311, %v310
      %v345 = vpack.c.b16 %v313, %v312
      %v346 = vpack.c.b16 %v315, %v314
      %v347 = vpack.c.b16 %v317, %v316
      %v348 = vpack.c.b16 %v319, %v318
      %v349 = vpack.c.b16 %v321, %v320
      %v350 = vpack.c.b16 %v323, %v322
      %v351 = vpack.c.b16 %v325, %v324
      %v352 = vpack.c.b16 %v327, %v326
      %v353 = vpack.c.b16 %v329, %v328
      %v354 = vpack.c.b16 %v331, %v330
      %v355 = vpack.c.b16 %v333, %v332
      %v356 = vpack.c.b16 %v335, %v334
      %v357 = vpack.c.b16 %v337, %v336
      %v358 = vpack.c.b16 %v339, %v338
      %v359 = vpack.c.b16 %v341, %v340
      %vm378 = vcmask 261120
      %v380 = vsel %vm378, %v262, 0
      %v383 = vsel %vm378, %v265, 0
      %385 = vmatpush.bf16.msra.mxu0 %v349
      %386 = vmatpush.bf16.msra.mxu0 %v348
      %387 = vmatpush.bf16.msra.mxu0 %v347
      %388 = vmatpush.bf16.msra.mxu0 %v346
      %389 = vmatpush.bf16.msra.mxu0 %v345
      %390 = vmatpush.bf16.msra.mxu0 %v344
      %391 = vmatpush.bf16.msra.mxu0 %v343
      %392 = vmatpush.bf16.msra.mxu0 %v342
      %393 = vmatmul.bf16.gmra.mxu0 %v260
      %v394 = vpop.f32.mrf.mxu0
      %v395 = vadd.f32 %v223, %v394
      %v396 = vpop.f32.mrf.mxu0
      %v397 = vadd.f32 %v228, %v396
      %398 = vmatmul.bf16.gmra.mxu0 %v263
      %v399 = vpop.f32.mrf.mxu0
      %v400 = vadd.f32 %v233, %v399
      %v401 = vpop.f32.mrf.mxu0
      %v402 = vadd.f32 %v238, %v401
      %403 = vdwg.mxu0
      %404 = vmatpush.bf16.msra.mxu0 %v357
      %405 = vmatpush.bf16.msra.mxu0 %v356
      %406 = vmatpush.bf16.msra.mxu0 %v355
      %407 = vmatpush.bf16.msra.mxu0 %v354
      %408 = vmatpush.bf16.msra.mxu0 %v353
      %409 = vmatpush.bf16.msra.mxu0 %v352
      %410 = vmatpush.bf16.msra.mxu0 %v351
      %411 = vmatpush.bf16.msra.mxu0 %v350
      %412 = vmatmul.bf16.gmra.mxu0 %v261
      %v413 = vpop.f32.mrf.mxu0
      %v414 = vadd.f32 %v395, %v413
      %v415 = vpop.f32.mrf.mxu0
      %v416 = vadd.f32 %v397, %v415
      %417 = vmatmul.bf16.gmra.mxu0 %v264
      %v418 = vpop.f32.mrf.mxu0
      %v419 = vadd.f32 %v400, %v418
      %v420 = vpop.f32.mrf.mxu0
      %v421 = vadd.f32 %v402, %v420
      %422 = vdwg.mxu0
      %423 = vmatpush.bf16.msra.mxu0 0
      %424 = vmatpush.bf16.msra.mxu0 0
      %425 = vmatpush.bf16.msra.mxu0 0
      %426 = vmatpush.bf16.msra.mxu0 0
      %427 = vmatpush.bf16.msra.mxu0 0
      %428 = vmatpush.bf16.msra.mxu0 0
      %429 = vmatpush.bf16.msra.mxu0 %v359
      %430 = vmatpush.bf16.msra.mxu0 %v358
      %431 = vmatmul.bf16.gmra.mxu0 %v380
      %v432 = vpop.f32.mrf.mxu0
      %v433 = vadd.f32 %v414, %v432
      %v434 = vpop.f32.mrf.mxu0
      %v435 = vadd.f32 %v416, %v434
      %436 = vmatmul.bf16.gmra.mxu0 %v383
      %v437 = vpop.f32.mrf.mxu0
      %v438 = vadd.f32 %v419, %v437
      %v439 = vpop.f32.mrf.mxu0
      %v440 = vadd.f32 %v421, %v439
      %441 = vdwg.mxu0
      %vm442 = vcmask 130048
      %v443 = vsel %vm442, %v433, 0.0
      %444 = vadd.xlane.f32.xlu0 %v443
      %v445 = vpop.xlane.xlu0 %444
      %v446 = vsel %vm442, %v435, 0.0
      %447 = vadd.xlane.f32.xlu0 %v446
      %v448 = vpop.xlane.xlu0 %447
      %v449 = vsel %vm442, %v438, 0.0
      %450 = vadd.xlane.f32.xlu0 %v449
      %v451 = vpop.xlane.xlu0 %450
      %v452 = vsel %vm442, %v440, 0.0
      %453 = vadd.xlane.f32.xlu0 %v452
      %v454 = vpop.xlane.xlu0 %453
      %v455 = vrcp.pop 16.0
      %v456 = vmul.f32 16.0, %v455
      %v457 = vsub.f32 1.0, %v456
      %v458 = vmul.f32 %v455, %v457
      %v459 = vadd.f32 %v455, %v458
      %vm460 = vweird.f32 %v455
      %v461 = vsel %vm460, %v455, %v459
      %v462 = vmul.f32 %v445, %v461
      %v463 = vmul.f32 %v448, %v461
      %v464 = vmul.f32 %v451, %v461
      %v465 = vmul.f32 %v454, %v461
      %v466 = vsub.f32 %v433, %v462
      %v467 = vsub.f32 %v435, %v463
      %v468 = vsub.f32 %v438, %v464
      %v469 = vsub.f32 %v440, %v465
      %v470 = vmul.f32 %v466, %v466
      %v471 = vmul.f32 %v467, %v467
      %v472 = vmul.f32 %v468, %v468
      %v473 = vmul.f32 %v469, %v469
      %v474 = vsel %vm442, %v470, 0.0
      %475 = vadd.xlane.f32.xlu0 %v474
      %v476 = vpop.xlane.xlu0 %475
      %v477 = vsel %vm442, %v471, 0.0
      %478 = vadd.xlane.f32.xlu0 %v477
      %v479 = vpop.xlane.xlu0 %478
      %v480 = vsel %vm442, %v472, 0.0
      %481 = vadd.xlane.f32.xlu0 %v480
      %v482 = vpop.xlane.xlu0 %481
      %v483 = vsel %vm442, %v473, 0.0
      %484 = vadd.xlane.f32.xlu0 %v483
      %v485 = vpop.xlane.xlu0 %484
      %v486 = vmul.f32 %v476, %v461
      %v487 = vmul.f32 %v479, %v461
      %v488 = vmul.f32 %v482, %v461
      %v489 = vmul.f32 %v485, %v461
      %v490 = vadd.f32 %v486, 1e-05
      %v491 = vadd.f32 %v487, 1e-05
      %v492 = vadd.f32 %v488, 1e-05
      %v493 = vadd.f32 %v489, 1e-05
      %v494 = vrsqrt.pop %v490
      %v495 = vmul.f32 %v494, %v490
      %v496 = vmul.f32 %v495, %v494
      %v497 = vmul.f32 0.5, %v496
      %v498 = vsub.f32 1.5, %v497
      %v499 = vmul.f32 %v494, %v498
      %vm500 = vweird.f32 %v490
      %vm501 = vweird.f32 %v494
      %vm502 = vmor %vm500, %vm501
      %v503 = vsel %vm502, %v494, %v499
      %v504 = vrsqrt.pop %v491
      %v505 = vmul.f32 %v504, %v491
      %v506 = vmul.f32 %v505, %v504
      %v507 = vmul.f32 0.5, %v506
      %v508 = vsub.f32 1.5, %v507
      %v509 = vmul.f32 %v504, %v508
      %vm510 = vweird.f32 %v491
      %vm511 = vweird.f32 %v504
      %vm512 = vmor %vm510, %vm511
      %v513 = vsel %vm512, %v504, %v509
      %v514 = vrsqrt.pop %v492
      %v515 = vmul.f32 %v514, %v492
      %v516 = vmul.f32 %v515, %v514
      %v517 = vmul.f32 0.5, %v516
      %v518 = vsub.f32 1.5, %v517
      %v519 = vmul.f32 %v514, %v518
      %vm520 = vweird.f32 %v492
      %vm521 = vweird.f32 %v514
      %vm522 = vmor %vm520, %vm521
      %v523 = vsel %vm522, %v514, %v519
      %v524 = vrsqrt.pop %v493
      %v525 = vmul.f32 %v524, %v493
      %v526 = vmul.f32 %v525, %v524
      %v527 = vmul.f32 0.5, %v526
      %v528 = vsub.f32 1.5, %v527
      %v529 = vmul.f32 %v524, %v528
      %vm530 = vweird.f32 %v493
      %vm531 = vweird.f32 %v524
      %vm532 = vmor %vm530, %vm531
      %v533 = vsel %vm532, %v524, %v529
      %v534 = vmul.f32 %v466, %v503
      %v535 = vmul.f32 %v467, %v513
      %v536 = vmul.f32 %v468, %v523
      %v537 = vmul.f32 %v469, %v533
      %v538 = vmax.f32 %v534, 0.0
      %v539 = vmax.f32 %v535, 0.0
      %v540 = vmax.f32 %v536, 0.0
      %v541 = vmax.f32 %v537, 0.0
      %542 = vst.msk [vmem:[%s170] sm:$0xff] %vm442, %v538
      %543 = vst.msk [vmem:[%s170 + $0x8] sm:$0xff] %vm442, %v539
      %544 = vst.msk [vmem:[%s170 + $0x10] sm:$0xff] %vm442, %v540
      %545 = vst.msk [vmem:[%s170 + $0x18] sm:$0xff] %vm442, %v541
      %p546 = scmp.lt.s32.totalorder %s14, 1
      %s547 = scalar_select %p546, %s14, 1
      %s548 = smul.addr %s547, 4
      %s549 = smul.addr %s548, 8
      %s550 = scalar_lea.vmem %s3, %s549
      // Predicated region
      $region33: #{cyclegan_generator.15} parent=31 // pred_check
        %p551 = pneg %p100
      $region34: #{cyclegan_generator.15} parent=31 // pred_check_branch
        %553 = sbr.rel (%p551) target = $region36
      $region35: #{cyclegan_generator.15} parent=31 // pred_region
        _
      $region36: #{cyclegan_generator.15} parent=31 // pred_fallthru
        _
    $region32: #{cyclegan_generator.15} parent=5 // pred_fallthru
      _
    %p554 = scmp.le.s32.totalorder 2, %s9
    // Predicated region
    $region37: #{cyclegan_generator.15} parent=5 // pred_check
      %p555 = pneg %p554
    $region38: #{cyclegan_generator.15} parent=5 // pred_check_branch
      %557 = sbr.rel (%p555) target = $region40
    $region39: #{cyclegan_generator.15} parent=5 // pred_region
      %s558 = ssub.s32 %s9, 2
      // Predicated region
      $region41: #{cyclegan_generator.15} parent=39 // pred_check
        %p559 = pneg %p106
      $region42: #{cyclegan_generator.15} parent=39 // pred_check_branch
        %561 = sbr.rel (%p559) target = $region44
      $region43: #{cyclegan_generator.15} parent=39 // pred_region
        %p562 = scmp.lt.s32.totalorder %s15, 1
        %s563 = scalar_select %p562, %s15, 1
        %s564 = smul.addr %s563, 4
        %s565 = smul.addr %s564, 8
        %s566 = scalar_lea.vmem %s3, %s565
      $region44: #{cyclegan_generator.15} parent=39 // pred_fallthru
        _
    $region40: #{cyclegan_generator.15} parent=5 // pred_fallthru
      _
  $region6: #{cyclegan_generator.15} parent=0 // loop_footer
    %s13 = sadd.s32 1, %s9
  $region7: #{cyclegan_generator.15} parent=0 // loop_footer_branch
    %8 = sbr.rel target = $region3
  $region8: #{cyclegan_generator.15} parent=0 // loop_exit
    _

// kernel: cyclegan_generator.16
$region0: #{cyclegan_generator.16}
  #allocation0 [shape = 'u32[]', space=smem, size = 0x4, offset = 0x4, fixed_abs, tag = 'smem constant byte address 0x4 - core index']
  #allocation1 [shape = 'u32[72,128]{1,0:T(1,128)}', space=vmem, size = 0x9000, scoped, tag = 'internal scratch']
  %s0 = inlined_call_operand.vmem [shape: bf16[32,288], index: 0, kind: input, shape index: {}]
  %s1 = inlined_call_operand.vmem [shape: f32[32,1], index: 1, kind: input, shape index: {}]
  %s2 = inlined_call_operand.vmem [shape: bf16[2,288,16], index: 2, kind: input, shape index: {}]
  %s3 = inlined_call_operand.vmem [shape: f32[2,32,16], index: 3, kind: input, shape index: {}]
  %s4 = inlined_call_operand.vmem [shape: f32[2,32,16], index: 4, kind: output, shape index: {}]
  %s5 = sld [smem:[#allocation0]]
  $region49: #{cyclegan_generator.16} parent=0
    _
  %s7 = ssub.s32 1, %s5
  %s8 = scalar_select 0, %s7, %s5
  loop: start=0, step=1, limit=4
  $region2: #{cyclegan_generator.16} parent=0 // loop_pre_header
    _
  $region3: #{cyclegan_generator.16} parent=0 // loop_header
    %s10 = sphi 0, %s14
    %p11 = scmp.ge.s32.totalorder %s10, 4
    %s18 = sphi 0, %s18
    %s20 = sphi 0, %s18
    %s21 = sphi 0, %s20
    %s35 = sphi 0, %s21
    %s39 = sphi 0, %s39
    %s41 = sphi 0, %s39
    %s42 = sphi 0, %s41
    %s56 = sphi 0, %s42
    %s62 = sphi 0, %s64
    %s65 = sphi 0, %s62
    %s66 = sphi 0, %s65
    %s82 = sphi 0, %s66
    %s88 = sphi 0, %s90
    %s91 = sphi 0, %s88
    %s92 = sphi 0, %s91
    %s108 = sphi 0, %s92
    %s114 = sphi 0, %s116
    %s117 = sphi 0, %s114
    %s118 = sphi 0, %s117
    %s134 = sphi 0, %s118
  $region4: #{cyclegan_generator.16} parent=0 // loop_header_branch
    %13 = sbr.rel (%p11) target = $region8
  $region5: #{cyclegan_generator.16} parent=0 // loop_body
    %s15 = ssub.s32 %s10, 1
    %s16 = ssub.s32 %s10, 2
    %s17 = sadd.s32 %s10, 1
    %s19 = sadd.s32 %s18, 1
    %p22 = scmp.eq.s32.totalorder %s10, 1
    %p23 = scmp.ne.s32.totalorder %s18, %s20
    %p24 = scmp.eq.s32.totalorder %s10, 0
    %p25 = por %p23, %p24
    %p26 = scmp.ne.s32.totalorder %s18, %s20
    %p27 = scmp.eq.s32.totalorder %s15, 1
    %p28 = por %p26, %p27
    %p29 = scmp.ne.s32.totalorder %s20, %s21
    %p30 = scmp.eq.s32.totalorder %s15, 0
    %p31 = por %p29, %p30
    %p32 = scmp.ne.s32.totalorder %s20, %s21
    %p33 = scmp.eq.s32.totalorder %s16, 1
    %p34 = por %p32, %p33
    %p36 = scmp.ne.s32.totalorder %s21, %s35
    %p37 = scmp.eq.s32.totalorder %s16, 0
    %p38 = por %p36, %p37
    %s40 = sadd.s32 %s39, 1
    %p43 = scmp.eq.s32.totalorder %s10, 1
    %p44 = scmp.ne.s32.totalorder %s39, %s41
    %p45 = scmp.eq.s32.totalorder %s10, 0
    %p46 = por %p44, %p45
    %p47 = scmp.ne.s32.totalorder %s39, %s41
    %p48 = scmp.eq.s32.totalorder %s15, 1
    %p49 = por %p47, %p48
    %p50 = scmp.ne.s32.totalorder %s41, %s42
    %p51 = scmp.eq.s32.totalorder %s15, 0
    %p52 = por %p50, %p51
    %p53 = scmp.ne.s32.totalorder %s41, %s42
    %p54 = scmp.eq.s32.totalorder %s16, 1
    %p55 = por %p53, %p54
    %p57 = scmp.ne.s32.totalorder %s42, %s56
    %p58 = scmp.eq.s32.totalorder %s16, 0
    %p59 = por %p57, %p58
    %s60 = ssub.s32 %s10, %s17
    %p61 = scmp.eq.s32.totalorder %s60, 0
    %s63 = sadd.s32 %s62, 1
    %s64 = scalar_select %p61, %s62, %s63
    %p67 = pneg %p61
    %p68 = scmp.eq.s32.totalorder %s10, 1
    %p69 = por %p67, %p68
    %p70 = scmp.ne.s32.totalorder %s62, %s65
    %p71 = scmp.eq.s32.totalorder %s10, 0
    %p72 = por %p70, %p71
    %p73 = scmp.ne.s32.totalorder %s62, %s65
    %p74 = scmp.eq.s32.totalorder %s15, 1
    %p75 = por %p73, %p74
    %p76 = scmp.ne.s32.totalorder %s65, %s66
    %p77 = scmp.eq.s32.totalorder %s15, 0
    %p78 = por %p76, %p77
    %p79 = scmp.ne.s32.totalorder %s65, %s66
    %p80 = scmp.eq.s32.totalorder %s16, 1
    %p81 = por %p79, %p80
    %p83 = scmp.ne.s32.totalorder %s66, %s82
    %p84 = scmp.eq.s32.totalorder %s16, 0
    %p85 = por %p83, %p84
    %s86 = ssub.s32 %s10, %s17
    %p87 = scmp.eq.s32.totalorder %s86, 0
    %s89 = sadd.s32 %s88, 1
    %s90 = scalar_select %p87, %s88, %s89
    %p93 = pneg %p87
    %p94 = scmp.eq.s32.totalorder %s10, 1
    %p95 = por %p93, %p94
    %p96 = scmp.ne.s32.totalorder %s88, %s91
    %p97 = scmp.eq.s32.totalorder %s10, 0
    %p98 = por %p96, %p97
    %p99 = scmp.ne.s32.totalorder %s88, %s91
    %p100 = scmp.eq.s32.totalorder %s15, 1
    %p101 = por %p99, %p100
    %p102 = scmp.ne.s32.totalorder %s91, %s92
    %p103 = scmp.eq.s32.totalorder %s15, 0
    %p104 = por %p102, %p103
    %p105 = scmp.ne.s32.totalorder %s91, %s92
    %p106 = scmp.eq.s32.totalorder %s16, 1
    %p107 = por %p105, %p106
    %p109 = scmp.ne.s32.totalorder %s92, %s108
    %p110 = scmp.eq.s32.totalorder %s16, 0
    %p111 = por %p109, %p110
    %s112 = ssub.s32 %s10, %s17
    %p113 = scmp.eq.s32.totalorder %s112, 0
    %s115 = sadd.s32 %s114, 1
    %s116 = scalar_select %p113, %s114, %s115
    %p119 = pneg %p113
    %p120 = scmp.eq.s32.totalorder %s10, 1
    %p121 = por %p119, %p120
    %p122 = scmp.ne.s32.totalorder %s114, %s117
    %p123 = scmp.eq.s32.totalorder %s10, 0
    %p124 = por %p122, %p123
    %p125 = scmp.ne.s32.totalorder %s114, %s117
    %p126 = scmp.eq.s32.totalorder %s15, 1
    %p127 = por %p125, %p126
    %p128 = scmp.ne.s32.totalorder %s117, %s118
    %p129 = scmp.eq.s32.totalorder %s15, 0
    %p130 = por %p128, %p129
    %p131 = scmp.ne.s32.totalorder %s117, %s118
    %p132 = scmp.eq.s32.totalorder %s16, 1
    %p133 = por %p131, %p132
    %p135 = scmp.ne.s32.totalorder %s118, %s134
    %p136 = scmp.eq.s32.totalorder %s16, 0
    %p137 = por %p135, %p136
    %p138 = scmp.le.s32.totalorder 1, %s10
    %p139 = scmp.lt.s32.totalorder %s10, 3
    %p140 = pnand %p138, %p139
    %p141 = pneg %p140
    // Predicated region
    $region9: #{cyclegan_generator.16} parent=5 // pred_check
      _
    $region10: #{cyclegan_generator.16} parent=5 // pred_check_branch
      %143 = sbr.rel (%p140) target = $region12
    $region11: #{cyclegan_generator.16} parent=5 // pred_region
      %s144 = ssub.s32 %s10, 1
      // Predicated region
      $region13: #{cyclegan_generator.16} parent=11 // pred_check
        %p145 = pneg %p31
      $region14: #{cyclegan_generator.16} parent=11 // pred_check_branch
        %147 = sbr.rel (%p145) target = $region16
      $region15: #{cyclegan_generator.16} parent=11 // pred_region
        _
      $region16: #{cyclegan_generator.16} parent=11 // pred_fallthru
        _
      // Predicated region
      $region17: #{cyclegan_generator.16} parent=11 // pred_check
        %p148 = pneg %p52
      $region18: #{cyclegan_generator.16} parent=11 // pred_check_branch
        %150 = sbr.rel (%p148) target = $region20
      $region19: #{cyclegan_generator.16} parent=11 // pred_region
        _
      $region20: #{cyclegan_generator.16} parent=11 // pred_fallthru
        _
    $region12: #{cyclegan_generator.16} parent=5 // pred_fallthru
      _
    %p151 = scmp.lt.s32.totalorder %s10, 2
    // Predicated region
    $region21: #{cyclegan_generator.16} parent=5 // pred_check
      %p152 = pneg %p151
    $region22: #{cyclegan_generator.16} parent=5 // pred_check_branch
      %154 = sbr.rel (%p152) target = $region24
    $region23: #{cyclegan_generator.16} parent=5 // pred_region
      // Predicated region
      $region25: #{cyclegan_generator.16} parent=23 // pred_check
        %p155 = pneg %p72
      $region26: #{cyclegan_generator.16} parent=23 // pred_check_branch
        %157 = sbr.rel (%p155) target = $region28
      $region27: #{cyclegan_generator.16} parent=23 // pred_region
        %p158 = scmp.lt.s32.totalorder %s10, 1
        %s159 = scalar_select %p158, %s10, 1
        %s160 = smul.addr %s159, 36
        %s161 = smul.addr %s160, 4
        %s162 = scalar_lea.vmem %s2, %s161
      $region28: #{cyclegan_generator.16} parent=23 // pred_fallthru
        _
      // Predicated region
      $region29: #{cyclegan_generator.16} parent=23 // pred_check
        %p163 = pneg %p98
      $region30: #{cyclegan_generator.16} parent=23 // pred_check_branch
        %165 = sbr.rel (%p163) target = $region32
      $region31: #{cyclegan_generator.16} parent=23 // pred_region
        %p166 = scmp.lt.s32.totalorder %s10, 1
        %s167 = scalar_select %p166, %s10, 1
        %s168 = smul.addr %s167, 4
        %s169 = smul.addr %s168, 8
        %s170 = scalar_lea.vmem %s3, %s169
      $region32: #{cyclegan_generator.16} parent=23 // pred_fallthru
        _
    $region24: #{cyclegan_generator.16} parent=5 // pred_fallthru
      _
    %p171 = scmp.le.s32.totalorder 1, %s10
    %p172 = scmp.lt.s32.totalorder %s10, 3
    %p173 = pnand %p171, %p172
    %p174 = pneg %p173
    // Predicated region
    $region33: #{cyclegan_generator.16} parent=5 // pred_check
      _
    $region34: #{cyclegan_generator.16} parent=5 // pred_check_branch
      %176 = sbr.rel (%p173) target = $region36
    $region35: #{cyclegan_generator.16} parent=5 // pred_region
      %s177 = ssub.s32 %s10, 1
      %p178 = pneg %p31
      %p179 = pneg %p28
      %p180 = pneg %p52
      %p181 = pneg %p49
      %p182 = scmp.lt.s32.totalorder %s15, 1
      %s183 = scalar_select %p182, %s15, 1
      %s184 = smul.addr %s183, 36
      %s185 = smul.addr %s184, 4
      %s186 = scalar_lea.vmem %s2, %s185
      %p187 = pneg %p78
      %p188 = pneg %p75
      %p189 = scmp.lt.s32.totalorder %s15, 1
      %s190 = scalar_select %p189, %s15, 1
      %s191 = smul.addr %s190, 4
      %s192 = smul.addr %s191, 8
      %s193 = scalar_lea.vmem %s3, %s192
      %p194 = pneg %p104
      %p195 = pneg %p101
      %p196 = pneg %p130
      %p197 = pneg %p127
      %p198 = scmp.lt.s32.totalorder %s15, 1
      %s199 = scalar_select %p198, %s15, 1
      %s200 = smul.addr %s199, 4
      %s201 = smul.addr %s200, 8
      %s202 = scalar_lea.vmem %s4, %s201
      %p203 = scmp.lt.s32.totalorder %s15, 1
      %s204 = scalar_select %p203, %s15, 1
      %s205 = smul.addr %s204, 36
      %s206 = smul.addr %s205, 4
      %s207 = scalar_lea.vmem %s2, %s206
      %p208 = scmp.lt.s32.totalorder %s15, 1
      %s209 = scalar_select %p208, %s15, 1
      %s210 = smul.addr %s209, 4
      %s211 = smul.addr %s210, 8
      %s212 = scalar_lea.vmem %s3, %s211
      %p213 = scmp.lt.s32.totalorder %s15, 1
      %s214 = scalar_select %p213, %s15, 1
      %s215 = smul.addr %s214, 4
      %s216 = smul.addr %s215, 8
      %s217 = scalar_lea.vmem %s4, %s216
      %v219 = vld [vmem:[%s0] sm:$0xff]
      %v220 = vld [vmem:[%s0 + $0x8] sm:$0xf]
      %v221 = vld [vmem:[%s0 + $0xc] sm:$0xff]
      %v222 = vld [vmem:[%s0 + $0x14] sm:$0xf]
      %v223 = vld [vmem:[%s0 + $0x18] sm:$0xff]
      %v224 = vld [vmem:[%s0 + $0x20] sm:$0xf]
      %v225 = vld [vmem:[%s0 + $0x24] sm:$0xff]
      %v226 = vld [vmem:[%s0 + $0x2c] sm:$0xf]
      %v227 = vld [vmem:[%s207] sm:$0xf]
      %v228 = vld [vmem:[%s207 + $0x4] sm:$0xf]
      %v229 = vld [vmem:[%s207 + $0x8] sm:$0xf]
      %v230 = vld [vmem:[%s207 + $0xc] sm:$0xf]
      %v231 = vld [vmem:[%s207 + $0x10] sm:$0xf]
      %v232 = vld [vmem:[%s207 + $0x14] sm:$0xf]
      %v233 = vld [vmem:[%s207 + $0x18] sm:$0xf]
      %v234 = vld [vmem:[%s207 + $0x1c] sm:$0xf]
      %v235 = vld [vmem:[%s207 + $0x20] sm:$0xf]
      %v236 = vld [vmem:[%s207 + $0x24] sm:$0xf]
      %v237 = vld [vmem:[%s207 + $0x28] sm:$0xf]
      %v238 = vld [vmem:[%s207 + $0x2c] sm:$0xf]
      %v239 = vld [vmem:[%s207 + $0x30] sm:$0xf]
      %v240 = vld [vmem:[%s207 + $0x34] sm:$0xf]
      %v241 = vld [vmem:[%s207 + $0x38] sm:$0xf]
      %v242 = vld [vmem:[%s207 + $0x3c] sm:$0xf]
      %v243 = vld [vmem:[%s207 + $0x40] sm:$0xf]
      %v244 = vld [vmem:[%s207 + $0x44] sm:$0xf]
      %v245 = vld [vmem:[%s207 + $0x48] sm:$0xf]
      %v246 = vld [vmem:[%s207 + $0x4c] sm:$0xf]
      %v247 = vld [vmem:[%s207 + $0x50] sm:$0xf]
      %v248 = vld [vmem:[%s207 + $0x54] sm:$0xf]
      %v249 = vld [vmem:[%s207 + $0x58] sm:$0xf]
      %v250 = vld [vmem:[%s207 + $0x5c] sm:$0xf]
      %v251 = vld [vmem:[%s207 + $0x60] sm:$0xf]
      %v252 = vld [vmem:[%s207 + $0x64] sm:$0xf]
      %v253 = vld [vmem:[%s207 + $0x68] sm:$0xf]
      %v254 = vld [vmem:[%s207 + $0x6c] sm:$0xf]
      %v255 = vld [vmem:[%s207 + $0x70] sm:$0xf]
      %v256 = vld [vmem:[%s207 + $0x74] sm:$0xf]
      %v257 = vld [vmem:[%s207 + $0x78] sm:$0xf]
      %v258 = vld [vmem:[%s207 + $0x7c] sm:$0xf]
      %v259 = vld [vmem:[%s207 + $0x80] sm:$0xf]
      %v260 = vld [vmem:[%s207 + $0x84] sm:$0xf]
      %v261 = vld [vmem:[%s207 + $0x88] sm:$0xf]
      %v262 = vld [vmem:[%s207 + $0x8c] sm:$0xf]
      %v263 = vld [vmem:[%s1] sm:$0xff]
      %v264 = vld [vmem:[%s1 + $0x8] sm:$0xff]
      %v265 = vld [vmem:[%s1 + $0x10] sm:$0xff]
      %v266 = vld [vmem:[%s1 + $0x18] sm:$0xff]
      %268 = vset.pattern.permute.xlu0 0
      %269 = vperm.xlu0 %268, %v263
      %v270 = vpop.permute.xlu0 %269
      %273 = vset.pattern.permute.xlu0 0
      %274 = vperm.xlu0 %273, %v264
      %v275 = vpop.permute.xlu0 %274
      %278 = vset.pattern.permute.xlu0 0
      %279 = vperm.xlu0 %278, %v265
      %v280 = vpop.permute.xlu0 %279
      %283 = vset.pattern.permute.xlu0 0
      %284 = vperm.xlu0 %283, %v266
      %v285 = vpop.permute.xlu0 %284
      %v295 = vunpack.c.l.b16 %v219
      %v296 = vunpack.c.h.b16 %v219
      %v297 = vunpack.c.l.b16 %v220
      %v298 = vunpack.c.l.b16 %v221
      %v299 = vunpack.c.h.b16 %v221
      %v300 = vunpack.c.l.b16 %v222
      %v301 = vunpack.c.l.b16 %v223
      %v302 = vunpack.c.h.b16 %v223
      %v303 = vunpack.c.l.b16 %v224
      %v304 = vunpack.c.l.b16 %v225
      %v305 = vunpack.c.h.b16 %v225
      %v306 = vunpack.c.l.b16 %v226
      %v307 = vpack.c.b16 %v298, %v295
      %v308 = vpack.c.b16 %v299, %v296
      %v309 = vpack.c.b16 %v300, %v297
      %v310 = vpack.c.b16 %v304, %v301
      %v311 = vpack.c.b16 %v305, %v302
      %v312 = vpack.c.b16 %v306, %v303
      %v353 = vunpack.c.l.b16 %v227
      %v354 = vunpack.c.l.b16 %v228
      %v355 = vunpack.c.l.b16 %v229
      %v356 = vunpack.c.l.b16 %v230
      %v357 = vunpack.c.l.b16 %v231
      %v358 = vunpack.c.l.b16 %v232
      %v359 = vunpack.c.l.b16 %v233
      %v360 = vunpack.c.l.b16 %v234
      %v361 = vunpack.c.l.b16 %v235
      %v362 = vunpack.c.l.b16 %v236
      %v363 = vunpack.c.l.b16 %v237
      %v364 = vunpack.c.l.b16 %v238
      %v365 = vunpack.c.l.b16 %v239
      %v366 = vunpack.c.l.b16 %v240
      %v367 = vunpack.c.l.b16 %v241
      %v368 = vunpack.c.l.b16 %v242
      %v369 = vunpack.c.l.b16 %v243
      %v370 = vunpack.c.l.b16 %v244
      %v371 = vunpack.c.l.b16 %v245
      %v372 = vunpack.c.l.b16 %v246
      %v373 = vunpack.c.l.b16 %v247
      %v374 = vunpack.c.l.b16 %v248
      %v375 = vunpack.c.l.b16 %v249
      %v376 = vunpack.c.l.b16 %v250
      %v377 = vunpack.c.l.b16 %v251
      %v378 = vunpack.c.l.b16 %v252
      %v379 = vunpack.c.l.b16 %v253
      %v380 = vunpack.c.l.b16 %v254
      %v381 = vunpack.c.l.b16 %v255
      %v382 = vunpack.c.l.b16 %v256
      %v383 = vunpack.c.l.b16 %v257
      %v384 = vunpack.c.l.b16 %v258
      %v385 = vunpack.c.l.b16 %v259
      %v386 = vunpack.c.l.b16 %v260
      %v387 = vunpack.c.l.b16 %v261
      %v388 = vunpack.c.l.b16 %v262
      %v389 = vpack.c.b16 %v354, %v353
      %v390 = vpack.c.b16 %v356, %v355
      %v391 = vpack.c.b16 %v358, %v357
      %v392 = vpack.c.b16 %v360, %v359
      %v393 = vpack.c.b16 %v362, %v361
      %v394 = vpack.c.b16 %v364, %v363
      %v395 = vpack.c.b16 %v366, %v365
      %v396 = vpack.c.b16 %v368, %v367
      %v397 = vpack.c.b16 %v370, %v369
      %v398 = vpack.c.b16 %v372, %v371
      %v399 = vpack.c.b16 %v374, %v373
      %v400 = vpack.c.b16 %v376, %v375
      %v401 = vpack.c.b16 %v378, %v377
      %v402 = vpack.c.b16 %v380, %v379
      %v403 = vpack.c.b16 %v382, %v381
      %v404 = vpack.c.b16 %v384, %v383
      %v405 = vpack.c.b16 %v386, %v385
      %v406 = vpack.c.b16 %v388, %v387
      %vm425 = vcmask 261120
      %v427 = vsel %vm425, %v309, 0
      %v430 = vsel %vm425, %v312, 0
      %432 = vmatpush.bf16.msra.mxu0 %v396
      %433 = vmatpush.bf16.msra.mxu0 %v395
      %434 = vmatpush.bf16.msra.mxu0 %v394
      %435 = vmatpush.bf16.msra.mxu0 %v393
      %436 = vmatpush.bf16.msra.mxu0 %v392
      %437 = vmatpush.bf16.msra.mxu0 %v391
      %438 = vmatpush.bf16.msra.mxu0 %v390
      %439 = vmatpush.bf16.msra.mxu0 %v389
      %440 = vmatmul.bf16.gmra.mxu0 %v307
      %v441 = vpop.f32.mrf.mxu0
      %v442 = vadd.f32 %v270, %v441
      %v443 = vpop.f32.mrf.mxu0
      %v444 = vadd.f32 %v275, %v443
      %445 = vmatmul.bf16.gmra.mxu0 %v310
      %v446 = vpop.f32.mrf.mxu0
      %v447 = vadd.f32 %v280, %v446
      %v448 = vpop.f32.mrf.mxu0
      %v449 = vadd.f32 %v285, %v448
      %450 = vdwg.mxu0
      %451 = vmatpush.bf16.msra.mxu0 %v404
      %452 = vmatpush.bf16.msra.mxu0 %v403
      %453 = vmatpush.bf16.msra.mxu0 %v402
      %454 = vmatpush.bf16.msra.mxu0 %v401
      %455 = vmatpush.bf16.msra.mxu0 %v400
      %456 = vmatpush.bf16.msra.mxu0 %v399
      %457 = vmatpush.bf16.msra.mxu0 %v398
      %458 = vmatpush.bf16.msra.mxu0 %v397
      %459 = vmatmul.bf16.gmra.mxu0 %v308
      %v460 = vpop.f32.mrf.mxu0
      %v461 = vadd.f32 %v442, %v460
      %v462 = vpop.f32.mrf.mxu0
      %v463 = vadd.f32 %v444, %v462
      %464 = vmatmul.bf16.gmra.mxu0 %v311
      %v465 = vpop.f32.mrf.mxu0
      %v466 = vadd.f32 %v447, %v465
      %v467 = vpop.f32.mrf.mxu0
      %v468 = vadd.f32 %v449, %v467
      %469 = vdwg.mxu0
      %470 = vmatpush.bf16.msra.mxu0 0
      %471 = vmatpush.bf16.msra.mxu0 0
      %472 = vmatpush.bf16.msra.mxu0 0
      %473 = vmatpush.bf16.msra.mxu0 0
      %474 = vmatpush.bf16.msra.mxu0 0
      %475 = vmatpush.bf16.msra.mxu0 0
      %476 = vmatpush.bf16.msra.mxu0 %v406
      %477 = vmatpush.bf16.msra.mxu0 %v405
      %478 = vmatmul.bf16.gmra.mxu0 %v427
      %v479 = vpop.f32.mrf.mxu0
      %v480 = vadd.f32 %v461, %v479
      %v481 = vpop.f32.mrf.mxu0
      %v482 = vadd.f32 %v463, %v481
      %483 = vmatmul.bf16.gmra.mxu0 %v430
      %v484 = vpop.f32.mrf.mxu0
      %v485 = vadd.f32 %v466, %v484
      %v486 = vpop.f32.mrf.mxu0
      %v487 = vadd.f32 %v468, %v486
      %488 = vdwg.mxu0
      %vm489 = vcmask 130048
      %v490 = vsel %vm489, %v480, 0.0
      %491 = vadd.xlane.f32.xlu0 %v490
      %v492 = vpop.xlane.xlu0 %491
      %v493 = vsel %vm489, %v482, 0.0
      %494 = vadd.xlane.f32.xlu0 %v493
      %v495 = vpop.xlane.xlu0 %494
      %v496 = vsel %vm489, %v485, 0.0
      %497 = vadd.xlane.f32.xlu0 %v496
      %v498 = vpop.xlane.xlu0 %497
      %v499 = vsel %vm489, %v487, 0.0
      %500 = vadd.xlane.f32.xlu0 %v499
      %v501 = vpop.xlane.xlu0 %500
      %v502 = vrcp.pop 16.0
      %v503 = vmul.f32 16.0, %v502
      %v504 = vsub.f32 1.0, %v503
      %v505 = vmul.f32 %v502, %v504
      %v506 = vadd.f32 %v502, %v505
      %vm507 = vweird.f32 %v502
      %v508 = vsel %vm507, %v502, %v506
      %v509 = vmul.f32 %v492, %v508
      %v510 = vmul.f32 %v495, %v508
      %v511 = vmul.f32 %v498, %v508
      %v512 = vmul.f32 %v501, %v508
      %v513 = vsub.f32 %v480, %v509
      %v514 = vsub.f32 %v482, %v510
      %v515 = vsub.f32 %v485, %v511
      %v516 = vsub.f32 %v487, %v512
      %v517 = vmul.f32 %v513, %v513
      %v518 = vmul.f32 %v514, %v514
      %v519 = vmul.f32 %v515, %v515
      %v520 = vmul.f32 %v516, %v516
      %v521 = vsel %vm489, %v517, 0.0
      %522 = vadd.xlane.f32.xlu0 %v521
      %v523 = vpop.xlane.xlu0 %522
      %v524 = vsel %vm489, %v518, 0.0
      %525 = vadd.xlane.f32.xlu0 %v524
      %v526 = vpop.xlane.xlu0 %525
      %v527 = vsel %vm489, %v519, 0.0
      %528 = vadd.xlane.f32.xlu0 %v527
      %v529 = vpop.xlane.xlu0 %528
      %v530 = vsel %vm489, %v520, 0.0
      %531 = vadd.xlane.f32.xlu0 %v530
      %v532 = vpop.xlane.xlu0 %531
      %v533 = vmul.f32 %v523, %v508
      %v534 = vmul.f32 %v526, %v508
      %v535 = vmul.f32 %v529, %v508
      %v536 = vmul.f32 %v532, %v508
      %v537 = vadd.f32 %v533, 1e-05
      %v538 = vadd.f32 %v534, 1e-05
      %v539 = vadd.f32 %v535, 1e-05
      %v540 = vadd.f32 %v536, 1e-05
      %v541 = vrsqrt.pop %v537
      %v542 = vmul.f32 %v541, %v537
      %v543 = vmul.f32 %v542, %v541
      %v544 = vmul.f32 0.5, %v543
      %v545 = vsub.f32 1.5, %v544
      %v546 = vmul.f32 %v541, %v545
      %vm547 = vweird.f32 %v537
      %vm548 = vweird.f32 %v541
      %vm549 = vmor %vm547, %vm548
      %v550 = vsel %vm549, %v541, %v546
      %v551 = vrsqrt.pop %v538
      %v552 = vmul.f32 %v551, %v538
      %v553 = vmul.f32 %v552, %v551
      %v554 = vmul.f32 0.5, %v553
      %v555 = vsub.f32 1.5, %v554
      %v556 = vmul.f32 %v551, %v555
      %vm557 = vweird.f32 %v538
      %vm558 = vweird.f32 %v551
      %vm559 = vmor %vm557, %vm558
      %v560 = vsel %vm559, %v551, %v556
      %v561 = vrsqrt.pop %v539
      %v562 = vmul.f32 %v561, %v539
      %v563 = vmul.f32 %v562, %v561
      %v564 = vmul.f32 0.5, %v563
      %v565 = vsub.f32 1.5, %v564
      %v566 = vmul.f32 %v561, %v565
      %vm567 = vweird.f32 %v539
      %vm568 = vweird.f32 %v561
      %vm569 = vmor %vm567, %vm568
      %v570 = vsel %vm569, %v561, %v566
      %v571 = vrsqrt.pop %v540
      %v572 = vmul.f32 %v571, %v540
      %v573 = vmul.f32 %v572, %v571
      %v574 = vmul.f32 0.5, %v573
      %v575 = vsub.f32 1.5, %v574
      %v576 = vmul.f32 %v571, %v575
      %vm577 = vweird.f32 %v540
      %vm578 = vweird.f32 %v571
      %vm579 = vmor %vm577, %vm578
      %v580 = vsel %vm579, %v571, %v576
      %v581 = vmul.f32 %v513, %v550
      %v582 = vmul.f32 %v514, %v560
      %v583 = vmul.f32 %v515, %v570
      %v584 = vmul.f32 %v516, %v580
      %v585 = vld [vmem:[%s212] sm:$0xff]
      %v586 = vld [vmem:[%s212 + $0x8] sm:$0xff]
      %v587 = vld [vmem:[%s212 + $0x10] sm:$0xff]
      %v588 = vld [vmem:[%s212 + $0x18] sm:$0xff]
      %v589 = vadd.f32 %v581, %v585
      %v590 = vadd.f32 %v582, %v586
      %v591 = vadd.f32 %v583, %v587
      %v592 = vadd.f32 %v584, %v588
      %593 = vst.msk [vmem:[%s217] sm:$0xff] %vm489, %v589
      %594 = vst.msk [vmem:[%s217 + $0x8] sm:$0xff] %vm489, %v590
      %595 = vst.msk [vmem:[%s217 + $0x10] sm:$0xff] %vm489, %v591
      %596 = vst.msk [vmem:[%s217 + $0x18] sm:$0xff] %vm489, %v592
      %p597 = scmp.lt.s32.totalorder %s15, 1
      %s598 = scalar_select %p597, %s15, 1
      %s599 = smul.addr %s598, 4
      %s600 = smul.addr %s599, 8
      %s601 = scalar_lea.vmem %s4, %s600
      // Predicated region
      $region37: #{cyclegan_generator.16} parent=35 // pred_check
        %p602 = pneg %p127
      $region38: #{cyclegan_generator.16} parent=35 // pred_check_branch
        %604 = sbr.rel (%p602) target = $region40
      $region39: #{cyclegan_generator.16} parent=35 // pred_region
        _
      $region40: #{cyclegan_generator.16} parent=35 // pred_fallthru
        _
    $region36: #{cyclegan_generator.16} parent=5 // pred_fallthru
      _
    %p605 = scmp.le.s32.totalorder 2, %s10
    // Predicated region
    $region41: #{cyclegan_generator.16} parent=5 // pred_check
      %p606 = pneg %p605
    $region42: #{cyclegan_generator.16} parent=5 // pred_check_branch
      %608 = sbr.rel (%p606) target = $region44
    $region43: #{cyclegan_generator.16} parent=5 // pred_region
      %s609 = ssub.s32 %s10, 2
      // Predicated region
      $region45: #{cyclegan_generator.16} parent=43 // pred_check
        %p610 = pneg %p133
      $region46: #{cyclegan_generator.16} parent=43 // pred_check_branch
        %612 = sbr.rel (%p610) target = $region48
      $region47: #{cyclegan_generator.16} parent=43 // pred_region
        %p613 = scmp.lt.s32.totalorder %s16, 1
        %s614 = scalar_select %p613, %s16, 1
        %s615 = smul.addr %s614, 4
        %s616 = smul.addr %s615, 8
        %s617 = scalar_lea.vmem %s4, %s616
      $region48: #{cyclegan_generator.16} parent=43 // pred_fallthru
        _
    $region44: #{cyclegan_generator.16} parent=5 // pred_fallthru
      _
  $region6: #{cyclegan_generator.16} parent=0 // loop_footer
    %s14 = sadd.s32 1, %s10
  $region7: #{cyclegan_generator.16} parent=0 // loop_footer_branch
    %9 = sbr.rel target = $region3
  $region8: #{cyclegan_generator.16} parent=0 // loop_exit
    _

// kernel: tile.13
$region0: #{tile.13}
  #allocation0 [shape = 's32[1]{0}', space=sflag, size = 0x4, scoped, tag = 'scoped memory for tile.13']
  %s0 = inlined_call_operand.vmem [shape: f32[16], index: 0, kind: input, shape index: {}]
  %s1 = inlined_call_operand.vmem [shape: f32[4,16], index: 1, kind: output, shape index: {}]
  // Predicated region
  $region2: #{tile.13} parent=0 // pred_check
    _
  $region3: #{tile.13} parent=0 // pred_check_branch
    %3 = sbr.rel (0) target = $region5
  $region4: #{tile.13} parent=0 // pred_region
    _
  $region5: #{tile.13} parent=0 // pred_fallthru
    _
  %v4 = vld [vmem:[%s0] ss:$0 sm:$0xff]
  %5 = vst [vmem:[%s1] sm:$0xf] %v4

// kernel: tile.1
$region0: #{tile.1}
  %s0 = inlined_call_operand.vmem [shape: f32[4,16], index: 0, kind: input, shape index: {}]
  %s1 = inlined_call_operand.vmem [shape: f32[64,1], index: 1, kind: output, shape index: {}]
  $region1: #{tile.1} parent=0
    #allocation0 [shape = 'u8[4096]{0}', space=vmem, size = 0x1000, scoped, tag = 'scoped mem for input reshape']
    %s3 = ssub.s32 16, 1
    %v4 = vld [vmem:[%s0] sm:%s3]
    %5 = vst [vmem:[#allocation0] sm:%s3] %v4
    %v6 = vld [vmem:[#allocation0] sm:$0xf]
    %vm7 = vcmask 7168
    %8 = vst.msk [vmem:[%s1] ss:$16 sm:$0x3] %vm7, %v6
    %9 = vst.msk [vmem:[%s1] ss:$16 sm:$0xc] %vm7, %v6
    %v10 = vld [vmem:[#allocation0] sm:$0xf]
    %11 = vrot.lane.b32.xlu0 %v10, 127
    %v12 = vpop.permute.xlu0 %11
    %vm13 = vcmask 7168
    %s14 = scalar_lea.vmem %s1, 1
    %15 = vst.msk [vmem:[%s14] ss:$16 sm:$0x3] %vm13, %v12
    %s16 = scalar_lea.vmem %s1, 1
    %17 = vst.msk [vmem:[%s16] ss:$16 sm:$0xc] %vm13, %v12
    %v18 = vld [vmem:[#allocation0] sm:$0xf]
    %19 = vrot.lane.b32.xlu0 %v18, 126
    %v20 = vpop.permute.xlu0 %19
    %vm21 = vcmask 7168
    %s22 = scalar_lea.vmem %s1, 2
    %23 = vst.msk [vmem:[%s22] ss:$16 sm:$0x3] %vm21, %v20
    %s24 = scalar_lea.vmem %s1, 2
    %25 = vst.msk [vmem:[%s24] ss:$16 sm:$0xc] %vm21, %v20
    %v26 = vld [vmem:[#allocation0] sm:$0xf]
    %27 = vrot.lane.b32.xlu0 %v26, 125
    %v28 = vpop.permute.xlu0 %27
    %vm29 = vcmask 7168
    %s30 = scalar_lea.vmem %s1, 3
    %31 = vst.msk [vmem:[%s30] ss:$16 sm:$0x3] %vm29, %v28
    %s32 = scalar_lea.vmem %s1, 3
    %33 = vst.msk [vmem:[%s32] ss:$16 sm:$0xc] %vm29, %v28
    %v34 = vld [vmem:[#allocation0] sm:$0xf]
    %35 = vrot.lane.b32.xlu0 %v34, 124
    %v36 = vpop.permute.xlu0 %35
    %vm37 = vcmask 7168
    %s38 = scalar_lea.vmem %s1, 4
    %39 = vst.msk [vmem:[%s38] ss:$16 sm:$0x3] %vm37, %v36
    %s40 = scalar_lea.vmem %s1, 4
    %41 = vst.msk [vmem:[%s40] ss:$16 sm:$0xc] %vm37, %v36
    %v42 = vld [vmem:[#allocation0] sm:$0xf]
    %43 = vrot.lane.b32.xlu0 %v42, 123
    %v44 = vpop.permute.xlu0 %43
    %vm45 = vcmask 7168
    %s46 = scalar_lea.vmem %s1, 5
    %47 = vst.msk [vmem:[%s46] ss:$16 sm:$0x3] %vm45, %v44
    %s48 = scalar_lea.vmem %s1, 5
    %49 = vst.msk [vmem:[%s48] ss:$16 sm:$0xc] %vm45, %v44
    %v50 = vld [vmem:[#allocation0] sm:$0xf]
    %51 = vrot.lane.b32.xlu0 %v50, 122
    %v52 = vpop.permute.xlu0 %51
    %vm53 = vcmask 7168
    %s54 = scalar_lea.vmem %s1, 6
    %55 = vst.msk [vmem:[%s54] ss:$16 sm:$0x3] %vm53, %v52
    %s56 = scalar_lea.vmem %s1, 6
    %57 = vst.msk [vmem:[%s56] ss:$16 sm:$0xc] %vm53, %v52
    %v58 = vld [vmem:[#allocation0] sm:$0xf]
    %59 = vrot.lane.b32.xlu0 %v58, 121
    %v60 = vpop.permute.xlu0 %59
    %vm61 = vcmask 7168
    %s62 = scalar_lea.vmem %s1, 7
    %63 = vst.msk [vmem:[%s62] ss:$16 sm:$0x3] %vm61, %v60
    %s64 = scalar_lea.vmem %s1, 7
    %65 = vst.msk [vmem:[%s64] ss:$16 sm:$0xc] %vm61, %v60
    %v66 = vld [vmem:[#allocation0] sm:$0xf]
    %67 = vrot.lane.b32.xlu0 %v66, 120
    %v68 = vpop.permute.xlu0 %67
    %vm69 = vcmask 7168
    %s70 = scalar_lea.vmem %s1, 8
    %71 = vst.msk [vmem:[%s70] ss:$16 sm:$0x3] %vm69, %v68
    %s72 = scalar_lea.vmem %s1, 8
    %73 = vst.msk [vmem:[%s72] ss:$16 sm:$0xc] %vm69, %v68
    %v74 = vld [vmem:[#allocation0] sm:$0xf]
    %75 = vrot.lane.b32.xlu0 %v74, 119
    %v76 = vpop.permute.xlu0 %75
    %vm77 = vcmask 7168
    %s78 = scalar_lea.vmem %s1, 9
    %79 = vst.msk [vmem:[%s78] ss:$16 sm:$0x3] %vm77, %v76
    %s80 = scalar_lea.vmem %s1, 9
    %81 = vst.msk [vmem:[%s80] ss:$16 sm:$0xc] %vm77, %v76
    %v82 = vld [vmem:[#allocation0] sm:$0xf]
    %83 = vrot.lane.b32.xlu0 %v82, 118
    %v84 = vpop.permute.xlu0 %83
    %vm85 = vcmask 7168
    %s86 = scalar_lea.vmem %s1, 10
    %87 = vst.msk [vmem:[%s86] ss:$16 sm:$0x3] %vm85, %v84
    %s88 = scalar_lea.vmem %s1, 10
    %89 = vst.msk [vmem:[%s88] ss:$16 sm:$0xc] %vm85, %v84
    %v90 = vld [vmem:[#allocation0] sm:$0xf]
    %91 = vrot.lane.b32.xlu0 %v90, 117
    %v92 = vpop.permute.xlu0 %91
    %vm93 = vcmask 7168
    %s94 = scalar_lea.vmem %s1, 11
    %95 = vst.msk [vmem:[%s94] ss:$16 sm:$0x3] %vm93, %v92
    %s96 = scalar_lea.vmem %s1, 11
    %97 = vst.msk [vmem:[%s96] ss:$16 sm:$0xc] %vm93, %v92
    %v98 = vld [vmem:[#allocation0] sm:$0xf]
    %99 = vrot.lane.b32.xlu0 %v98, 116
    %v100 = vpop.permute.xlu0 %99
    %vm101 = vcmask 7168
    %s102 = scalar_lea.vmem %s1, 12
    %103 = vst.msk [vmem:[%s102] ss:$16 sm:$0x3] %vm101, %v100
    %s104 = scalar_lea.vmem %s1, 12
    %105 = vst.msk [vmem:[%s104] ss:$16 sm:$0xc] %vm101, %v100
    %v106 = vld [vmem:[#allocation0] sm:$0xf]
    %107 = vrot.lane.b32.xlu0 %v106, 115
    %v108 = vpop.permute.xlu0 %107
    %vm109 = vcmask 7168
    %s110 = scalar_lea.vmem %s1, 13
    %111 = vst.msk [vmem:[%s110] ss:$16 sm:$0x3] %vm109, %v108
    %s112 = scalar_lea.vmem %s1, 13
    %113 = vst.msk [vmem:[%s112] ss:$16 sm:$0xc] %vm109, %v108
    %v114 = vld [vmem:[#allocation0] sm:$0xf]
    %115 = vrot.lane.b32.xlu0 %v114, 114
    %v116 = vpop.permute.xlu0 %115
    %vm117 = vcmask 7168
    %s118 = scalar_lea.vmem %s1, 14
    %119 = vst.msk [vmem:[%s118] ss:$16 sm:$0x3] %vm117, %v116
    %s120 = scalar_lea.vmem %s1, 14
    %121 = vst.msk [vmem:[%s120] ss:$16 sm:$0xc] %vm117, %v116
    %v122 = vld [vmem:[#allocation0] sm:$0xf]
    %123 = vrot.lane.b32.xlu0 %v122, 113
    %v124 = vpop.permute.xlu0 %123
    %vm125 = vcmask 7168
    %s126 = scalar_lea.vmem %s1, 15
    %127 = vst.msk [vmem:[%s126] ss:$16 sm:$0x3] %vm125, %v124
    %s128 = scalar_lea.vmem %s1, 15
    %129 = vst.msk [vmem:[%s128] ss:$16 sm:$0xc] %vm125, %v124

// kernel: cyclegan_generator.21
$region0: #{cyclegan_generator.21}
  #allocation0 [shape = 'u32[]', space=smem, size = 0x4, offset = 0x4, fixed_abs, tag = 'smem constant byte address 0x4 - core index']
  #allocation1 [shape = 'u32[72,128]{1,0:T(1,128)}', space=vmem, size = 0x9000, scoped, tag = 'internal scratch']
  %s0 = inlined_call_operand.vmem [shape: bf16[64,128], index: 0, kind: input, shape index: {}]
  %s1 = inlined_call_operand.vmem [shape: f32[64,1], index: 1, kind: input, shape index: {}]
  %s2 = inlined_call_operand.vmem [shape: bf16[2,128,16], index: 2, kind: input, shape index: {}]
  %s3 = inlined_call_operand.vmem [shape: f32[2,64,16], index: 3, kind: output, shape index: {}]
  %s4 = sld [smem:[#allocation0]]
  $region45: #{cyclegan_generator.21} parent=0
    _
  %s6 = ssub.s32 1, %s4
  %s7 = scalar_select 0, %s6, %s4
  loop: start=0, step=1, limit=4
  $region2: #{cyclegan_generator.21} parent=0 // loop_pre_header
    _
  $region3: #{cyclegan_generator.21} parent=0 // loop_header
    %s9 = sphi 0, %s13
    %p10 = scmp.ge.s32.totalorder %s9, 4
    %s17 = sphi 0, %s17
    %s19 = sphi 0, %s17
    %s20 = sphi 0, %s19
    %s34 = sphi 0, %s20
    %s38 = sphi 0, %s38
    %s40 = sphi 0, %s38
    %s41 = sphi 0, %s40
    %s55 = sphi 0, %s41
    %s61 = sphi 0, %s63
    %s64 = sphi 0, %s61
    %s65 = sphi 0, %s64
    %s81 = sphi 0, %s65
    %s87 = sphi 0, %s89
    %s90 = sphi 0, %s87
    %s91 = sphi 0, %s90
    %s107 = sphi 0, %s91
  $region4: #{cyclegan_generator.21} parent=0 // loop_header_branch
    %12 = sbr.rel (%p10) target = $region8
  $region5: #{cyclegan_generator.21} parent=0 // loop_body
    %s14 = ssub.s32 %s9, 1
    %s15 = ssub.s32 %s9, 2
    %s16 = sadd.s32 %s9, 1
    %s18 = sadd.s32 %s17, 1
    %p21 = scmp.eq.s32.totalorder %s9, 1
    %p22 = scmp.ne.s32.totalorder %s17, %s19
    %p23 = scmp.eq.s32.totalorder %s9, 0
    %p24 = por %p22, %p23
    %p25 = scmp.ne.s32.totalorder %s17, %s19
    %p26 = scmp.eq.s32.totalorder %s14, 1
    %p27 = por %p25, %p26
    %p28 = scmp.ne.s32.totalorder %s19, %s20
    %p29 = scmp.eq.s32.totalorder %s14, 0
    %p30 = por %p28, %p29
    %p31 = scmp.ne.s32.totalorder %s19, %s20
    %p32 = scmp.eq.s32.totalorder %s15, 1
    %p33 = por %p31, %p32
    %p35 = scmp.ne.s32.totalorder %s20, %s34
    %p36 = scmp.eq.s32.totalorder %s15, 0
    %p37 = por %p35, %p36
    %s39 = sadd.s32 %s38, 1
    %p42 = scmp.eq.s32.totalorder %s9, 1
    %p43 = scmp.ne.s32.totalorder %s38, %s40
    %p44 = scmp.eq.s32.totalorder %s9, 0
    %p45 = por %p43, %p44
    %p46 = scmp.ne.s32.totalorder %s38, %s40
    %p47 = scmp.eq.s32.totalorder %s14, 1
    %p48 = por %p46, %p47
    %p49 = scmp.ne.s32.totalorder %s40, %s41
    %p50 = scmp.eq.s32.totalorder %s14, 0
    %p51 = por %p49, %p50
    %p52 = scmp.ne.s32.totalorder %s40, %s41
    %p53 = scmp.eq.s32.totalorder %s15, 1
    %p54 = por %p52, %p53
    %p56 = scmp.ne.s32.totalorder %s41, %s55
    %p57 = scmp.eq.s32.totalorder %s15, 0
    %p58 = por %p56, %p57
    %s59 = ssub.s32 %s9, %s16
    %p60 = scmp.eq.s32.totalorder %s59, 0
    %s62 = sadd.s32 %s61, 1
    %s63 = scalar_select %p60, %s61, %s62
    %p66 = pneg %p60
    %p67 = scmp.eq.s32.totalorder %s9, 1
    %p68 = por %p66, %p67
    %p69 = scmp.ne.s32.totalorder %s61, %s64
    %p70 = scmp.eq.s32.totalorder %s9, 0
    %p71 = por %p69, %p70
    %p72 = scmp.ne.s32.totalorder %s61, %s64
    %p73 = scmp.eq.s32.totalorder %s14, 1
    %p74 = por %p72, %p73
    %p75 = scmp.ne.s32.totalorder %s64, %s65
    %p76 = scmp.eq.s32.totalorder %s14, 0
    %p77 = por %p75, %p76
    %p78 = scmp.ne.s32.totalorder %s64, %s65
    %p79 = scmp.eq.s32.totalorder %s15, 1
    %p80 = por %p78, %p79
    %p82 = scmp.ne.s32.totalorder %s65, %s81
    %p83 = scmp.eq.s32.totalorder %s15, 0
    %p84 = por %p82, %p83
    %s85 = ssub.s32 %s9, %s16
    %p86 = scmp.eq.s32.totalorder %s85, 0
    %s88 = sadd.s32 %s87, 1
    %s89 = scalar_select %p86, %s87, %s88
    %p92 = pneg %p86
    %p93 = scmp.eq.s32.totalorder %s9, 1
    %p94 = por %p92, %p93
    %p95 = scmp.ne.s32.totalorder %s87, %s90
    %p96 = scmp.eq.s32.totalorder %s9, 0
    %p97 = por %p95, %p96
    %p98 = scmp.ne.s32.totalorder %s87, %s90
    %p99 = scmp.eq.s32.totalorder %s14, 1
    %p100 = por %p98, %p99
    %p101 = scmp.ne.s32.totalorder %s90, %s91
    %p102 = scmp.eq.s32.totalorder %s14, 0
    %p103 = por %p101, %p102
    %p104 = scmp.ne.s32.totalorder %s90, %s91
    %p105 = scmp.eq.s32.totalorder %s15, 1
    %p106 = por %p104, %p105
    %p108 = scmp.ne.s32.totalorder %s91, %s107
    %p109 = scmp.eq.s32.totalorder %s15, 0
    %p110 = por %p108, %p109
    %p111 = scmp.le.s32.totalorder 1, %s9
    %p112 = scmp.lt.s32.totalorder %s9, 3
    %p113 = pnand %p111, %p112
    %p114 = pneg %p113
    // Predicated region
    $region9: #{cyclegan_generator.21} parent=5 // pred_check
      _
    $region10: #{cyclegan_generator.21} parent=5 // pred_check_branch
      %116 = sbr.rel (%p113) target = $region12
    $region11: #{cyclegan_generator.21} parent=5 // pred_region
      %s117 = ssub.s32 %s9, 1
      // Predicated region
      $region13: #{cyclegan_generator.21} parent=11 // pred_check
        %p118 = pneg %p30
      $region14: #{cyclegan_generator.21} parent=11 // pred_check_branch
        %120 = sbr.rel (%p118) target = $region16
      $region15: #{cyclegan_generator.21} parent=11 // pred_region
        _
      $region16: #{cyclegan_generator.21} parent=11 // pred_fallthru
        _
      // Predicated region
      $region17: #{cyclegan_generator.21} parent=11 // pred_check
        %p121 = pneg %p51
      $region18: #{cyclegan_generator.21} parent=11 // pred_check_branch
        %123 = sbr.rel (%p121) target = $region20
      $region19: #{cyclegan_generator.21} parent=11 // pred_region
        _
      $region20: #{cyclegan_generator.21} parent=11 // pred_fallthru
        _
    $region12: #{cyclegan_generator.21} parent=5 // pred_fallthru
      _
    %p124 = scmp.lt.s32.totalorder %s9, 2
    // Predicated region
    $region21: #{cyclegan_generator.21} parent=5 // pred_check
      %p125 = pneg %p124
    $region22: #{cyclegan_generator.21} parent=5 // pred_check_branch
      %127 = sbr.rel (%p125) target = $region24
    $region23: #{cyclegan_generator.21} parent=5 // pred_region
      // Predicated region
      $region25: #{cyclegan_generator.21} parent=23 // pred_check
        %p128 = pneg %p71
      $region26: #{cyclegan_generator.21} parent=23 // pred_check_branch
        %130 = sbr.rel (%p128) target = $region28
      $region27: #{cyclegan_generator.21} parent=23 // pred_region
        %p131 = scmp.lt.s32.totalorder %s9, 1
        %s132 = scalar_select %p131, %s9, 1
        %s133 = smul.addr %s132, 16
        %s134 = smul.addr %s133, 4
        %s135 = scalar_lea.vmem %s2, %s134
      $region28: #{cyclegan_generator.21} parent=23 // pred_fallthru
        _
    $region24: #{cyclegan_generator.21} parent=5 // pred_fallthru
      _
    %p136 = scmp.le.s32.totalorder 1, %s9
    %p137 = scmp.lt.s32.totalorder %s9, 3
    %p138 = pnand %p136, %p137
    %p139 = pneg %p138
    // Predicated region
    $region29: #{cyclegan_generator.21} parent=5 // pred_check
      _
    $region30: #{cyclegan_generator.21} parent=5 // pred_check_branch
      %141 = sbr.rel (%p138) target = $region32
    $region31: #{cyclegan_generator.21} parent=5 // pred_region
      %s142 = ssub.s32 %s9, 1
      %p143 = pneg %p30
      %p144 = pneg %p27
      %p145 = pneg %p51
      %p146 = pneg %p48
      %p147 = scmp.lt.s32.totalorder %s14, 1
      %s148 = scalar_select %p147, %s14, 1
      %s149 = smul.addr %s148, 16
      %s150 = smul.addr %s149, 4
      %s151 = scalar_lea.vmem %s2, %s150
      %p152 = pneg %p77
      %p153 = pneg %p74
      %p154 = pneg %p103
      %p155 = pneg %p100
      %p156 = scmp.lt.s32.totalorder %s14, 1
      %s157 = scalar_select %p156, %s14, 1
      %s158 = smul.addr %s157, 8
      %s159 = smul.addr %s158, 8
      %s160 = scalar_lea.vmem %s3, %s159
      %p161 = scmp.lt.s32.totalorder %s14, 1
      %s162 = scalar_select %p161, %s14, 1
      %s163 = smul.addr %s162, 16
      %s164 = smul.addr %s163, 4
      %s165 = scalar_lea.vmem %s2, %s164
      %p166 = scmp.lt.s32.totalorder %s14, 1
      %s167 = scalar_select %p166, %s14, 1
      %s168 = smul.addr %s167, 8
      %s169 = smul.addr %s168, 8
      %s170 = scalar_lea.vmem %s3, %s169
      %v171 = vld [vmem:[%s0] sm:$0xf]
      %v172 = vld [vmem:[%s0 + $0x4] sm:$0xf]
      %v173 = vld [vmem:[%s0 + $0x8] sm:$0xf]
      %v174 = vld [vmem:[%s0 + $0xc] sm:$0xf]
      %v175 = vld [vmem:[%s0 + $0x10] sm:$0xf]
      %v176 = vld [vmem:[%s0 + $0x14] sm:$0xf]
      %v177 = vld [vmem:[%s0 + $0x18] sm:$0xf]
      %v178 = vld [vmem:[%s0 + $0x1c] sm:$0xf]
      %v179 = vld [vmem:[%s165] sm:$0xf]
      %v180 = vld [vmem:[%s165 + $0x4] sm:$0xf]
      %v181 = vld [vmem:[%s165 + $0x8] sm:$0xf]
      %v182 = vld [vmem:[%s165 + $0xc] sm:$0xf]
      %v183 = vld [vmem:[%s165 + $0x10] sm:$0xf]
      %v184 = vld [vmem:[%s165 + $0x14] sm:$0xf]
      %v185 = vld [vmem:[%s165 + $0x18] sm:$0xf]
      %v186 = vld [vmem:[%s165 + $0x1c] sm:$0xf]
      %v187 = vld [vmem:[%s165 + $0x20] sm:$0xf]
      %v188 = vld [vmem:[%s165 + $0x24] sm:$0xf]
      %v189 = vld [vmem:[%s165 + $0x28] sm:$0xf]
      %v190 = vld [vmem:[%s165 + $0x2c] sm:$0xf]
      %v191 = vld [vmem:[%s165 + $0x30] sm:$0xf]
      %v192 = vld [vmem:[%s165 + $0x34] sm:$0xf]
      %v193 = vld [vmem:[%s165 + $0x38] sm:$0xf]
      %v194 = vld [vmem:[%s165 + $0x3c] sm:$0xf]
      %v195 = vld [vmem:[%s1] sm:$0xff]
      %v196 = vld [vmem:[%s1 + $0x8] sm:$0xff]
      %v197 = vld [vmem:[%s1 + $0x10] sm:$0xff]
      %v198 = vld [vmem:[%s1 + $0x18] sm:$0xff]
      %v199 = vld [vmem:[%s1 + $0x20] sm:$0xff]
      %v200 = vld [vmem:[%s1 + $0x28] sm:$0xff]
      %v201 = vld [vmem:[%s1 + $0x30] sm:$0xff]
      %v202 = vld [vmem:[%s1 + $0x38] sm:$0xff]
      %204 = vset.pattern.permute.xlu0 0
      %205 = vperm.xlu0 %204, %v195
      %v206 = vpop.permute.xlu0 %205
      %209 = vset.pattern.permute.xlu0 0
      %210 = vperm.xlu0 %209, %v196
      %v211 = vpop.permute.xlu0 %210
      %214 = vset.pattern.permute.xlu0 0
      %215 = vperm.xlu0 %214, %v197
      %v216 = vpop.permute.xlu0 %215
      %219 = vset.pattern.permute.xlu0 0
      %220 = vperm.xlu0 %219, %v198
      %v221 = vpop.permute.xlu0 %220
      %224 = vset.pattern.permute.xlu0 0
      %225 = vperm.xlu0 %224, %v199
      %v226 = vpop.permute.xlu0 %225
      %229 = vset.pattern.permute.xlu0 0
      %230 = vperm.xlu0 %229, %v200
      %v231 = vpop.permute.xlu0 %230
      %234 = vset.pattern.permute.xlu0 0
      %235 = vperm.xlu0 %234, %v201
      %v236 = vpop.permute.xlu0 %235
      %239 = vset.pattern.permute.xlu0 0
      %240 = vperm.xlu0 %239, %v202
      %v241 = vpop.permute.xlu0 %240
      %v251 = vunpack.c.l.b16 %v171
      %v252 = vunpack.c.l.b16 %v172
      %v253 = vunpack.c.l.b16 %v173
      %v254 = vunpack.c.l.b16 %v174
      %v255 = vunpack.c.l.b16 %v175
      %v256 = vunpack.c.l.b16 %v176
      %v257 = vunpack.c.l.b16 %v177
      %v258 = vunpack.c.l.b16 %v178
      %v259 = vpack.c.b16 %v252, %v251
      %v260 = vpack.c.b16 %v254, %v253
      %v261 = vpack.c.b16 %v256, %v255
      %v262 = vpack.c.b16 %v258, %v257
      %v283 = vunpack.c.l.b16 %v179
      %v284 = vunpack.c.l.b16 %v180
      %v285 = vunpack.c.l.b16 %v181
      %v286 = vunpack.c.l.b16 %v182
      %v287 = vunpack.c.l.b16 %v183
      %v288 = vunpack.c.l.b16 %v184
      %v289 = vunpack.c.l.b16 %v185
      %v290 = vunpack.c.l.b16 %v186
      %v291 = vunpack.c.l.b16 %v187
      %v292 = vunpack.c.l.b16 %v188
      %v293 = vunpack.c.l.b16 %v189
      %v294 = vunpack.c.l.b16 %v190
      %v295 = vunpack.c.l.b16 %v191
      %v296 = vunpack.c.l.b16 %v192
      %v297 = vunpack.c.l.b16 %v193
      %v298 = vunpack.c.l.b16 %v194
      %v299 = vpack.c.b16 %v284, %v283
      %v300 = vpack.c.b16 %v286, %v285
      %v301 = vpack.c.b16 %v288, %v287
      %v302 = vpack.c.b16 %v290, %v289
      %v303 = vpack.c.b16 %v292, %v291
      %v304 = vpack.c.b16 %v294, %v293
      %v305 = vpack.c.b16 %v296, %v295
      %v306 = vpack.c.b16 %v298, %v297
      %315 = vmatpush.bf16.msra.mxu0 %v306
      %316 = vmatpush.bf16.msra.mxu0 %v305
      %317 = vmatpush.bf16.msra.mxu0 %v304
      %318 = vmatpush.bf16.msra.mxu0 %v303
      %319 = vmatpush.bf16.msra.mxu0 %v302
      %320 = vmatpush.bf16.msra.mxu0 %v301
      %321 = vmatpush.bf16.msra.mxu0 %v300
      %322 = vmatpush.bf16.msra.mxu0 %v299
      %323 = vmatmul.bf16.gmra.mxu0 %v259
      %v324 = vpop.f32.mrf.mxu0
      %v325 = vadd.f32 %v206, %v324
      %v326 = vpop.f32.mrf.mxu0
      %v327 = vadd.f32 %v211, %v326
      %328 = vmatmul.bf16.gmra.mxu0 %v260
      %v329 = vpop.f32.mrf.mxu0
      %v330 = vadd.f32 %v216, %v329
      %v331 = vpop.f32.mrf.mxu0
      %v332 = vadd.f32 %v221, %v331
      %333 = vmatmul.bf16.gmra.mxu0 %v261
      %v334 = vpop.f32.mrf.mxu0
      %v335 = vadd.f32 %v226, %v334
      %v336 = vpop.f32.mrf.mxu0
      %v337 = vadd.f32 %v231, %v336
      %338 = vmatmul.bf16.gmra.mxu0 %v262
      %v339 = vpop.f32.mrf.mxu0
      %v340 = vadd.f32 %v236, %v339
      %v341 = vpop.f32.mrf.mxu0
      %v342 = vadd.f32 %v241, %v341
      %343 = vdwg.mxu0
      %vm344 = vcmask 130048
      %v345 = vsel %vm344, %v325, 0.0
      %346 = vadd.xlane.f32.xlu0 %v345
      %v347 = vpop.xlane.xlu0 %346
      %v348 = vsel %vm344, %v327, 0.0
      %349 = vadd.xlane.f32.xlu0 %v348
      %v350 = vpop.xlane.xlu0 %349
      %v351 = vsel %vm344, %v330, 0.0
      %352 = vadd.xlane.f32.xlu0 %v351
      %v353 = vpop.xlane.xlu0 %352
      %v354 = vsel %vm344, %v332, 0.0
      %355 = vadd.xlane.f32.xlu0 %v354
      %v356 = vpop.xlane.xlu0 %355
      %v357 = vsel %vm344, %v335, 0.0
      %358 = vadd.xlane.f32.xlu0 %v357
      %v359 = vpop.xlane.xlu0 %358
      %v360 = vsel %vm344, %v337, 0.0
      %361 = vadd.xlane.f32.xlu0 %v360
      %v362 = vpop.xlane.xlu0 %361
      %v363 = vsel %vm344, %v340, 0.0
      %364 = vadd.xlane.f32.xlu0 %v363
      %v365 = vpop.xlane.xlu0 %364
      %v366 = vsel %vm344, %v342, 0.0
      %367 = vadd.xlane.f32.xlu0 %v366
      %v368 = vpop.xlane.xlu0 %367
      %v369 = vadd.f32 %v347, %v353
      %v370 = vadd.f32 %v350, %v356
      %v371 = vadd.f32 %v369, %v359
      %v372 = vadd.f32 %v370, %v362
      %v373 = vadd.f32 %v371, %v365
      %v374 = vadd.f32 %v372, %v368
      %v375 = vrcp.pop 64.0
      %v376 = vmul.f32 64.0, %v375
      %v377 = vsub.f32 1.0, %v376
      %v378 = vmul.f32 %v375, %v377
      %v379 = vadd.f32 %v375, %v378
      %vm380 = vweird.f32 %v375
      %v381 = vsel %vm380, %v375, %v379
      %v382 = vmul.f32 %v373, %v381
      %v383 = vmul.f32 %v374, %v381
      %385 = vset.pattern.permute.xlu0 0
      %386 = vperm.xlu0 %385, %v382
      %v387 = vpop.permute.xlu0 %386
      %390 = vset.pattern.permute.xlu0 0
      %391 = vperm.xlu0 %390, %v383
      %v392 = vpop.permute.xlu0 %391
      %v394 = vsub.f32 %v325, %v387
      %v395 = vsub.f32 %v327, %v392
      %v396 = vsub.f32 %v330, %v387
      %v397 = vsub.f32 %v332, %v392
      %v398 = vsub.f32 %v335, %v387
      %v399 = vsub.f32 %v337, %v392
      %v400 = vsub.f32 %v340, %v387
      %v401 = vsub.f32 %v342, %v392
      %v402 = vmul.f32 %v394, %v394
      %v403 = vmul.f32 %v395, %v395
      %v404 = vmul.f32 %v396, %v396
      %v405 = vmul.f32 %v397, %v397
      %v406 = vmul.f32 %v398, %v398
      %v407 = vmul.f32 %v399, %v399
      %v408 = vmul.f32 %v400, %v400
      %v409 = vmul.f32 %v401, %v401
      %v410 = vsel %vm344, %v402, 0.0
      %411 = vadd.xlane.f32.xlu0 %v410
      %v412 = vpop.xlane.xlu0 %411
      %v413 = vsel %vm344, %v403, 0.0
      %414 = vadd.xlane.f32.xlu0 %v413
      %v415 = vpop.xlane.xlu0 %414
      %v416 = vsel %vm344, %v404, 0.0
      %417 = vadd.xlane.f32.xlu0 %v416
      %v418 = vpop.xlane.xlu0 %417
      %v419 = vsel %vm344, %v405, 0.0
      %420 = vadd.xlane.f32.xlu0 %v419
      %v421 = vpop.xlane.xlu0 %420
      %v422 = vsel %vm344, %v406, 0.0
      %423 = vadd.xlane.f32.xlu0 %v422
      %v424 = vpop.xlane.xlu0 %423
      %v425 = vsel %vm344, %v407, 0.0
      %426 = vadd.xlane.f32.xlu0 %v425
      %v427 = vpop.xlane.xlu0 %426
      %v428 = vsel %vm344, %v408, 0.0
      %429 = vadd.xlane.f32.xlu0 %v428
      %v430 = vpop.xlane.xlu0 %429
      %v431 = vsel %vm344, %v409, 0.0
      %432 = vadd.xlane.f32.xlu0 %v431
      %v433 = vpop.xlane.xlu0 %432
      %v434 = vadd.f32 %v412, %v418
      %v435 = vadd.f32 %v415, %v421
      %v436 = vadd.f32 %v434, %v424
      %v437 = vadd.f32 %v435, %v427
      %v438 = vadd.f32 %v436, %v430
      %v439 = vadd.f32 %v437, %v433
      %v440 = vmul.f32 %v438, %v381
      %v441 = vmul.f32 %v439, %v381
      %v442 = vadd.f32 %v440, 1e-05
      %v443 = vadd.f32 %v441, 1e-05
      %v444 = vrsqrt.pop %v442
      %v445 = vmul.f32 %v444, %v442
      %v446 = vmul.f32 %v445, %v444
      %v447 = vmul.f32 0.5, %v446
      %v448 = vsub.f32 1.5, %v447
      %v449 = vmul.f32 %v444, %v448
      %vm450 = vweird.f32 %v442
      %vm451 = vweird.f32 %v444
      %vm452 = vmor %vm450, %vm451
      %v453 = vsel %vm452, %v444, %v449
      %v454 = vrsqrt.pop %v443
      %v455 = vmul.f32 %v454, %v443
      %v456 = vmul.f32 %v455, %v454
      %v457 = vmul.f32 0.5, %v456
      %v458 = vsub.f32 1.5, %v457
      %v459 = vmul.f32 %v454, %v458
      %vm460 = vweird.f32 %v443
      %vm461 = vweird.f32 %v454
      %vm462 = vmor %vm460, %vm461
      %v463 = vsel %vm462, %v454, %v459
      %465 = vset.pattern.permute.xlu0 0
      %466 = vperm.xlu0 %465, %v453
      %v467 = vpop.permute.xlu0 %466
      %470 = vset.pattern.permute.xlu0 0
      %471 = vperm.xlu0 %470, %v463
      %v472 = vpop.permute.xlu0 %471
      %v474 = vmul.f32 %v394, %v467
      %v475 = vmul.f32 %v395, %v472
      %v476 = vmul.f32 %v396, %v467
      %v477 = vmul.f32 %v397, %v472
      %v478 = vmul.f32 %v398, %v467
      %v479 = vmul.f32 %v399, %v472
      %v480 = vmul.f32 %v400, %v467
      %v481 = vmul.f32 %v401, %v472
      %v482 = vmax.f32 %v474, 0.0
      %v483 = vmax.f32 %v475, 0.0
      %v484 = vmax.f32 %v476, 0.0
      %v485 = vmax.f32 %v477, 0.0
      %v486 = vmax.f32 %v478, 0.0
      %v487 = vmax.f32 %v479, 0.0
      %v488 = vmax.f32 %v480, 0.0
      %v489 = vmax.f32 %v481, 0.0
      %490 = vst.msk [vmem:[%s170] sm:$0xff] %vm344, %v482
      %491 = vst.msk [vmem:[%s170 + $0x8] sm:$0xff] %vm344, %v483
      %492 = vst.msk [vmem:[%s170 + $0x10] sm:$0xff] %vm344, %v484
      %493 = vst.msk [vmem:[%s170 + $0x18] sm:$0xff] %vm344, %v485
      %494 = vst.msk [vmem:[%s170 + $0x20] sm:$0xff] %vm344, %v486
      %495 = vst.msk [vmem:[%s170 + $0x28] sm:$0xff] %vm344, %v487
      %496 = vst.msk [vmem:[%s170 + $0x30] sm:$0xff] %vm344, %v488
      %497 = vst.msk [vmem:[%s170 + $0x38] sm:$0xff] %vm344, %v489
      %p498 = scmp.lt.s32.totalorder %s14, 1
      %s499 = scalar_select %p498, %s14, 1
      %s500 = smul.addr %s499, 8
      %s501 = smul.addr %s500, 8
      %s502 = scalar_lea.vmem %s3, %s501
      // Predicated region
      $region33: #{cyclegan_generator.21} parent=31 // pred_check
        %p503 = pneg %p100
      $region34: #{cyclegan_generator.21} parent=31 // pred_check_branch
        %505 = sbr.rel (%p503) target = $region36
      $region35: #{cyclegan_generator.21} parent=31 // pred_region
        _
      $region36: #{cyclegan_generator.21} parent=31 // pred_fallthru
        _
    $region32: #{cyclegan_generator.21} parent=5 // pred_fallthru
      _
    %p506 = scmp.le.s32.totalorder 2, %s9
    // Predicated region
    $region37: #{cyclegan_generator.21} parent=5 // pred_check
      %p507 = pneg %p506
    $region38: #{cyclegan_generator.21} parent=5 // pred_check_branch
      %509 = sbr.rel (%p507) target = $region40
    $region39: #{cyclegan_generator.21} parent=5 // pred_region
      %s510 = ssub.s32 %s9, 2
      // Predicated region
      $region41: #{cyclegan_generator.21} parent=39 // pred_check
        %p511 = pneg %p106
      $region42: #{cyclegan_generator.21} parent=39 // pred_check_branch
        %513 = sbr.rel (%p511) target = $region44
      $region43: #{cyclegan_generator.21} parent=39 // pred_region
        %p514 = scmp.lt.s32.totalorder %s15, 1
        %s515 = scalar_select %p514, %s15, 1
        %s516 = smul.addr %s515, 8
        %s517 = smul.addr %s516, 8
        %s518 = scalar_lea.vmem %s3, %s517
      $region44: #{cyclegan_generator.21} parent=39 // pred_fallthru
        _
    $region40: #{cyclegan_generator.21} parent=5 // pred_fallthru
      _
  $region6: #{cyclegan_generator.21} parent=0 // loop_footer
    %s13 = sadd.s32 1, %s9
  $region7: #{cyclegan_generator.21} parent=0 // loop_footer_branch
    %8 = sbr.rel target = $region3
  $region8: #{cyclegan_generator.21} parent=0 // loop_exit
    _

// kernel: tile.18
$region0: #{tile.18}
  #allocation0 [shape = 's32[1]{0}', space=sflag, size = 0x4, scoped, tag = 'scoped memory for tile.18']
  %s0 = inlined_call_operand.vmem [shape: f32[8], index: 0, kind: input, shape index: {}]
  %s1 = inlined_call_operand.vmem [shape: f32[4,8], index: 1, kind: output, shape index: {}]
  // Predicated region
  $region2: #{tile.18} parent=0 // pred_check
    _
  $region3: #{tile.18} parent=0 // pred_check_branch
    %3 = sbr.rel (0) target = $region5
  $region4: #{tile.18} parent=0 // pred_region
    _
  $region5: #{tile.18} parent=0 // pred_fallthru
    _
  %v4 = vld [vmem:[%s0] ss:$0 sm:$0xff]
  %5 = vst [vmem:[%s1] sm:$0xf] %v4

// kernel: tile.0
$region0: #{tile.0}
  %s0 = inlined_call_operand.vmem [shape: f32[4,8], index: 0, kind: input, shape index: {}]
  %s1 = inlined_call_operand.vmem [shape: f32[32,1], index: 1, kind: output, shape index: {}]
  $region1: #{tile.0} parent=0
    #allocation0 [shape = 'u8[4096]{0}', space=vmem, size = 0x1000, scoped, tag = 'scoped mem for input reshape']
    %s3 = ssub.s32 16, 1
    %v4 = vld [vmem:[%s0] sm:%s3]
    %5 = vst [vmem:[#allocation0] sm:%s3] %v4
    %v6 = vld [vmem:[#allocation0] sm:$0xf]
    %vm7 = vcmask 7168
    %8 = vst.msk [vmem:[%s1] ss:$8 sm:$0xf] %vm7, %v6
    %v9 = vld [vmem:[#allocation0] sm:$0xf]
    %10 = vrot.lane.b32.xlu0 %v9, 127
    %v11 = vpop.permute.xlu0 %10
    %vm12 = vcmask 7168
    %s13 = scalar_lea.vmem %s1, 1
    %14 = vst.msk [vmem:[%s13] ss:$8 sm:$0xf] %vm12, %v11
    %v15 = vld [vmem:[#allocation0] sm:$0xf]
    %16 = vrot.lane.b32.xlu0 %v15, 126
    %v17 = vpop.permute.xlu0 %16
    %vm18 = vcmask 7168
    %s19 = scalar_lea.vmem %s1, 2
    %20 = vst.msk [vmem:[%s19] ss:$8 sm:$0xf] %vm18, %v17
    %v21 = vld [vmem:[#allocation0] sm:$0xf]
    %22 = vrot.lane.b32.xlu0 %v21, 125
    %v23 = vpop.permute.xlu0 %22
    %vm24 = vcmask 7168
    %s25 = scalar_lea.vmem %s1, 3
    %26 = vst.msk [vmem:[%s25] ss:$8 sm:$0xf] %vm24, %v23
    %v27 = vld [vmem:[#allocation0] sm:$0xf]
    %28 = vrot.lane.b32.xlu0 %v27, 124
    %v29 = vpop.permute.xlu0 %28
    %vm30 = vcmask 7168
    %s31 = scalar_lea.vmem %s1, 4
    %32 = vst.msk [vmem:[%s31] ss:$8 sm:$0xf] %vm30, %v29
    %v33 = vld [vmem:[#allocation0] sm:$0xf]
    %34 = vrot.lane.b32.xlu0 %v33, 123
    %v35 = vpop.permute.xlu0 %34
    %vm36 = vcmask 7168
    %s37 = scalar_lea.vmem %s1, 5
    %38 = vst.msk [vmem:[%s37] ss:$8 sm:$0xf] %vm36, %v35
    %v39 = vld [vmem:[#allocation0] sm:$0xf]
    %40 = vrot.lane.b32.xlu0 %v39, 122
    %v41 = vpop.permute.xlu0 %40
    %vm42 = vcmask 7168
    %s43 = scalar_lea.vmem %s1, 6
    %44 = vst.msk [vmem:[%s43] ss:$8 sm:$0xf] %vm42, %v41
    %v45 = vld [vmem:[#allocation0] sm:$0xf]
    %46 = vrot.lane.b32.xlu0 %v45, 121
    %v47 = vpop.permute.xlu0 %46
    %vm48 = vcmask 7168
    %s49 = scalar_lea.vmem %s1, 7
    %50 = vst.msk [vmem:[%s49] ss:$8 sm:$0xf] %vm48, %v47

// kernel: cyclegan_generator.22
$region0: #{cyclegan_generator.22}
  #allocation0 [shape = 'u32[]', space=smem, size = 0x4, offset = 0x4, fixed_abs, tag = 'smem constant byte address 0x4 - core index']
  #allocation1 [shape = 'u32[72,128]{1,0:T(1,128)}', space=vmem, size = 0x9000, scoped, tag = 'internal scratch']
  %s0 = inlined_call_operand.vmem [shape: bf16[32,64], index: 0, kind: input, shape index: {}]
  %s1 = inlined_call_operand.vmem [shape: f32[32,1], index: 1, kind: input, shape index: {}]
  %s2 = inlined_call_operand.vmem [shape: bf16[2,64,64], index: 2, kind: input, shape index: {}]
  %s3 = inlined_call_operand.vmem [shape: f32[2,32,64], index: 3, kind: output, shape index: {}]
  %s4 = sld [smem:[#allocation0]]
  $region45: #{cyclegan_generator.22} parent=0
    _
  %s6 = ssub.s32 1, %s4
  %s7 = scalar_select 0, %s6, %s4
  loop: start=0, step=1, limit=4
  $region2: #{cyclegan_generator.22} parent=0 // loop_pre_header
    _
  $region3: #{cyclegan_generator.22} parent=0 // loop_header
    %s9 = sphi 0, %s13
    %p10 = scmp.ge.s32.totalorder %s9, 4
    %s17 = sphi 0, %s17
    %s19 = sphi 0, %s17
    %s20 = sphi 0, %s19
    %s34 = sphi 0, %s20
    %s38 = sphi 0, %s38
    %s40 = sphi 0, %s38
    %s41 = sphi 0, %s40
    %s55 = sphi 0, %s41
    %s61 = sphi 0, %s63
    %s64 = sphi 0, %s61
    %s65 = sphi 0, %s64
    %s81 = sphi 0, %s65
    %s87 = sphi 0, %s89
    %s90 = sphi 0, %s87
    %s91 = sphi 0, %s90
    %s107 = sphi 0, %s91
  $region4: #{cyclegan_generator.22} parent=0 // loop_header_branch
    %12 = sbr.rel (%p10) target = $region8
  $region5: #{cyclegan_generator.22} parent=0 // loop_body
    %s14 = ssub.s32 %s9, 1
    %s15 = ssub.s32 %s9, 2
    %s16 = sadd.s32 %s9, 1
    %s18 = sadd.s32 %s17, 1
    %p21 = scmp.eq.s32.totalorder %s9, 1
    %p22 = scmp.ne.s32.totalorder %s17, %s19
    %p23 = scmp.eq.s32.totalorder %s9, 0
    %p24 = por %p22, %p23
    %p25 = scmp.ne.s32.totalorder %s17, %s19
    %p26 = scmp.eq.s32.totalorder %s14, 1
    %p27 = por %p25, %p26
    %p28 = scmp.ne.s32.totalorder %s19, %s20
    %p29 = scmp.eq.s32.totalorder %s14, 0
    %p30 = por %p28, %p29
    %p31 = scmp.ne.s32.totalorder %s19, %s20
    %p32 = scmp.eq.s32.totalorder %s15, 1
    %p33 = por %p31, %p32
    %p35 = scmp.ne.s32.totalorder %s20, %s34
    %p36 = scmp.eq.s32.totalorder %s15, 0
    %p37 = por %p35, %p36
    %s39 = sadd.s32 %s38, 1
    %p42 = scmp.eq.s32.totalorder %s9, 1
    %p43 = scmp.ne.s32.totalorder %s38, %s40
    %p44 = scmp.eq.s32.totalorder %s9, 0
    %p45 = por %p43, %p44
    %p46 = scmp.ne.s32.totalorder %s38, %s40
    %p47 = scmp.eq.s32.totalorder %s14, 1
    %p48 = por %p46, %p47
    %p49 = scmp.ne.s32.totalorder %s40, %s41
    %p50 = scmp.eq.s32.totalorder %s14, 0
    %p51 = por %p49, %p50
    %p52 = scmp.ne.s32.totalorder %s40, %s41
    %p53 = scmp.eq.s32.totalorder %s15, 1
    %p54 = por %p52, %p53
    %p56 = scmp.ne.s32.totalorder %s41, %s55
    %p57 = scmp.eq.s32.totalorder %s15, 0
    %p58 = por %p56, %p57
    %s59 = ssub.s32 %s9, %s16
    %p60 = scmp.eq.s32.totalorder %s59, 0
    %s62 = sadd.s32 %s61, 1
    %s63 = scalar_select %p60, %s61, %s62
    %p66 = pneg %p60
    %p67 = scmp.eq.s32.totalorder %s9, 1
    %p68 = por %p66, %p67
    %p69 = scmp.ne.s32.totalorder %s61, %s64
    %p70 = scmp.eq.s32.totalorder %s9, 0
    %p71 = por %p69, %p70
    %p72 = scmp.ne.s32.totalorder %s61, %s64
    %p73 = scmp.eq.s32.totalorder %s14, 1
    %p74 = por %p72, %p73
    %p75 = scmp.ne.s32.totalorder %s64, %s65
    %p76 = scmp.eq.s32.totalorder %s14, 0
    %p77 = por %p75, %p76
    %p78 = scmp.ne.s32.totalorder %s64, %s65
    %p79 = scmp.eq.s32.totalorder %s15, 1
    %p80 = por %p78, %p79
    %p82 = scmp.ne.s32.totalorder %s65, %s81
    %p83 = scmp.eq.s32.totalorder %s15, 0
    %p84 = por %p82, %p83
    %s85 = ssub.s32 %s9, %s16
    %p86 = scmp.eq.s32.totalorder %s85, 0
    %s88 = sadd.s32 %s87, 1
    %s89 = scalar_select %p86, %s87, %s88
    %p92 = pneg %p86
    %p93 = scmp.eq.s32.totalorder %s9, 1
    %p94 = por %p92, %p93
    %p95 = scmp.ne.s32.totalorder %s87, %s90
    %p96 = scmp.eq.s32.totalorder %s9, 0
    %p97 = por %p95, %p96
    %p98 = scmp.ne.s32.totalorder %s87, %s90
    %p99 = scmp.eq.s32.totalorder %s14, 1
    %p100 = por %p98, %p99
    %p101 = scmp.ne.s32.totalorder %s90, %s91
    %p102 = scmp.eq.s32.totalorder %s14, 0
    %p103 = por %p101, %p102
    %p104 = scmp.ne.s32.totalorder %s90, %s91
    %p105 = scmp.eq.s32.totalorder %s15, 1
    %p106 = por %p104, %p105
    %p108 = scmp.ne.s32.totalorder %s91, %s107
    %p109 = scmp.eq.s32.totalorder %s15, 0
    %p110 = por %p108, %p109
    %p111 = scmp.le.s32.totalorder 1, %s9
    %p112 = scmp.lt.s32.totalorder %s9, 3
    %p113 = pnand %p111, %p112
    %p114 = pneg %p113
    // Predicated region
    $region9: #{cyclegan_generator.22} parent=5 // pred_check
      _
    $region10: #{cyclegan_generator.22} parent=5 // pred_check_branch
      %116 = sbr.rel (%p113) target = $region12
    $region11: #{cyclegan_generator.22} parent=5 // pred_region
      %s117 = ssub.s32 %s9, 1
      // Predicated region
      $region13: #{cyclegan_generator.22} parent=11 // pred_check
        %p118 = pneg %p30
      $region14: #{cyclegan_generator.22} parent=11 // pred_check_branch
        %120 = sbr.rel (%p118) target = $region16
      $region15: #{cyclegan_generator.22} parent=11 // pred_region
        _
      $region16: #{cyclegan_generator.22} parent=11 // pred_fallthru
        _
      // Predicated region
      $region17: #{cyclegan_generator.22} parent=11 // pred_check
        %p121 = pneg %p51
      $region18: #{cyclegan_generator.22} parent=11 // pred_check_branch
        %123 = sbr.rel (%p121) target = $region20
      $region19: #{cyclegan_generator.22} parent=11 // pred_region
        _
      $region20: #{cyclegan_generator.22} parent=11 // pred_fallthru
        _
    $region12: #{cyclegan_generator.22} parent=5 // pred_fallthru
      _
    %p124 = scmp.lt.s32.totalorder %s9, 2
    // Predicated region
    $region21: #{cyclegan_generator.22} parent=5 // pred_check
      %p125 = pneg %p124
    $region22: #{cyclegan_generator.22} parent=5 // pred_check_branch
      %127 = sbr.rel (%p125) target = $region24
    $region23: #{cyclegan_generator.22} parent=5 // pred_region
      // Predicated region
      $region25: #{cyclegan_generator.22} parent=23 // pred_check
        %p128 = pneg %p71
      $region26: #{cyclegan_generator.22} parent=23 // pred_check_branch
        %130 = sbr.rel (%p128) target = $region28
      $region27: #{cyclegan_generator.22} parent=23 // pred_region
        %p131 = scmp.lt.s32.totalorder %s9, 1
        %s132 = scalar_select %p131, %s9, 1
        %s133 = smul.addr %s132, 8
        %s134 = smul.addr %s133, 4
        %s135 = scalar_lea.vmem %s2, %s134
      $region28: #{cyclegan_generator.22} parent=23 // pred_fallthru
        _
    $region24: #{cyclegan_generator.22} parent=5 // pred_fallthru
      _
    %p136 = scmp.le.s32.totalorder 1, %s9
    %p137 = scmp.lt.s32.totalorder %s9, 3
    %p138 = pnand %p136, %p137
    %p139 = pneg %p138
    // Predicated region
    $region29: #{cyclegan_generator.22} parent=5 // pred_check
      _
    $region30: #{cyclegan_generator.22} parent=5 // pred_check_branch
      %141 = sbr.rel (%p138) target = $region32
    $region31: #{cyclegan_generator.22} parent=5 // pred_region
      %s142 = ssub.s32 %s9, 1
      %p143 = pneg %p30
      %p144 = pneg %p27
      %p145 = pneg %p51
      %p146 = pneg %p48
      %p147 = scmp.lt.s32.totalorder %s14, 1
      %s148 = scalar_select %p147, %s14, 1
      %s149 = smul.addr %s148, 8
      %s150 = smul.addr %s149, 4
      %s151 = scalar_lea.vmem %s2, %s150
      %p152 = pneg %p77
      %p153 = pneg %p74
      %p154 = pneg %p103
      %p155 = pneg %p100
      %p156 = scmp.lt.s32.totalorder %s14, 1
      %s157 = scalar_select %p156, %s14, 1
      %s158 = smul.addr %s157, 4
      %s159 = smul.addr %s158, 8
      %s160 = scalar_lea.vmem %s3, %s159
      %p161 = scmp.lt.s32.totalorder %s14, 1
      %s162 = scalar_select %p161, %s14, 1
      %s163 = smul.addr %s162, 8
      %s164 = smul.addr %s163, 4
      %s165 = scalar_lea.vmem %s2, %s164
      %p166 = scmp.lt.s32.totalorder %s14, 1
      %s167 = scalar_select %p166, %s14, 1
      %s168 = smul.addr %s167, 4
      %s169 = smul.addr %s168, 8
      %s170 = scalar_lea.vmem %s3, %s169
      %v172 = vld [vmem:[%s0] sm:$0xf]
      %v173 = vld [vmem:[%s0 + $0x4] sm:$0xf]
      %v174 = vld [vmem:[%s0 + $0x8] sm:$0xf]
      %v175 = vld [vmem:[%s0 + $0xc] sm:$0xf]
      %v176 = vld [vmem:[%s165] sm:$0xf]
      %v177 = vld [vmem:[%s165 + $0x4] sm:$0xf]
      %v178 = vld [vmem:[%s165 + $0x8] sm:$0xf]
      %v179 = vld [vmem:[%s165 + $0xc] sm:$0xf]
      %v180 = vld [vmem:[%s165 + $0x10] sm:$0xf]
      %v181 = vld [vmem:[%s165 + $0x14] sm:$0xf]
      %v182 = vld [vmem:[%s165 + $0x18] sm:$0xf]
      %v183 = vld [vmem:[%s165 + $0x1c] sm:$0xf]
      %v184 = vld [vmem:[%s1] sm:$0xff]
      %v185 = vld [vmem:[%s1 + $0x8] sm:$0xff]
      %v186 = vld [vmem:[%s1 + $0x10] sm:$0xff]
      %v187 = vld [vmem:[%s1 + $0x18] sm:$0xff]
      %189 = vset.pattern.permute.xlu0 0
      %190 = vperm.xlu0 %189, %v184
      %v191 = vpop.permute.xlu0 %190
      %194 = vset.pattern.permute.xlu0 0
      %195 = vperm.xlu0 %194, %v185
      %v196 = vpop.permute.xlu0 %195
      %199 = vset.pattern.permute.xlu0 0
      %200 = vperm.xlu0 %199, %v186
      %v201 = vpop.permute.xlu0 %200
      %204 = vset.pattern.permute.xlu0 0
      %205 = vperm.xlu0 %204, %v187
      %v206 = vpop.permute.xlu0 %205
      %v212 = vunpack.c.l.b16 %v172
      %v213 = vunpack.c.l.b16 %v173
      %v214 = vunpack.c.l.b16 %v174
      %v215 = vunpack.c.l.b16 %v175
      %v216 = vpack.c.b16 %v213, %v212
      %v217 = vpack.c.b16 %v215, %v214
      %v226 = vunpack.c.l.b16 %v176
      %v227 = vunpack.c.l.b16 %v177
      %v228 = vunpack.c.l.b16 %v178
      %v229 = vunpack.c.l.b16 %v179
      %v230 = vunpack.c.l.b16 %v180
      %v231 = vunpack.c.l.b16 %v181
      %v232 = vunpack.c.l.b16 %v182
      %v233 = vunpack.c.l.b16 %v183
      %v234 = vpack.c.b16 %v227, %v226
      %v235 = vpack.c.b16 %v229, %v228
      %v236 = vpack.c.b16 %v231, %v230
      %v237 = vpack.c.b16 %v233, %v232
      %vm242 = vcmask 523264
      %v244 = vsel %vm242, %v216, 0
      %v247 = vsel %vm242, %v217, 0
      %249 = vmatpush.bf16.msra.mxu0 0
      %250 = vmatpush.bf16.msra.mxu0 0
      %251 = vmatpush.bf16.msra.mxu0 0
      %252 = vmatpush.bf16.msra.mxu0 0
      %253 = vmatpush.bf16.msra.mxu0 %v237
      %254 = vmatpush.bf16.msra.mxu0 %v236
      %255 = vmatpush.bf16.msra.mxu0 %v235
      %256 = vmatpush.bf16.msra.mxu0 %v234
      %257 = vmatmul.bf16.gmra.mxu0 %v244
      %v258 = vpop.f32.mrf.mxu0
      %v259 = vadd.f32 %v191, %v258
      %v260 = vpop.f32.mrf.mxu0
      %v261 = vadd.f32 %v196, %v260
      %262 = vmatmul.bf16.gmra.mxu0 %v247
      %v263 = vpop.f32.mrf.mxu0
      %v264 = vadd.f32 %v201, %v263
      %v265 = vpop.f32.mrf.mxu0
      %v266 = vadd.f32 %v206, %v265
      %267 = vdwg.mxu0
      %v268 = vsel %vm242, %v259, 0.0
      %269 = vadd.xlane.f32.xlu0 %v268
      %v270 = vpop.xlane.xlu0 %269
      %v271 = vsel %vm242, %v261, 0.0
      %272 = vadd.xlane.f32.xlu0 %v271
      %v273 = vpop.xlane.xlu0 %272
      %v274 = vsel %vm242, %v264, 0.0
      %275 = vadd.xlane.f32.xlu0 %v274
      %v276 = vpop.xlane.xlu0 %275
      %v277 = vsel %vm242, %v266, 0.0
      %278 = vadd.xlane.f32.xlu0 %v277
      %v279 = vpop.xlane.xlu0 %278
      %v280 = vadd.f32 %v270, %v273
      %v281 = vadd.f32 %v280, %v276
      %v282 = vadd.f32 %v281, %v279
      %v283 = vrcp.pop 256.0
      %v284 = vmul.f32 256.0, %v283
      %v285 = vsub.f32 1.0, %v284
      %v286 = vmul.f32 %v283, %v285
      %v287 = vadd.f32 %v283, %v286
      %vm288 = vweird.f32 %v283
      %v289 = vsel %vm288, %v283, %v287
      %v290 = vmul.f32 %v282, %v289
      %292 = vset.pattern.permute.xlu0 0
      %293 = vperm.xlu0 %292, %v290
      %v294 = vpop.permute.xlu0 %293
      %v296 = vsub.f32 %v259, %v294
      %v297 = vsub.f32 %v261, %v294
      %v298 = vsub.f32 %v264, %v294
      %v299 = vsub.f32 %v266, %v294
      %v300 = vmul.f32 %v296, %v296
      %v301 = vmul.f32 %v297, %v297
      %v302 = vmul.f32 %v298, %v298
      %v303 = vmul.f32 %v299, %v299
      %v304 = vsel %vm242, %v300, 0.0
      %305 = vadd.xlane.f32.xlu0 %v304
      %v306 = vpop.xlane.xlu0 %305
      %v307 = vsel %vm242, %v301, 0.0
      %308 = vadd.xlane.f32.xlu0 %v307
      %v309 = vpop.xlane.xlu0 %308
      %v310 = vsel %vm242, %v302, 0.0
      %311 = vadd.xlane.f32.xlu0 %v310
      %v312 = vpop.xlane.xlu0 %311
      %v313 = vsel %vm242, %v303, 0.0
      %314 = vadd.xlane.f32.xlu0 %v313
      %v315 = vpop.xlane.xlu0 %314
      %v316 = vadd.f32 %v306, %v309
      %v317 = vadd.f32 %v316, %v312
      %v318 = vadd.f32 %v317, %v315
      %v319 = vmul.f32 %v318, %v289
      %v320 = vadd.f32 %v319, 1e-05
      %v321 = vrsqrt.pop %v320
      %v322 = vmul.f32 %v321, %v320
      %v323 = vmul.f32 %v322, %v321
      %v324 = vmul.f32 0.5, %v323
      %v325 = vsub.f32 1.5, %v324
      %v326 = vmul.f32 %v321, %v325
      %vm327 = vweird.f32 %v320
      %vm328 = vweird.f32 %v321
      %vm329 = vmor %vm327, %vm328
      %v330 = vsel %vm329, %v321, %v326
      %332 = vset.pattern.permute.xlu0 0
      %333 = vperm.xlu0 %332, %v330
      %v334 = vpop.permute.xlu0 %333
      %v336 = vmul.f32 %v296, %v334
      %v337 = vmul.f32 %v297, %v334
      %v338 = vmul.f32 %v298, %v334
      %v339 = vmul.f32 %v299, %v334
      %v340 = vmax.f32 %v336, 0.0
      %v341 = vmax.f32 %v337, 0.0
      %v342 = vmax.f32 %v338, 0.0
      %v343 = vmax.f32 %v339, 0.0
      %344 = vst.msk [vmem:[%s170] sm:$0xff] %vm242, %v340
      %345 = vst.msk [vmem:[%s170 + $0x8] sm:$0xff] %vm242, %v341
      %346 = vst.msk [vmem:[%s170 + $0x10] sm:$0xff] %vm242, %v342
      %347 = vst.msk [vmem:[%s170 + $0x18] sm:$0xff] %vm242, %v343
      %p348 = scmp.lt.s32.totalorder %s14, 1
      %s349 = scalar_select %p348, %s14, 1
      %s350 = smul.addr %s349, 4
      %s351 = smul.addr %s350, 8
      %s352 = scalar_lea.vmem %s3, %s351
      // Predicated region
      $region33: #{cyclegan_generator.22} parent=31 // pred_check
        %p353 = pneg %p100
      $region34: #{cyclegan_generator.22} parent=31 // pred_check_branch
        %355 = sbr.rel (%p353) target = $region36
      $region35: #{cyclegan_generator.22} parent=31 // pred_region
        _
      $region36: #{cyclegan_generator.22} parent=31 // pred_fallthru
        _
    $region32: #{cyclegan_generator.22} parent=5 // pred_fallthru
      _
    %p356 = scmp.le.s32.totalorder 2, %s9
    // Predicated region
    $region37: #{cyclegan_generator.22} parent=5 // pred_check
      %p357 = pneg %p356
    $region38: #{cyclegan_generator.22} parent=5 // pred_check_branch
      %359 = sbr.rel (%p357) target = $region40
    $region39: #{cyclegan_generator.22} parent=5 // pred_region
      %s360 = ssub.s32 %s9, 2
      // Predicated region
      $region41: #{cyclegan_generator.22} parent=39 // pred_check
        %p361 = pneg %p106
      $region42: #{cyclegan_generator.22} parent=39 // pred_check_branch
        %363 = sbr.rel (%p361) target = $region44
      $region43: #{cyclegan_generator.22} parent=39 // pred_region
        %p364 = scmp.lt.s32.totalorder %s15, 1
        %s365 = scalar_select %p364, %s15, 1
        %s366 = smul.addr %s365, 4
        %s367 = smul.addr %s366, 8
        %s368 = scalar_lea.vmem %s3, %s367
      $region44: #{cyclegan_generator.22} parent=39 // pred_fallthru
        _
    $region40: #{cyclegan_generator.22} parent=5 // pred_fallthru
      _
  $region6: #{cyclegan_generator.22} parent=0 // loop_footer
    %s13 = sadd.s32 1, %s9
  $region7: #{cyclegan_generator.22} parent=0 // loop_footer_branch
    %8 = sbr.rel target = $region3
  $region8: #{cyclegan_generator.22} parent=0 // loop_exit
    _

// kernel: cyclegan_generator.23
$region0: #{cyclegan_generator.23}
  #allocation0 [shape = 'u32[]', space=smem, size = 0x4, offset = 0x4, fixed_abs, tag = 'smem constant byte address 0x4 - core index']
  #allocation1 [shape = 'u32[72,128]{1,0:T(1,128)}', space=vmem, size = 0x9000, scoped, tag = 'internal scratch']
  %s0 = inlined_call_operand.vmem [shape: bf16[3,392], index: 0, kind: input, shape index: {}]
  %s1 = inlined_call_operand.vmem [shape: f32[3,1], index: 1, kind: input, shape index: {}]
  %s2 = inlined_call_operand.vmem [shape: bf16[2,392,256], index: 2, kind: input, shape index: {}]
  %s3 = inlined_call_operand.vmem [shape: f32[2,3,256], index: 3, kind: output, shape index: {}]
  %s4 = sld [smem:[#allocation0]]
  $region45: #{cyclegan_generator.23} parent=0
    _
  %s6 = ssub.s32 1, %s4
  %s7 = scalar_select 0, %s6, %s4
  loop: start=0, step=1, limit=4
  $region2: #{cyclegan_generator.23} parent=0 // loop_pre_header
    _
  $region3: #{cyclegan_generator.23} parent=0 // loop_header
    %s9 = sphi 0, %s13
    %p10 = scmp.ge.s32.totalorder %s9, 4
    %s17 = sphi 0, %s17
    %s19 = sphi 0, %s17
    %s20 = sphi 0, %s19
    %s34 = sphi 0, %s20
    %s38 = sphi 0, %s38
    %s40 = sphi 0, %s38
    %s41 = sphi 0, %s40
    %s55 = sphi 0, %s41
    %s61 = sphi 0, %s63
    %s64 = sphi 0, %s61
    %s65 = sphi 0, %s64
    %s81 = sphi 0, %s65
    %s87 = sphi 0, %s89
    %s90 = sphi 0, %s87
    %s91 = sphi 0, %s90
    %s107 = sphi 0, %s91
  $region4: #{cyclegan_generator.23} parent=0 // loop_header_branch
    %12 = sbr.rel (%p10) target = $region8
  $region5: #{cyclegan_generator.23} parent=0 // loop_body
    %s14 = ssub.s32 %s9, 1
    %s15 = ssub.s32 %s9, 2
    %s16 = sadd.s32 %s9, 1
    %s18 = sadd.s32 %s17, 1
    %p21 = scmp.eq.s32.totalorder %s9, 1
    %p22 = scmp.ne.s32.totalorder %s17, %s19
    %p23 = scmp.eq.s32.totalorder %s9, 0
    %p24 = por %p22, %p23
    %p25 = scmp.ne.s32.totalorder %s17, %s19
    %p26 = scmp.eq.s32.totalorder %s14, 1
    %p27 = por %p25, %p26
    %p28 = scmp.ne.s32.totalorder %s19, %s20
    %p29 = scmp.eq.s32.totalorder %s14, 0
    %p30 = por %p28, %p29
    %p31 = scmp.ne.s32.totalorder %s19, %s20
    %p32 = scmp.eq.s32.totalorder %s15, 1
    %p33 = por %p31, %p32
    %p35 = scmp.ne.s32.totalorder %s20, %s34
    %p36 = scmp.eq.s32.totalorder %s15, 0
    %p37 = por %p35, %p36
    %s39 = sadd.s32 %s38, 1
    %p42 = scmp.eq.s32.totalorder %s9, 1
    %p43 = scmp.ne.s32.totalorder %s38, %s40
    %p44 = scmp.eq.s32.totalorder %s9, 0
    %p45 = por %p43, %p44
    %p46 = scmp.ne.s32.totalorder %s38, %s40
    %p47 = scmp.eq.s32.totalorder %s14, 1
    %p48 = por %p46, %p47
    %p49 = scmp.ne.s32.totalorder %s40, %s41
    %p50 = scmp.eq.s32.totalorder %s14, 0
    %p51 = por %p49, %p50
    %p52 = scmp.ne.s32.totalorder %s40, %s41
    %p53 = scmp.eq.s32.totalorder %s15, 1
    %p54 = por %p52, %p53
    %p56 = scmp.ne.s32.totalorder %s41, %s55
    %p57 = scmp.eq.s32.totalorder %s15, 0
    %p58 = por %p56, %p57
    %s59 = ssub.s32 %s9, %s16
    %p60 = scmp.eq.s32.totalorder %s59, 0
    %s62 = sadd.s32 %s61, 1
    %s63 = scalar_select %p60, %s61, %s62
    %p66 = pneg %p60
    %p67 = scmp.eq.s32.totalorder %s9, 1
    %p68 = por %p66, %p67
    %p69 = scmp.ne.s32.totalorder %s61, %s64
    %p70 = scmp.eq.s32.totalorder %s9, 0
    %p71 = por %p69, %p70
    %p72 = scmp.ne.s32.totalorder %s61, %s64
    %p73 = scmp.eq.s32.totalorder %s14, 1
    %p74 = por %p72, %p73
    %p75 = scmp.ne.s32.totalorder %s64, %s65
    %p76 = scmp.eq.s32.totalorder %s14, 0
    %p77 = por %p75, %p76
    %p78 = scmp.ne.s32.totalorder %s64, %s65
    %p79 = scmp.eq.s32.totalorder %s15, 1
    %p80 = por %p78, %p79
    %p82 = scmp.ne.s32.totalorder %s65, %s81
    %p83 = scmp.eq.s32.totalorder %s15, 0
    %p84 = por %p82, %p83
    %s85 = ssub.s32 %s9, %s16
    %p86 = scmp.eq.s32.totalorder %s85, 0
    %s88 = sadd.s32 %s87, 1
    %s89 = scalar_select %p86, %s87, %s88
    %p92 = pneg %p86
    %p93 = scmp.eq.s32.totalorder %s9, 1
    %p94 = por %p92, %p93
    %p95 = scmp.ne.s32.totalorder %s87, %s90
    %p96 = scmp.eq.s32.totalorder %s9, 0
    %p97 = por %p95, %p96
    %p98 = scmp.ne.s32.totalorder %s87, %s90
    %p99 = scmp.eq.s32.totalorder %s14, 1
    %p100 = por %p98, %p99
    %p101 = scmp.ne.s32.totalorder %s90, %s91
    %p102 = scmp.eq.s32.totalorder %s14, 0
    %p103 = por %p101, %p102
    %p104 = scmp.ne.s32.totalorder %s90, %s91
    %p105 = scmp.eq.s32.totalorder %s15, 1
    %p106 = por %p104, %p105
    %p108 = scmp.ne.s32.totalorder %s91, %s107
    %p109 = scmp.eq.s32.totalorder %s15, 0
    %p110 = por %p108, %p109
    %p111 = scmp.le.s32.totalorder 1, %s9
    %p112 = scmp.lt.s32.totalorder %s9, 3
    %p113 = pnand %p111, %p112
    %p114 = pneg %p113
    // Predicated region
    $region9: #{cyclegan_generator.23} parent=5 // pred_check
      _
    $region10: #{cyclegan_generator.23} parent=5 // pred_check_branch
      %116 = sbr.rel (%p113) target = $region12
    $region11: #{cyclegan_generator.23} parent=5 // pred_region
      %s117 = ssub.s32 %s9, 1
      // Predicated region
      $region13: #{cyclegan_generator.23} parent=11 // pred_check
        %p118 = pneg %p30
      $region14: #{cyclegan_generator.23} parent=11 // pred_check_branch
        %120 = sbr.rel (%p118) target = $region16
      $region15: #{cyclegan_generator.23} parent=11 // pred_region
        _
      $region16: #{cyclegan_generator.23} parent=11 // pred_fallthru
        _
      // Predicated region
      $region17: #{cyclegan_generator.23} parent=11 // pred_check
        %p121 = pneg %p51
      $region18: #{cyclegan_generator.23} parent=11 // pred_check_branch
        %123 = sbr.rel (%p121) target = $region20
      $region19: #{cyclegan_generator.23} parent=11 // pred_region
        _
      $region20: #{cyclegan_generator.23} parent=11 // pred_fallthru
        _
    $region12: #{cyclegan_generator.23} parent=5 // pred_fallthru
      _
    %p124 = scmp.lt.s32.totalorder %s9, 2
    // Predicated region
    $region21: #{cyclegan_generator.23} parent=5 // pred_check
      %p125 = pneg %p124
    $region22: #{cyclegan_generator.23} parent=5 // pred_check_branch
      %127 = sbr.rel (%p125) target = $region24
    $region23: #{cyclegan_generator.23} parent=5 // pred_region
      // Predicated region
      $region25: #{cyclegan_generator.23} parent=23 // pred_check
        %p128 = pneg %p71
      $region26: #{cyclegan_generator.23} parent=23 // pred_check_branch
        %130 = sbr.rel (%p128) target = $region28
      $region27: #{cyclegan_generator.23} parent=23 // pred_region
        %p131 = scmp.lt.s32.totalorder %s9, 1
        %s132 = scalar_select %p131, %s9, 1
        %s133 = smul.addr %s132, 98
        %s134 = smul.addr %s133, 4
        %s135 = scalar_lea.vmem %s2, %s134
      $region28: #{cyclegan_generator.23} parent=23 // pred_fallthru
        _
    $region24: #{cyclegan_generator.23} parent=5 // pred_fallthru
      _
    %p136 = scmp.le.s32.totalorder 1, %s9
    %p137 = scmp.lt.s32.totalorder %s9, 3
    %p138 = pnand %p136, %p137
    %p139 = pneg %p138
    // Predicated region
    $region29: #{cyclegan_generator.23} parent=5 // pred_check
      _
    $region30: #{cyclegan_generator.23} parent=5 // pred_check_branch
      %141 = sbr.rel (%p138) target = $region32
    $region31: #{cyclegan_generator.23} parent=5 // pred_region
      %s142 = ssub.s32 %s9, 1
      %p143 = pneg %p30
      %p144 = pneg %p27
      %p145 = pneg %p51
      %p146 = pneg %p48
      %p147 = scmp.lt.s32.totalorder %s14, 1
      %s148 = scalar_select %p147, %s14, 1
      %s149 = smul.addr %s148, 98
      %s150 = smul.addr %s149, 4
      %s151 = scalar_lea.vmem %s2, %s150
      %p152 = pneg %p77
      %p153 = pneg %p74
      %p154 = pneg %p103
      %p155 = pneg %p100
      %p156 = scmp.lt.s32.totalorder %s14, 1
      %s157 = scalar_select %p156, %s14, 1
      %s158 = smul.addr %s157, 2
      %s159 = smul.addr %s158, 4
      %s160 = scalar_lea.vmem %s3, %s159
      %p161 = scmp.lt.s32.totalorder %s14, 1
      %s162 = scalar_select %p161, %s14, 1
      %s163 = smul.addr %s162, 98
      %s164 = smul.addr %s163, 4
      %s165 = scalar_lea.vmem %s2, %s164
      %p166 = scmp.lt.s32.totalorder %s14, 1
      %s167 = scalar_select %p166, %s14, 1
      %s168 = smul.addr %s167, 2
      %s169 = smul.addr %s168, 4
      %s170 = scalar_lea.vmem %s3, %s169
      %v172 = vld [vmem:[%s0] sm:$0xff]
      %v173 = vld [vmem:[%s165] sm:$0xff]
      %v174 = vld [vmem:[%s165 + $0x8] sm:$0xff]
      %v175 = vld [vmem:[%s165 + $0x10] sm:$0xff]
      %v176 = vld [vmem:[%s165 + $0x18] sm:$0xff]
      %v177 = vld [vmem:[%s165 + $0x20] sm:$0xff]
      %v178 = vld [vmem:[%s165 + $0x28] sm:$0xff]
      %v179 = vld [vmem:[%s165 + $0x30] sm:$0xff]
      %v180 = vld [vmem:[%s165 + $0x38] sm:$0xff]
      %v181 = vld [vmem:[%s165 + $0x40] sm:$0xff]
      %v182 = vld [vmem:[%s165 + $0x48] sm:$0xff]
      %v183 = vld [vmem:[%s165 + $0x50] sm:$0xff]
      %v184 = vld [vmem:[%s165 + $0x58] sm:$0xff]
      %v185 = vld [vmem:[%s165 + $0x60] sm:$0xff]
      %v186 = vld [vmem:[%s165 + $0x68] sm:$0xff]
      %v187 = vld [vmem:[%s165 + $0x70] sm:$0xff]
      %v188 = vld [vmem:[%s165 + $0x78] sm:$0xff]
      %v189 = vld [vmem:[%s165 + $0x80] sm:$0xff]
      %v190 = vld [vmem:[%s165 + $0x88] sm:$0xff]
      %v191 = vld [vmem:[%s165 + $0x90] sm:$0xff]
      %v192 = vld [vmem:[%s165 + $0x98] sm:$0xff]
      %v193 = vld [vmem:[%s165 + $0xa0] sm:$0xff]
      %v194 = vld [vmem:[%s165 + $0xa8] sm:$0xff]
      %v195 = vld [vmem:[%s165 + $0xb0] sm:$0xff]
      %v196 = vld [vmem:[%s165 + $0xb8] sm:$0xff]
      %v197 = vld [vmem:[%s165 + $0xc0] sm:$0xff]
      %v198 = vld [vmem:[%s165 + $0xc8] sm:$0xff]
      %v199 = vld [vmem:[%s165 + $0xd0] sm:$0xff]
      %v200 = vld [vmem:[%s165 + $0xd8] sm:$0xff]
      %v201 = vld [vmem:[%s165 + $0xe0] sm:$0xff]
      %v202 = vld [vmem:[%s165 + $0xe8] sm:$0xff]
      %v203 = vld [vmem:[%s165 + $0xf0] sm:$0xff]
      %v204 = vld [vmem:[%s165 + $0xf8] sm:$0xff]
      %v205 = vld [vmem:[%s165 + $0x100] sm:$0xff]
      %v206 = vld [vmem:[%s165 + $0x108] sm:$0xff]
      %v207 = vld [vmem:[%s165 + $0x110] sm:$0xff]
      %v208 = vld [vmem:[%s165 + $0x118] sm:$0xff]
      %v209 = vld [vmem:[%s165 + $0x120] sm:$0xff]
      %v210 = vld [vmem:[%s165 + $0x128] sm:$0xff]
      %v211 = vld [vmem:[%s165 + $0x130] sm:$0xff]
      %v212 = vld [vmem:[%s165 + $0x138] sm:$0xff]
      %v213 = vld [vmem:[%s165 + $0x140] sm:$0xff]
      %v214 = vld [vmem:[%s165 + $0x148] sm:$0xff]
      %v215 = vld [vmem:[%s165 + $0x150] sm:$0xff]
      %v216 = vld [vmem:[%s165 + $0x158] sm:$0xff]
      %v217 = vld [vmem:[%s165 + $0x160] sm:$0xff]
      %v218 = vld [vmem:[%s165 + $0x168] sm:$0xff]
      %v219 = vld [vmem:[%s165 + $0x170] sm:$0xff]
      %v220 = vld [vmem:[%s165 + $0x178] sm:$0xff]
      %v221 = vld [vmem:[%s165 + $0x180] sm:$0xff]
      %v222 = vld [vmem:[%s1] sm:$0x7]
      %224 = vset.pattern.permute.xlu0 0
      %225 = vperm.xlu0 %224, %v222
      %v226 = vpop.permute.xlu0 %225
      %229 = vst [vmem:[#allocation1] ss:$4 sm:$0xff] %v172
      %v230 = vld.sshfl [vmem:[#allocation1] sm:$0xff pattern:$0x73625140]
      %v231 = vld.sshfl [vmem:[#allocation1 + $0x8] sm:$0xff pattern:$0x73625140]
      %v232 = vld.sshfl [vmem:[#allocation1 + $0x10] sm:$0xff pattern:$0x73625140]
      %v233 = vld.sshfl [vmem:[#allocation1 + $0x18] sm:$0xff pattern:$0x73625140]
      %v286 = vunpack.c.l.b16 %v173
      %v287 = vunpack.c.h.b16 %v173
      %v288 = vunpack.c.l.b16 %v174
      %v289 = vunpack.c.h.b16 %v174
      %v290 = vunpack.c.l.b16 %v175
      %v291 = vunpack.c.h.b16 %v175
      %v292 = vunpack.c.l.b16 %v176
      %v293 = vunpack.c.h.b16 %v176
      %v294 = vunpack.c.l.b16 %v177
      %v295 = vunpack.c.h.b16 %v177
      %v296 = vunpack.c.l.b16 %v178
      %v297 = vunpack.c.h.b16 %v178
      %v298 = vunpack.c.l.b16 %v179
      %v299 = vunpack.c.h.b16 %v179
      %v300 = vunpack.c.l.b16 %v180
      %v301 = vunpack.c.h.b16 %v180
      %v302 = vunpack.c.l.b16 %v181
      %v303 = vunpack.c.h.b16 %v181
      %v304 = vunpack.c.l.b16 %v182
      %v305 = vunpack.c.h.b16 %v182
      %v306 = vunpack.c.l.b16 %v183
      %v307 = vunpack.c.h.b16 %v183
      %v308 = vunpack.c.l.b16 %v184
      %v309 = vunpack.c.h.b16 %v184
      %v310 = vunpack.c.l.b16 %v185
      %v311 = vunpack.c.h.b16 %v185
      %v312 = vunpack.c.l.b16 %v186
      %v313 = vunpack.c.h.b16 %v186
      %v314 = vunpack.c.l.b16 %v187
      %v315 = vunpack.c.h.b16 %v187
      %v316 = vunpack.c.l.b16 %v188
      %v317 = vunpack.c.h.b16 %v188
      %v318 = vunpack.c.l.b16 %v189
      %v319 = vunpack.c.h.b16 %v189
      %v320 = vunpack.c.l.b16 %v190
      %v321 = vunpack.c.h.b16 %v190
      %v322 = vunpack.c.l.b16 %v191
      %v323 = vunpack.c.h.b16 %v191
      %v324 = vunpack.c.l.b16 %v192
      %v325 = vunpack.c.h.b16 %v192
      %v326 = vunpack.c.l.b16 %v193
      %v327 = vunpack.c.h.b16 %v193
      %v328 = vunpack.c.l.b16 %v194
      %v329 = vunpack.c.h.b16 %v194
      %v330 = vunpack.c.l.b16 %v195
      %v331 = vunpack.c.h.b16 %v195
      %v332 = vunpack.c.l.b16 %v196
      %v333 = vunpack.c.h.b16 %v196
      %v334 = vunpack.c.l.b16 %v197
      %v335 = vunpack.c.h.b16 %v197
      %v336 = vunpack.c.l.b16 %v198
      %v337 = vunpack.c.h.b16 %v198
      %v338 = vunpack.c.l.b16 %v199
      %v339 = vunpack.c.h.b16 %v199
      %v340 = vunpack.c.l.b16 %v200
      %v341 = vunpack.c.h.b16 %v200
      %v342 = vunpack.c.l.b16 %v201
      %v343 = vunpack.c.h.b16 %v201
      %v344 = vunpack.c.l.b16 %v202
      %v345 = vunpack.c.h.b16 %v202
      %v346 = vunpack.c.l.b16 %v203
      %v347 = vunpack.c.h.b16 %v203
      %v348 = vunpack.c.l.b16 %v204
      %v349 = vunpack.c.h.b16 %v204
      %v350 = vunpack.c.l.b16 %v205
      %v351 = vunpack.c.h.b16 %v205
      %v352 = vunpack.c.l.b16 %v206
      %v353 = vunpack.c.h.b16 %v206
      %v354 = vunpack.c.l.b16 %v207
      %v355 = vunpack.c.h.b16 %v207
      %v356 = vunpack.c.l.b16 %v208
      %v357 = vunpack.c.h.b16 %v208
      %v358 = vunpack.c.l.b16 %v209
      %v359 = vunpack.c.h.b16 %v209
      %v360 = vunpack.c.l.b16 %v210
      %v361 = vunpack.c.h.b16 %v210
      %v362 = vunpack.c.l.b16 %v211
      %v363 = vunpack.c.h.b16 %v211
      %v364 = vunpack.c.l.b16 %v212
      %v365 = vunpack.c.h.b16 %v212
      %v366 = vunpack.c.l.b16 %v213
      %v367 = vunpack.c.h.b16 %v213
      %v368 = vunpack.c.l.b16 %v214
      %v369 = vunpack.c.h.b16 %v214
      %v370 = vunpack.c.l.b16 %v215
      %v371 = vunpack.c.h.b16 %v215
      %v372 = vunpack.c.l.b16 %v216
      %v373 = vunpack.c.h.b16 %v216
      %v374 = vunpack.c.l.b16 %v217
      %v375 = vunpack.c.h.b16 %v217
      %v376 = vunpack.c.l.b16 %v218
      %v377 = vunpack.c.h.b16 %v218
      %v378 = vunpack.c.l.b16 %v219
      %v379 = vunpack.c.h.b16 %v219
      %v380 = vunpack.c.l.b16 %v220
      %v381 = vunpack.c.h.b16 %v220
      %v382 = vunpack.c.l.b16 %v221
      %v383 = vunpack.c.h.b16 %v221
      %v384 = vpack.c.b16 %v288, %v286
      %v385 = vpack.c.b16 %v289, %v287
      %v386 = vpack.c.b16 %v292, %v290
      %v387 = vpack.c.b16 %v293, %v291
      %v388 = vpack.c.b16 %v296, %v294
      %v389 = vpack.c.b16 %v297, %v295
      %v390 = vpack.c.b16 %v300, %v298
      %v391 = vpack.c.b16 %v301, %v299
      %v392 = vpack.c.b16 %v304, %v302
      %v393 = vpack.c.b16 %v305, %v303
      %v394 = vpack.c.b16 %v308, %v306
      %v395 = vpack.c.b16 %v309, %v307
      %v396 = vpack.c.b16 %v312, %v310
      %v397 = vpack.c.b16 %v313, %v311
      %v398 = vpack.c.b16 %v316, %v314
      %v399 = vpack.c.b16 %v317, %v315
      %v400 = vpack.c.b16 %v320, %v318
      %v401 = vpack.c.b16 %v321, %v319
      %v402 = vpack.c.b16 %v324, %v322
      %v403 = vpack.c.b16 %v325, %v323
      %v404 = vpack.c.b16 %v328, %v326
      %v405 = vpack.c.b16 %v329, %v327
      %v406 = vpack.c.b16 %v332, %v330
      %v407 = vpack.c.b16 %v333, %v331
      %v408 = vpack.c.b16 %v336, %v334
      %v409 = vpack.c.b16 %v337, %v335
      %v410 = vpack.c.b16 %v340, %v338
      %v411 = vpack.c.b16 %v341, %v339
      %v412 = vpack.c.b16 %v344, %v342
      %v413 = vpack.c.b16 %v345, %v343
      %v414 = vpack.c.b16 %v348, %v346
      %v415 = vpack.c.b16 %v349, %v347
      %v416 = vpack.c.b16 %v352, %v350
      %v417 = vpack.c.b16 %v353, %v351
      %v418 = vpack.c.b16 %v356, %v354
      %v419 = vpack.c.b16 %v357, %v355
      %v420 = vpack.c.b16 %v360, %v358
      %v421 = vpack.c.b16 %v361, %v359
      %v422 = vpack.c.b16 %v364, %v362
      %v423 = vpack.c.b16 %v365, %v363
      %v424 = vpack.c.b16 %v368, %v366
      %v425 = vpack.c.b16 %v369, %v367
      %v426 = vpack.c.b16 %v372, %v370
      %v427 = vpack.c.b16 %v373, %v371
      %v428 = vpack.c.b16 %v376, %v374
      %v429 = vpack.c.b16 %v377, %v375
      %v430 = vpack.c.b16 %v380, %v378
      %v431 = vpack.c.b16 %v381, %v379
      %v432 = vpack.c.b16 %v382, %v382
      %v433 = vpack.c.b16 %v383, %v383
      %vm482 = vcmask 64512
      %v483 = vsel %vm482, %v233, 0
      %vm485 = vcmask 1043456
      %v487 = vsel %vm485, %v432, 0
      %v490 = vsel %vm485, %v433, 0
      %492 = vmatpush.bf16.msra.mxu0 %v398
      %493 = vmatpush.bf16.msra.mxu0 %v396
      %494 = vmatpush.bf16.msra.mxu0 %v394
      %495 = vmatpush.bf16.msra.mxu0 %v392
      %496 = vmatpush.bf16.msra.mxu0 %v390
      %497 = vmatpush.bf16.msra.mxu0 %v388
      %498 = vmatpush.bf16.msra.mxu0 %v386
      %499 = vmatpush.bf16.msra.mxu0 %v384
      %500 = vmatmul.bf16.gmra.mxu0 %v230
      %v501 = vpop.f32.mrf.mxu0
      %v502 = vadd.f32 %v226, %v501
      %v503 = vpop.f32.mrf.mxu0
      %504 = vdwg.mxu0
      %505 = vmatpush.bf16.msra.mxu0 %v414
      %506 = vmatpush.bf16.msra.mxu0 %v412
      %507 = vmatpush.bf16.msra.mxu0 %v410
      %508 = vmatpush.bf16.msra.mxu0 %v408
      %509 = vmatpush.bf16.msra.mxu0 %v406
      %510 = vmatpush.bf16.msra.mxu0 %v404
      %511 = vmatpush.bf16.msra.mxu0 %v402
      %512 = vmatpush.bf16.msra.mxu0 %v400
      %513 = vmatmul.bf16.gmra.mxu0 %v231
      %v514 = vpop.f32.mrf.mxu0
      %v515 = vadd.f32 %v502, %v514
      %v516 = vpop.f32.mrf.mxu0
      %517 = vdwg.mxu0
      %518 = vmatpush.bf16.msra.mxu0 %v430
      %519 = vmatpush.bf16.msra.mxu0 %v428
      %520 = vmatpush.bf16.msra.mxu0 %v426
      %521 = vmatpush.bf16.msra.mxu0 %v424
      %522 = vmatpush.bf16.msra.mxu0 %v422
      %523 = vmatpush.bf16.msra.mxu0 %v420
      %524 = vmatpush.bf16.msra.mxu0 %v418
      %525 = vmatpush.bf16.msra.mxu0 %v416
      %526 = vmatmul.bf16.gmra.mxu0 %v232
      %v527 = vpop.f32.mrf.mxu0
      %v528 = vadd.f32 %v515, %v527
      %v529 = vpop.f32.mrf.mxu0
      %530 = vdwg.mxu0
      %531 = vmatpush.bf16.msra.mxu0 0
      %532 = vmatpush.bf16.msra.mxu0 0
      %533 = vmatpush.bf16.msra.mxu0 0
      %534 = vmatpush.bf16.msra.mxu0 0
      %535 = vmatpush.bf16.msra.mxu0 0
      %536 = vmatpush.bf16.msra.mxu0 0
      %537 = vmatpush.bf16.msra.mxu0 0
      %538 = vmatpush.bf16.msra.mxu0 %v487
      %539 = vmatmul.bf16.gmra.mxu0 %v483
      %v540 = vpop.f32.mrf.mxu0
      %v541 = vadd.f32 %v528, %v540
      %v542 = vpop.f32.mrf.mxu0
      %543 = vdwg.mxu0
      %544 = vmatpush.bf16.msra.mxu0 %v399
      %545 = vmatpush.bf16.msra.mxu0 %v397
      %546 = vmatpush.bf16.msra.mxu0 %v395
      %547 = vmatpush.bf16.msra.mxu0 %v393
      %548 = vmatpush.bf16.msra.mxu0 %v391
      %549 = vmatpush.bf16.msra.mxu0 %v389
      %550 = vmatpush.bf16.msra.mxu0 %v387
      %551 = vmatpush.bf16.msra.mxu0 %v385
      %552 = vmatmul.bf16.gmra.mxu0 %v230
      %v553 = vpop.f32.mrf.mxu0
      %v554 = vadd.f32 %v226, %v553
      %v555 = vpop.f32.mrf.mxu0
      %556 = vdwg.mxu0
      %557 = vmatpush.bf16.msra.mxu0 %v415
      %558 = vmatpush.bf16.msra.mxu0 %v413
      %559 = vmatpush.bf16.msra.mxu0 %v411
      %560 = vmatpush.bf16.msra.mxu0 %v409
      %561 = vmatpush.bf16.msra.mxu0 %v407
      %562 = vmatpush.bf16.msra.mxu0 %v405
      %563 = vmatpush.bf16.msra.mxu0 %v403
      %564 = vmatpush.bf16.msra.mxu0 %v401
      %565 = vmatmul.bf16.gmra.mxu0 %v231
      %v566 = vpop.f32.mrf.mxu0
      %v567 = vadd.f32 %v554, %v566
      %v568 = vpop.f32.mrf.mxu0
      %569 = vdwg.mxu0
      %570 = vmatpush.bf16.msra.mxu0 %v431
      %571 = vmatpush.bf16.msra.mxu0 %v429
      %572 = vmatpush.bf16.msra.mxu0 %v427
      %573 = vmatpush.bf16.msra.mxu0 %v425
      %574 = vmatpush.bf16.msra.mxu0 %v423
      %575 = vmatpush.bf16.msra.mxu0 %v421
      %576 = vmatpush.bf16.msra.mxu0 %v419
      %577 = vmatpush.bf16.msra.mxu0 %v417
      %578 = vmatmul.bf16.gmra.mxu0 %v232
      %v579 = vpop.f32.mrf.mxu0
      %v580 = vadd.f32 %v567, %v579
      %v581 = vpop.f32.mrf.mxu0
      %582 = vdwg.mxu0
      %583 = vmatpush.bf16.msra.mxu0 0
      %584 = vmatpush.bf16.msra.mxu0 0
      %585 = vmatpush.bf16.msra.mxu0 0
      %586 = vmatpush.bf16.msra.mxu0 0
      %587 = vmatpush.bf16.msra.mxu0 0
      %588 = vmatpush.bf16.msra.mxu0 0
      %589 = vmatpush.bf16.msra.mxu0 0
      %590 = vmatpush.bf16.msra.mxu0 %v490
      %591 = vmatmul.bf16.gmra.mxu0 %v483
      %v592 = vpop.f32.mrf.mxu0
      %v593 = vadd.f32 %v580, %v592
      %v594 = vpop.f32.mrf.mxu0
      %595 = vdwg.mxu0
      %v596 = vtanh.pop %v541
      %v597 = vtanh.pop %v593
      %v600 = vrot.slane %v597, 4
      %v601 = vsel %vm485, %v596, %v600
      %603 = vst [vmem:[%s170] sm:$0x77] %v601
      %p604 = scmp.lt.s32.totalorder %s14, 1
      %s605 = scalar_select %p604, %s14, 1
      %s606 = smul.addr %s605, 2
      %s607 = smul.addr %s606, 4
      %s608 = scalar_lea.vmem %s3, %s607
      // Predicated region
      $region33: #{cyclegan_generator.23} parent=31 // pred_check
        %p609 = pneg %p100
      $region34: #{cyclegan_generator.23} parent=31 // pred_check_branch
        %611 = sbr.rel (%p609) target = $region36
      $region35: #{cyclegan_generator.23} parent=31 // pred_region
        _
      $region36: #{cyclegan_generator.23} parent=31 // pred_fallthru
        _
    $region32: #{cyclegan_generator.23} parent=5 // pred_fallthru
      _
    %p612 = scmp.le.s32.totalorder 2, %s9
    // Predicated region
    $region37: #{cyclegan_generator.23} parent=5 // pred_check
      %p613 = pneg %p612
    $region38: #{cyclegan_generator.23} parent=5 // pred_check_branch
      %615 = sbr.rel (%p613) target = $region40
    $region39: #{cyclegan_generator.23} parent=5 // pred_region
      %s616 = ssub.s32 %s9, 2
      // Predicated region
      $region41: #{cyclegan_generator.23} parent=39 // pred_check
        %p617 = pneg %p106
      $region42: #{cyclegan_generator.23} parent=39 // pred_check_branch
        %619 = sbr.rel (%p617) target = $region44
      $region43: #{cyclegan_generator.23} parent=39 // pred_region
        %p620 = scmp.lt.s32.totalorder %s15, 1
        %s621 = scalar_select %p620, %s15, 1
        %s622 = smul.addr %s621, 2
        %s623 = smul.addr %s622, 4
        %s624 = scalar_lea.vmem %s3, %s623
      $region44: #{cyclegan_generator.23} parent=39 // pred_fallthru
        _
    $region40: #{cyclegan_generator.23} parent=5 // pred_fallthru
      _
  $region6: #{cyclegan_generator.23} parent=0 // loop_footer
    %s13 = sadd.s32 1, %s9
  $region7: #{cyclegan_generator.23} parent=0 // loop_footer_branch
    %8 = sbr.rel target = $region3
  $region8: #{cyclegan_generator.23} parent=0 // loop_exit
    _

</llo_original>
